<compile_context>
chip_gen: v7x
topology: tpu7x:2x2x1
jax: 0.10.0
libtpu: 0.0.40
codegen_flags: <defaults>
</compile_context>

<pallas_src>
import functools

import jax
import jax.numpy as jnp
import numpy as np
from jax import lax
from jax.experimental import pallas as pl
from jax.experimental.pallas import tpu as pltpu

EPS = 1e-5                      # nn.InstanceNorm3d default eps
LANE = 128                      # channel padding target (TPU lane width)
SUBLANE = 8                     # output-width padding target (sublane width)
PAD_VAL = -1e30                 # halo pad; (PAD_VAL - mean) * rstd -> ReLU == 0 exactly
VMEM_LIMIT = 32 * 1024 * 1024   # explicit scoped-VMEM budget, safe on v5e/v6e/v7x


def _round_up(v, m):
    return (v + m - 1) // m * m


# --------------------- InstanceNorm statistics (Pallas) ---------------------

def _stats_kernel(x_ref, mean_ref, rstd_ref, sum_ref, ssq_ref, *, total_s):
    si = pl.program_id(1)

    @pl.when(si == 0)
    def _init():
        sum_ref[...] = jnp.zeros_like(sum_ref)
        ssq_ref[...] = jnp.zeros_like(ssq_ref)

    x = x_ref[...]                                   # (S_TILE, C_p)
    s_tile = x.shape[0]
    if total_s % s_tile != 0:                        # mask the ragged final tile
        row = lax.broadcasted_iota(jnp.int32, x.shape, 0) + si * s_tile
        x = jnp.where(row < total_s, x, 0.0)
    sum_ref[...] += jnp.sum(x, axis=0, keepdims=True)
    ssq_ref[...] += jnp.sum(x * x, axis=0, keepdims=True)

    @pl.when(si == pl.num_programs(1) - 1)
    def _finalize():
        inv_s = 1.0 / total_s
        mean = sum_ref[...] * inv_s
        var = ssq_ref[...] * inv_s - mean * mean     # biased variance (ddof=0)
        mean_ref[...] = mean
        rstd_ref[...] = lax.rsqrt(var + EPS)


def instance_stats(x_flat):
    """x_flat: (N, S, C_p) -> (mean, rstd), each (N, 1, C_p) float32."""
    n, s, c_p = x_flat.shape
    s_tile = s if s <= 2048 else 2048
    kernel = functools.partial(_stats_kernel, total_s=s)
    return pl.pallas_call(
        kernel,
        out_shape=(jax.ShapeDtypeStruct((n, 1, c_p), jnp.float32),
                   jax.ShapeDtypeStruct((n, 1, c_p), jnp.float32)),
        grid=(n, pl.cdiv(s, s_tile)),
        in_specs=[pl.BlockSpec((None, s_tile, c_p), lambda i, j: (i, j, 0))],
        out_specs=(pl.BlockSpec((None, 1, c_p), lambda i, j: (i, 0, 0)),
                   pl.BlockSpec((None, 1, c_p), lambda i, j: (i, 0, 0))),
        scratch_shapes=[pltpu.VMEM((1, c_p), jnp.float32),
                        pltpu.VMEM((1, c_p), jnp.float32)],
        compiler_params=pltpu.CompilerParams(
            dimension_semantics=("parallel", "arbitrary"),
            vmem_limit_bytes=VMEM_LIMIT),
    )(x_flat)


# ------------- fused InstanceNorm + ReLU + 3x3x3 conv (Pallas) --------------

def _make_conv_kernel(*, sd, sh, sw, ho, wo_p, hq, wq, dp, with_residual):
    n_hw = ho * wo_p

    def kernel(mean_ref, rstd_ref, x_ref, w_ref, b_ref, *rest):
        if with_residual:
            xs_ref, wres_ref, out_ref, acc_ref = rest
        else:
            out_ref, acc_ref = rest

        kd = pl.program_id(2)

        @pl.when(kd == 0)
        def _init():
            acc_ref[...] = jnp.zeros_like(acc_ref)

        # padded-depth plane streamed for this step; planes 0 and dp-1 are pure halo
        d_idx = pl.program_id(1) * sd + kd
        interior = jnp.logical_and(d_idx > 0, d_idx < dp - 1)

        @pl.when(interior)
        def _accumulate():
            mean = mean_ref[...]                              # (1, C_in_p)
            rstd = rstd_ref[...]
            c_in = x_ref.shape[-1]
            c_out = w_ref.shape[-1]
            acc = jnp.zeros((n_hw, c_out), jnp.float32)
            for kh in range(3):                               # stream the 9 in-plane taps
                h0 = (kh % sh) * hq + kh // sh
                for kw in range(3):
                    w0 = (kw % sw) * wq + kw // sw
                    slab = x_ref[h0:h0 + ho, w0:w0 + wo_p, :]       # (ho, wo_p, C_in_p)
                    slab = jnp.maximum((slab - mean) * rstd, 0.0)   # fused IN + ReLU
                    acc = acc + jnp.dot(slab.reshape(n_hw, c_in),
                                        w_ref[kd * 9 + kh * 3 + kw],
                                        preferred_element_type=jnp.float32)
            acc_ref[...] += acc

        @pl.when(kd == 2)
        def _finalize():
            out = acc_ref[...] + b_ref[...]
            if with_residual:                                 # fused 1x1 strided residual
                xs = xs_ref[...]
                out = out + jnp.dot(xs.reshape(n_hw, xs.shape[-1]), wres_ref[...],
                                    preferred_element_type=jnp.float32)
            out_ref[...] = out

    return kernel


def fused_norm_relu_conv(x_cl, mean, rstd, w_taps, bias, *, stride, residual=None):
    """Fused InstanceNorm + ReLU + Conv3d(k=3, pad=1, stride).

    x_cl:      (N, D, H, W, C_in_p) channels-last, channel-padded input (no spatial pad)
    mean/rstd: (N, 1, C_in_p)       per-(n, c) InstanceNorm statistics of x_cl
    w_taps:    (27, C_in_p, C_out_p) conv weight, tap-major (kd*9 + kh*3 + kw)
    bias:      (1, C_out_p)
    residual:  optional (xs, w_res): xs (N, Do, Ho, Wo, C_res_p) = x[::stride] and
               w_res (C_res_p, C_out_p); fused into the epilogue.
    Returns (N, Do, Ho, Wo, C_out_p).
    """
    sd, sh, sw = stride
    n, d, h, w, c_in_p = x_cl.shape
    c_out_p = w_taps.shape[-1]

    do = (d - 1) // sd + 1
    ho = (h - 1) // sh + 1
    wo = (w - 1) // sw + 1
    wo_p = _round_up(wo, SUBLANE)               # sublane-aligned output width
    n_hw = ho * wo_p

    # one-time stride-phase reshuffle of the halo-padded input (plain JAX, no inflation)
    dp = d + 2
    hq = -(-(h + 2) // sh)
    wq = max(2 // sw + wo_p, -(-(w + 2) // sw))
    xp = jnp.pad(x_cl,
                 ((0, 0), (1, 1), (1, sh * hq - h - 1), (1, sw * wq - w - 1), (0, 0)),
                 constant_values=PAD_VAL)
    xp = xp.reshape(n, dp, hq, sh, wq, sw, c_in_p)
    xp = xp.transpose(0, 1, 3, 2, 5, 4, 6)                      # phase-major layout
    xp = xp.reshape(n * dp, sh * hq, sw * wq, c_in_p)

    kernel = _make_conv_kernel(sd=sd, sh=sh, sw=sw, ho=ho, wo_p=wo_p,
                               hq=hq, wq=wq, dp=dp,
                               with_residual=residual is not None)

    in_specs = [
        pl.BlockSpec((None, 1, c_in_p), lambda i, j, k: (i, 0, 0)),        # mean
        pl.BlockSpec((None, 1, c_in_p), lambda i, j, k: (i, 0, 0)),        # rstd
        pl.BlockSpec((None, sh * hq, sw * wq, c_in_p),                     # one input plane
                     lambda i, j, k: (i * dp + j * sd + k, 0, 0, 0)),
        pl.BlockSpec((27, c_in_p, c_out_p), lambda i, j, k: (0, 0, 0)),    # weights (resident)
        pl.BlockSpec((1, c_out_p), lambda i, j, k: (0, 0)),                # bias (resident)
    ]
    args = [mean, rstd, xp, w_taps, bias]

    if residual is not None:
        xs, w_res = residual
        c_res = xs.shape[-1]
        xs = jnp.pad(xs, ((0, 0), (0, 0), (0, 0), (0, wo_p - wo), (0, 0)))
        xs = xs.reshape(n * do, ho, wo_p, c_res)
        in_specs += [
            pl.BlockSpec((None, ho, wo_p, c_res),
                         lambda i, j, k: (i * do + j, 0, 0, 0)),
            pl.BlockSpec((c_res, c_out_p), lambda i, j, k: (0, 0)),
        ]
        args += [xs, w_res]

    out = pl.pallas_call(
        kernel,
        out_shape=jax.ShapeDtypeStruct((n * do, n_hw, c_out_p), jnp.float32),
        grid=(n, do, 3),
        in_specs=in_specs,
        out_specs=pl.BlockSpec((None, n_hw, c_out_p),
                               lambda i, j, k: (i * do + j, 0, 0)),
        scratch_shapes=[pltpu.VMEM((n_hw, c_out_p), jnp.float32)],
        compiler_params=pltpu.CompilerParams(
            dimension_semantics=("parallel", "parallel", "arbitrary"),
            vmem_limit_bytes=VMEM_LIMIT),
    )(*args)

    out = out.reshape(n, do, ho, wo_p, c_out_p)
    return out[:, :, :, :wo, :]                 # drop the width padding


# ------------------------------ DownBlock forward ---------------------------

@functools.partial(jax.jit, static_argnames=("stride",))
def down_block_forward(x_ncdhw, params, stride):
    """DownBlock forward. x_ncdhw: (N, C_in, D, H, W) -> (N, C_out, Do, Ho, Wo)."""
    if isinstance(stride, int):
        stride = (stride, stride, stride)
    sd, sh, sw = stride
    n, c_in, d, h, w = x_ncdhw.shape
    c_out = params["b1"].shape[0]
    c_in_p = _round_up(c_in, LANE)
    c_out_p = _round_up(c_out, LANE)

    # channels-last, channel-padded (zeros) input
    x_cl = jnp.transpose(x_ncdhw, (0, 2, 3, 4, 1)).astype(jnp.float32)
    x_cl = jnp.pad(x_cl, ((0, 0), (0, 0), (0, 0), (0, 0), (0, c_in_p - c_in)))

    # ---- repack weights / biases for the kernels (tiny, plain JAX) ----
    w1 = jnp.transpose(params["w1"], (2, 3, 4, 1, 0))
    w1 = jnp.pad(w1, ((0, 0), (0, 0), (0, 0),
                      (0, c_in_p - c_in), (0, c_out_p - c_out))).reshape(27, c_in_p, c_out_p)
    b1 = jnp.pad(params["b1"], (0, c_out_p - c_out)).reshape(1, c_out_p)

    w2 = jnp.transpose(params["w2"], (2, 3, 4, 1, 0))
    w2 = jnp.pad(w2, ((0, 0), (0, 0), (0, 0),
                      (0, c_out_p - c_out), (0, c_out_p - c_out))).reshape(27, c_out_p, c_out_p)
    # conv2 bias and residual-conv bias are both applied in the conv2 epilogue
    b2 = jnp.pad(params["b2"] + params["b_res"], (0, c_out_p - c_out)).reshape(1, c_out_p)
    w_res = jnp.pad(params["w_res"].reshape(c_out, c_in).T,
                    ((0, c_in_p - c_in), (0, c_out_p - c_out)))

    # ---- norm1 stats + fused IN1/ReLU/conv1 (strided) ----
    mean1, rstd1 = instance_stats(x_cl.reshape(n, d * h * w, c_in_p))
    h1 = fused_norm_relu_conv(x_cl, mean1, rstd1, w1, b1, stride=stride)
    do, ho, wo = h1.shape[1:4]

    # ---- norm2 stats + fused IN2/ReLU/conv2 + fused 1x1 strided residual ----
    mean2, rstd2 = instance_stats(h1.reshape(n, do * ho * wo, c_out_p))
    xs = x_cl[:, ::sd, ::sh, ::sw, :]                          # (N, Do, Ho, Wo, C_in_p)
    out = fused_norm_relu_conv(h1, mean2, rstd2, w2, b2, stride=(1, 1, 1),
                               residual=(xs, w_res))

    out = out[..., :c_out]                                     # drop channel padding
    return jnp.transpose(out, (0, 4, 1, 2, 3))                 # back to NCDHW


# ------------------------------- parameter init -----------------------------

def init_params(key, in_channels, out_channels):
    def conv_init(k, cout, cin, ksz):
        fan_in = cin * ksz ** 3
        bound = 1.0 / np.sqrt(fan_in)
        kw, kb = jax.random.split(k)
        w = jax.random.uniform(kw, (cout, cin, ksz, ksz, ksz), jnp.float32, -bound, bound)
        b = jax.random.uniform(kb, (cout,), jnp.float32, -bound, bound)
        return w, b

    k1, k2, k3 = jax.random.split(key, 3)
    w1, b1 = conv_init(k1, out_channels, in_channels, 3)
    w2, b2 = conv_init(k2, out_channels, out_channels, 3)
    wr, br = conv_init(k3, out_channels, in_channels, 1)
    return {"w1": w1, "b1": b1, "w2": w2, "b2": b2, "w_res": wr, "b_res": br}


# ------------------------ pure-JAX reference (check) ------------------------

def reference_forward(x, params, stride):
    def inorm_relu(t):
        mean = jnp.mean(t, axis=(2, 3, 4), keepdims=True)
        var = jnp.var(t, axis=(2, 3, 4), keepdims=True)
        return jnp.maximum((t - mean) / jnp.sqrt(var + EPS), 0.0)

    def conv(t, w, b, s, pad):
        y = lax.conv_general_dilated(
            t, w, window_strides=s, padding=[(pad, pad)] * 3,
            dimension_numbers=("NCDHW", "OIDHW", "NCDHW"))
        return y + b[None, :, None, None, None]

    residual = conv(x, params["w_res"], params["b_res"], stride, 0)
    h = inorm_relu(x)
    h = conv(h, params["w1"], params["b1"], stride, 1)
    h = inorm_relu(h)
    h = conv(h, params["w2"], params["b2"], (1, 1, 1), 1)
    return h + residual


# ------------------------------------ main -----------------------------------

if __name__ == "__main__":
    key = jax.random.PRNGKey(0)
    k_x, k_p = jax.random.split(key)

    N, Cin, Cout = 2, 4, 8
    D = H = W = 8
    stride = (2, 2, 2)

    x = jax.random.normal(k_x, (N, Cin, D, H, W), jnp.float32)
    params = init_params(k_p, Cin, Cout)

    out = jax.block_until_ready(down_block_forward(x, params, stride))
    ref = jax.block_until_ready(reference_forward(x, params, stride))
    np.testing.assert_allclose(np.asarray(out), np.asarray(ref), rtol=1e-4, atol=1e-4)

    print("KERNEL_OK")
</pallas_src>

<mosaic_0001>
module attributes {stable_mosaic.version = 11 : i64} {
  func.func @_stats_kernel(%arg0: i32, %arg1: i32, %arg2: memref<1x512x128xf32, #tpu.memory_space<vmem>>, %arg3: memref<1x1x128xf32, #tpu.memory_space<vmem>>, %arg4: memref<1x1x128xf32, #tpu.memory_space<vmem>>, %arg5: memref<1x128xf32, #tpu.memory_space<vmem>>, %arg6: memref<1x128xf32, #tpu.memory_space<vmem>>) attributes {dimension_semantics = [#tpu.dimension_semantics<parallel>, #tpu.dimension_semantics<arbitrary>], iteration_bounds = array<i64: 2, 1>, scalar_prefetch = 0 : i64, scratch_operands = 2 : i64, tpu.core_type = #tpu.core_type<tc>, window_params = [{transform_indices = @transform_0, window_bounds = array<i64: 1, 512, 128>}, {transform_indices = @transform_1, window_bounds = array<i64: 1, 1, 128>}, {transform_indices = @transform_2, window_bounds = array<i64: 1, 1, 128>}]} {
    %c0_i32 = arith.constant 0 : i32
    %0 = arith.cmpi eq, %arg1, %c0_i32 : i32
    %1 = arith.extui %0 : i1 to i32
    %c0_i32_0 = arith.constant 0 : i32
    %2 = arith.cmpi ne, %1, %c0_i32_0 : i32
    scf.if %2 {
      %cst_14 = arith.constant 0.000000e+00 : f32
      %19 = vector.broadcast %cst_14 : f32 to vector<1x128xf32>
      %c0_15 = arith.constant 0 : index
      %c0_16 = arith.constant 0 : index
      %20 = vector.load %arg5[%c0_15, %c0_16] : memref<1x128xf32, #tpu.memory_space<vmem>>, vector<1x128xf32>
      tpu.vector_store %arg5[%c0_15, %c0_16], %19 {strides = array<i32>} : memref<1x128xf32, #tpu.memory_space<vmem>>, vector<1x128xf32>,
      %cst_17 = arith.constant 0.000000e+00 : f32
      %21 = vector.broadcast %cst_17 : f32 to vector<1x128xf32>
      %c0_18 = arith.constant 0 : index
      %c0_19 = arith.constant 0 : index
      %22 = vector.load %arg6[%c0_18, %c0_19] : memref<1x128xf32, #tpu.memory_space<vmem>>, vector<1x128xf32>
      tpu.vector_store %arg6[%c0_18, %c0_19], %21 {strides = array<i32>} : memref<1x128xf32, #tpu.memory_space<vmem>>, vector<1x128xf32>,
    } else {
    }
    %c0 = arith.constant 0 : index
    %c0_1 = arith.constant 0 : index
    %c0_2 = arith.constant 0 : index
    %3 = vector.load %arg2[%c0, %c0_1, %c0_2] : memref<1x512x128xf32, #tpu.memory_space<vmem>>, vector<1x512x128xf32>
    %4 = vector.shape_cast %3 : vector<1x512x128xf32> to vector<512x128xf32>
    %c0_3 = arith.constant 0 : index
    %c0_4 = arith.constant 0 : index
    %5 = vector.load %arg5[%c0_3, %c0_4] : memref<1x128xf32, #tpu.memory_space<vmem>>, vector<1x128xf32>
    %cst = arith.constant dense<0.000000e+00> : vector<128xf32>
    %6 = vector.multi_reduction <add>, %4, %cst [0] : vector<512x128xf32> to vector<128xf32>
    %7 = vector.shape_cast %6 : vector<128xf32> to vector<1x128xf32>
    %8 = arith.addf %5, %7 : vector<1x128xf32>
    %c0_5 = arith.constant 0 : index
    %c0_6 = arith.constant 0 : index
    %9 = vector.load %arg5[%c0_5, %c0_6] : memref<1x128xf32, #tpu.memory_space<vmem>>, vector<1x128xf32>
    tpu.vector_store %arg5[%c0_5, %c0_6], %8 {strides = array<i32>} : memref<1x128xf32, #tpu.memory_space<vmem>>, vector<1x128xf32>,
    %c0_7 = arith.constant 0 : index
    %c0_8 = arith.constant 0 : index
    %10 = vector.load %arg6[%c0_7, %c0_8] : memref<1x128xf32, #tpu.memory_space<vmem>>, vector<1x128xf32>
    %11 = arith.mulf %4, %4 : vector<512x128xf32>
    %cst_9 = arith.constant dense<0.000000e+00> : vector<128xf32>
    %12 = vector.multi_reduction <add>, %11, %cst_9 [0] : vector<512x128xf32> to vector<128xf32>
    %13 = vector.shape_cast %12 : vector<128xf32> to vector<1x128xf32>
    %14 = arith.addf %10, %13 : vector<1x128xf32>
    %c0_10 = arith.constant 0 : index
    %c0_11 = arith.constant 0 : index
    %15 = vector.load %arg6[%c0_10, %c0_11] : memref<1x128xf32, #tpu.memory_space<vmem>>, vector<1x128xf32>
    tpu.vector_store %arg6[%c0_10, %c0_11], %14 {strides = array<i32>} : memref<1x128xf32, #tpu.memory_space<vmem>>, vector<1x128xf32>,
    %c0_i32_12 = arith.constant 0 : i32
    %16 = arith.cmpi eq, %arg1, %c0_i32_12 : i32
    %17 = arith.extui %16 : i1 to i32
    %c0_i32_13 = arith.constant 0 : i32
    %18 = arith.cmpi ne, %17, %c0_i32_13 : i32
    scf.if %18 {
      %c0_14 = arith.constant 0 : index
      %c0_15 = arith.constant 0 : index
      %19 = vector.load %arg5[%c0_14, %c0_15] : memref<1x128xf32, #tpu.memory_space<vmem>>, vector<1x128xf32>
      %cst_16 = arith.constant 0.001953125 : f32
      %20 = vector.broadcast %cst_16 : f32 to vector<1x128xf32>
      %21 = arith.mulf %19, %20 : vector<1x128xf32>
      %c0_17 = arith.constant 0 : index
      %c0_18 = arith.constant 0 : index
      %22 = vector.load %arg6[%c0_17, %c0_18] : memref<1x128xf32, #tpu.memory_space<vmem>>, vector<1x128xf32>
      %cst_19 = arith.constant 0.001953125 : f32
      %23 = vector.broadcast %cst_19 : f32 to vector<1x128xf32>
      %24 = arith.mulf %22, %23 : vector<1x128xf32>
      %25 = arith.mulf %21, %21 : vector<1x128xf32>
      %26 = arith.subf %24, %25 : vector<1x128xf32>
      %c0_20 = arith.constant 0 : index
      %c0_21 = arith.constant 0 : index
      %c0_22 = arith.constant 0 : index
      %27 = vector.load %arg3[%c0_20, %c0_21, %c0_22] : memref<1x1x128xf32, #tpu.memory_space<vmem>>, vector<1x1x128xf32>
      %28 = vector.shape_cast %27 : vector<1x1x128xf32> to vector<1x128xf32>
      %29 = vector.shape_cast %21 : vector<1x128xf32> to vector<1x1x128xf32>
      tpu.vector_store %arg3[%c0_20, %c0_21, %c0_22], %29 {strides = array<i32>} : memref<1x1x128xf32, #tpu.memory_space<vmem>>, vector<1x1x128xf32>,
      %cst_23 = arith.constant 9.99999974E-6 : f32
      %30 = vector.broadcast %cst_23 : f32 to vector<1x128xf32>
      %31 = arith.addf %26, %30 : vector<1x128xf32>
      %32 = math.rsqrt %31 : vector<1x128xf32>
      %c0_24 = arith.constant 0 : index
      %c0_25 = arith.constant 0 : index
      %c0_26 = arith.constant 0 : index
      %33 = vector.load %arg4[%c0_24, %c0_25, %c0_26] : memref<1x1x128xf32, #tpu.memory_space<vmem>>, vector<1x1x128xf32>
      %34 = vector.shape_cast %33 : vector<1x1x128xf32> to vector<1x128xf32>
      %35 = vector.shape_cast %32 : vector<1x128xf32> to vector<1x1x128xf32>
      tpu.vector_store %arg4[%c0_24, %c0_25, %c0_26], %35 {strides = array<i32>} : memref<1x1x128xf32, #tpu.memory_space<vmem>>, vector<1x1x128xf32>,
    } else {
    }
    return
  }
  func.func @transform_0(%arg0: i32, %arg1: i32) -> (i32, i32, i32) {
    %c0_i32 = arith.constant 0 : i32
    %c0_i32_0 = arith.constant 0 : i32
    return %arg0, %arg1, %c0_i32 : i32, i32, i32
  }
  func.func @transform_1(%arg0: i32, %arg1: i32) -> (i32, i32, i32) {
    %c0_i32 = arith.constant 0 : i32
    %c0_i32_0 = arith.constant 0 : i32
    %c0_i32_1 = arith.constant 0 : i32
    return %arg0, %c0_i32, %c0_i32_0 : i32, i32, i32
  }
  func.func @transform_2(%arg0: i32, %arg1: i32) -> (i32, i32, i32) {
    %c0_i32 = arith.constant 0 : i32
    %c0_i32_0 = arith.constant 0 : i32
    %c0_i32_1 = arith.constant 0 : i32
    return %arg0, %c0_i32, %c0_i32_0 : i32, i32, i32
  }
}

module attributes {stable_mosaic.version = 11 : i64} {
  func.func @kernel(%arg0: i32, %arg1: i32, %arg2: i32, %arg3: memref<1x1x128xf32, #tpu.memory_space<vmem>>, %arg4: memref<1x1x128xf32, #tpu.memory_space<vmem>>, %arg5: memref<1x10x18x128xf32, #tpu.memory_space<vmem>>, %arg6: memref<27x128x128xf32, #tpu.memory_space<vmem>>, %arg7: memref<1x128xf32, #tpu.memory_space<vmem>>, %arg8: memref<1x32x128xf32, #tpu.memory_space<vmem>>, %arg9: memref<32x128xf32, #tpu.memory_space<vmem>>) attributes {dimension_semantics = [#tpu.dimension_semantics<parallel>, #tpu.dimension_semantics<parallel>, #tpu.dimension_semantics<arbitrary>], iteration_bounds = array<i64: 2, 4, 3>, scalar_prefetch = 0 : i64, scratch_operands = 1 : i64, tpu.core_type = #tpu.core_type<tc>, window_params = [{transform_indices = @transform_0, window_bounds = array<i64: 1, 1, 128>}, {transform_indices = @transform_1, window_bounds = array<i64: 1, 1, 128>}, {transform_indices = @transform_2, window_bounds = array<i64: 1, 10, 18, 128>}, {pipeline_mode = #tpu.pipeline_mode<synchronous>, transform_indices = @transform_3, window_bounds = array<i64: 27, 128, 128>}, {pipeline_mode = #tpu.pipeline_mode<synchronous>, transform_indices = @transform_4, window_bounds = array<i64: 1, 128>}, {transform_indices = @transform_5, window_bounds = array<i64: 1, 32, 128>}]} {
    %c0_i32 = arith.constant 0 : i32
    %0 = arith.cmpi eq, %arg2, %c0_i32 : i32
    %1 = arith.extui %0 : i1 to i32
    %c0_i32_0 = arith.constant 0 : i32
    %2 = arith.cmpi ne, %1, %c0_i32_0 : i32
    scf.if %2 {
      %cst = arith.constant 0.000000e+00 : f32
      %13 = vector.broadcast %cst : f32 to vector<32x128xf32>
      %c0 = arith.constant 0 : index
      %c0_5 = arith.constant 0 : index
      %14 = vector.load %arg9[%c0, %c0_5] : memref<32x128xf32, #tpu.memory_space<vmem>>, vector<32x128xf32>
      tpu.vector_store %arg9[%c0, %c0_5], %13 {strides = array<i32>} : memref<32x128xf32, #tpu.memory_space<vmem>>, vector<32x128xf32>,
    } else {
    }
    %c2_i32 = arith.constant 2 : i32
    %3 = arith.muli %arg1, %c2_i32 : i32
    %4 = arith.addi %3, %arg2 : i32
    %c0_i32_1 = arith.constant 0 : i32
    %5 = arith.cmpi sgt, %4, %c0_i32_1 : i32
    %c9_i32 = arith.constant 9 : i32
    %6 = arith.cmpi slt, %4, %c9_i32 : i32
    %7 = arith.andi %5, %6 : i1
    %8 = arith.extui %7 : i1 to i32
    %c0_i32_2 = arith.constant 0 : i32
    %9 = arith.cmpi ne, %8, %c0_i32_2 : i32
    scf.if %9 {
      %c0 = arith.constant 0 : index
      %c0_5 = arith.constant 0 : index
      %c0_6 = arith.constant 0 : index
      %13 = vector.load %arg3[%c0, %c0_5, %c0_6] : memref<1x1x128xf32, #tpu.memory_space<vmem>>, vector<1x1x128xf32>
      %14 = vector.shape_cast %13 : vector<1x1x128xf32> to vector<1x128xf32>
      %c0_7 = arith.constant 0 : index
      %c0_8 = arith.constant 0 : index
      %c0_9 = arith.constant 0 : index
      %15 = vector.load %arg4[%c0_7, %c0_8, %c0_9] : memref<1x1x128xf32, #tpu.memory_space<vmem>>, vector<1x1x128xf32>
      %16 = vector.shape_cast %15 : vector<1x1x128xf32> to vector<1x128xf32>
      %cst = arith.constant 0.000000e+00 : f32
      %17 = vector.broadcast %cst : f32 to vector<32x128xf32>
      %c0_10 = arith.constant 0 : index
      %c0_11 = arith.constant 0 : index
      %c0_12 = arith.constant 0 : index
      %c0_13 = arith.constant 0 : index
      %18 = vector.load %arg5[%c0_10, %c0_11, %c0_12, %c0_13] : memref<1x10x18x128xf32, #tpu.memory_space<vmem>>, vector<1x4x8x128xf32>
      %19 = vector.shape_cast %18 : vector<1x4x8x128xf32> to vector<4x8x128xf32>
      %20 = vector.shape_cast %14 : vector<1x128xf32> to vector<1x1x128xf32>
      %21 = vector.broadcast %20 : vector<1x1x128xf32> to vector<4x8x128xf32>
      %22 = arith.subf %19, %21 : vector<4x8x128xf32>
      %23 = vector.shape_cast %16 : vector<1x128xf32> to vector<1x1x128xf32>
      %24 = vector.broadcast %23 : vector<1x1x128xf32> to vector<4x8x128xf32>
      %25 = arith.mulf %22, %24 : vector<4x8x128xf32>
      %cst_14 = arith.constant 0.000000e+00 : f32
      %26 = vector.broadcast %cst_14 : f32 to vector<4x8x128xf32>
      %27 = arith.maximumf %25, %26 : vector<4x8x128xf32>
      %28 = vector.shape_cast %27 : vector<4x8x128xf32> to vector<32x128xf32>
      %c9_i32_15 = arith.constant 9 : i32
      %29 = arith.muli %arg2, %c9_i32_15 : i32
      %c0_i32_16 = arith.constant 0 : i32
      %30 = arith.addi %29, %c0_i32_16 : i32
      %c0_i32_17 = arith.constant 0 : i32
      %31 = arith.addi %30, %c0_i32_17 : i32
      %32 = arith.index_cast %31 : i32 to index
      %c0_18 = arith.constant 0 : index
      %c0_19 = arith.constant 0 : index
      %33 = vector.load %arg6[%32, %c0_18, %c0_19] : memref<27x128x128xf32, #tpu.memory_space<vmem>>, vector<1x128x128xf32>
      %34 = vector.shape_cast %33 : vector<1x128x128xf32> to vector<128x128xf32>
      %cst_20 = arith.constant dense<0.000000e+00> : vector<32x128xf32>
      %35 = tpu.matmul %28, %34, %cst_20 {dimension_numbers = #tpu.dot_dimension_numbers<[1], [0], [0], [1], [0, 0, 1, 1], [], []>} : vector<32x128xf32>, vector<128x128xf32>, vector<32x128xf32> -> vector<32x128xf32>
      %36 = arith.addf %17, %35 : vector<32x128xf32>
      %c0_21 = arith.constant 0 : index
      %c0_22 = arith.constant 0 : index
      %c9 = arith.constant 9 : index
      %c0_23 = arith.constant 0 : index
      %37 = vector.load %arg5[%c0_21, %c0_22, %c9, %c0_23] : memref<1x10x18x128xf32, #tpu.memory_space<vmem>>, vector<1x4x8x128xf32>
      %38 = vector.shape_cast %37 : vector<1x4x8x128xf32> to vector<4x8x128xf32>
      %39 = vector.shape_cast %14 : vector<1x128xf32> to vector<1x1x128xf32>
      %40 = vector.broadcast %39 : vector<1x1x128xf32> to vector<4x8x128xf32>
      %41 = arith.subf %38, %40 : vector<4x8x128xf32>
      %42 = vector.shape_cast %16 : vector<1x128xf32> to vector<1x1x128xf32>
      %43 = vector.broadcast %42 : vector<1x1x128xf32> to vector<4x8x128xf32>
      %44 = arith.mulf %41, %43 : vector<4x8x128xf32>
      %cst_24 = arith.constant 0.000000e+00 : f32
      %45 = vector.broadcast %cst_24 : f32 to vector<4x8x128xf32>
      %46 = arith.maximumf %44, %45 : vector<4x8x128xf32>
      %47 = vector.shape_cast %46 : vector<4x8x128xf32> to vector<32x128xf32>
      %c9_i32_25 = arith.constant 9 : i32
      %48 = arith.muli %arg2, %c9_i32_25 : i32
      %c0_i32_26 = arith.constant 0 : i32
      %49 = arith.addi %48, %c0_i32_26 : i32
      %c1_i32 = arith.constant 1 : i32
      %50 = arith.addi %49, %c1_i32 : i32
      %51 = arith.index_cast %50 : i32 to index
      %c0_27 = arith.constant 0 : index
      %c0_28 = arith.constant 0 : index
      %52 = vector.load %arg6[%51, %c0_27, %c0_28] : memref<27x128x128xf32, #tpu.memory_space<vmem>>, vector<1x128x128xf32>
      %53 = vector.shape_cast %52 : vector<1x128x128xf32> to vector<128x128xf32>
      %cst_29 = arith.constant dense<0.000000e+00> : vector<32x128xf32>
      %54 = tpu.matmul %47, %53, %cst_29 {dimension_numbers = #tpu.dot_dimension_numbers<[1], [0], [0], [1], [0, 0, 1, 1], [], []>} : vector<32x128xf32>, vector<128x128xf32>, vector<32x128xf32> -> vector<32x128xf32>
      %55 = arith.addf %36, %54 : vector<32x128xf32>
      %c0_30 = arith.constant 0 : index
      %c0_31 = arith.constant 0 : index
      %c1 = arith.constant 1 : index
      %c0_32 = arith.constant 0 : index
      %56 = vector.load %arg5[%c0_30, %c0_31, %c1, %c0_32] : memref<1x10x18x128xf32, #tpu.memory_space<vmem>>, vector<1x4x8x128xf32>
      %57 = vector.shape_cast %56 : vector<1x4x8x128xf32> to vector<4x8x128xf32>
      %58 = vector.shape_cast %14 : vector<1x128xf32> to vector<1x1x128xf32>
      %59 = vector.broadcast %58 : vector<1x1x128xf32> to vector<4x8x128xf32>
      %60 = arith.subf %57, %59 : vector<4x8x128xf32>
      %61 = vector.shape_cast %16 : vector<1x128xf32> to vector<1x1x128xf32>
      %62 = vector.broadcast %61 : vector<1x1x128xf32> to vector<4x8x128xf32>
      %63 = arith.mulf %60, %62 : vector<4x8x128xf32>
      %cst_33 = arith.constant 0.000000e+00 : f32
      %64 = vector.broadcast %cst_33 : f32 to vector<4x8x128xf32>
      %65 = arith.maximumf %63, %64 : vector<4x8x128xf32>
      %66 = vector.shape_cast %65 : vector<4x8x128xf32> to vector<32x128xf32>
      %c9_i32_34 = arith.constant 9 : i32
      %67 = arith.muli %arg2, %c9_i32_34 : i32
      %c0_i32_35 = arith.constant 0 : i32
      %68 = arith.addi %67, %c0_i32_35 : i32
      %c2_i32_36 = arith.constant 2 : i32
      %69 = arith.addi %68, %c2_i32_36 : i32
      %70 = arith.index_cast %69 : i32 to index
      %c0_37 = arith.constant 0 : index
      %c0_38 = arith.constant 0 : index
      %71 = vector.load %arg6[%70, %c0_37, %c0_38] : memref<27x128x128xf32, #tpu.memory_space<vmem>>, vector<1x128x128xf32>
      %72 = vector.shape_cast %71 : vector<1x128x128xf32> to vector<128x128xf32>
      %cst_39 = arith.constant dense<0.000000e+00> : vector<32x128xf32>
      %73 = tpu.matmul %66, %72, %cst_39 {dimension_numbers = #tpu.dot_dimension_numbers<[1], [0], [0], [1], [0, 0, 1, 1], [], []>} : vector<32x128xf32>, vector<128x128xf32>, vector<32x128xf32> -> vector<32x128xf32>
      %74 = arith.addf %55, %73 : vector<32x128xf32>
      %c0_40 = arith.constant 0 : index
      %c5 = arith.constant 5 : index
      %c0_41 = arith.constant 0 : index
      %c0_42 = arith.constant 0 : index
      %75 = vector.load %arg5[%c0_40, %c5, %c0_41, %c0_42] : memref<1x10x18x128xf32, #tpu.memory_space<vmem>>, vector<1x4x8x128xf32>
      %76 = vector.shape_cast %75 : vector<1x4x8x128xf32> to vector<4x8x128xf32>
      %77 = vector.shape_cast %14 : vector<1x128xf32> to vector<1x1x128xf32>
      %78 = vector.broadcast %77 : vector<1x1x128xf32> to vector<4x8x128xf32>
      %79 = arith.subf %76, %78 : vector<4x8x128xf32>
      %80 = vector.shape_cast %16 : vector<1x128xf32> to vector<1x1x128xf32>
      %81 = vector.broadcast %80 : vector<1x1x128xf32> to vector<4x8x128xf32>
      %82 = arith.mulf %79, %81 : vector<4x8x128xf32>
      %cst_43 = arith.constant 0.000000e+00 : f32
      %83 = vector.broadcast %cst_43 : f32 to vector<4x8x128xf32>
      %84 = arith.maximumf %82, %83 : vector<4x8x128xf32>
      %85 = vector.shape_cast %84 : vector<4x8x128xf32> to vector<32x128xf32>
      %c9_i32_44 = arith.constant 9 : i32
      %86 = arith.muli %arg2, %c9_i32_44 : i32
      %c3_i32 = arith.constant 3 : i32
      %87 = arith.addi %86, %c3_i32 : i32
      %c0_i32_45 = arith.constant 0 : i32
      %88 = arith.addi %87, %c0_i32_45 : i32
      %89 = arith.index_cast %88 : i32 to index
      %c0_46 = arith.constant 0 : index
      %c0_47 = arith.constant 0 : index
      %90 = vector.load %arg6[%89, %c0_46, %c0_47] : memref<27x128x128xf32, #tpu.memory_space<vmem>>, vector<1x128x128xf32>
      %91 = vector.shape_cast %90 : vector<1x128x128xf32> to vector<128x128xf32>
      %cst_48 = arith.constant dense<0.000000e+00> : vector<32x128xf32>
      %92 = tpu.matmul %85, %91, %cst_48 {dimension_numbers = #tpu.dot_dimension_numbers<[1], [0], [0], [1], [0, 0, 1, 1], [], []>} : vector<32x128xf32>, vector<128x128xf32>, vector<32x128xf32> -> vector<32x128xf32>
      %93 = arith.addf %74, %92 : vector<32x128xf32>
      %c0_49 = arith.constant 0 : index
      %c5_50 = arith.constant 5 : index
      %c9_51 = arith.constant 9 : index
      %c0_52 = arith.constant 0 : index
      %94 = vector.load %arg5[%c0_49, %c5_50, %c9_51, %c0_52] : memref<1x10x18x128xf32, #tpu.memory_space<vmem>>, vector<1x4x8x128xf32>
      %95 = vector.shape_cast %94 : vector<1x4x8x128xf32> to vector<4x8x128xf32>
      %96 = vector.shape_cast %14 : vector<1x128xf32> to vector<1x1x128xf32>
      %97 = vector.broadcast %96 : vector<1x1x128xf32> to vector<4x8x128xf32>
      %98 = arith.subf %95, %97 : vector<4x8x128xf32>
      %99 = vector.shape_cast %16 : vector<1x128xf32> to vector<1x1x128xf32>
      %100 = vector.broadcast %99 : vector<1x1x128xf32> to vector<4x8x128xf32>
      %101 = arith.mulf %98, %100 : vector<4x8x128xf32>
      %cst_53 = arith.constant 0.000000e+00 : f32
      %102 = vector.broadcast %cst_53 : f32 to vector<4x8x128xf32>
      %103 = arith.maximumf %101, %102 : vector<4x8x128xf32>
      %104 = vector.shape_cast %103 : vector<4x8x128xf32> to vector<32x128xf32>
      %c9_i32_54 = arith.constant 9 : i32
      %105 = arith.muli %arg2, %c9_i32_54 : i32
      %c3_i32_55 = arith.constant 3 : i32
      %106 = arith.addi %105, %c3_i32_55 : i32
      %c1_i32_56 = arith.constant 1 : i32
      %107 = arith.addi %106, %c1_i32_56 : i32
      %108 = arith.index_cast %107 : i32 to index
      %c0_57 = arith.constant 0 : index
      %c0_58 = arith.constant 0 : index
      %109 = vector.load %arg6[%108, %c0_57, %c0_58] : memref<27x128x128xf32, #tpu.memory_space<vmem>>, vector<1x128x128xf32>
      %110 = vector.shape_cast %109 : vector<1x128x128xf32> to vector<128x128xf32>
      %cst_59 = arith.constant dense<0.000000e+00> : vector<32x128xf32>
      %111 = tpu.matmul %104, %110, %cst_59 {dimension_numbers = #tpu.dot_dimension_numbers<[1], [0], [0], [1], [0, 0, 1, 1], [], []>} : vector<32x128xf32>, vector<128x128xf32>, vector<32x128xf32> -> vector<32x128xf32>
      %112 = arith.addf %93, %111 : vector<32x128xf32>
      %c0_60 = arith.constant 0 : index
      %c5_61 = arith.constant 5 : index
      %c1_62 = arith.constant 1 : index
      %c0_63 = arith.constant 0 : index
      %113 = vector.load %arg5[%c0_60, %c5_61, %c1_62, %c0_63] : memref<1x10x18x128xf32, #tpu.memory_space<vmem>>, vector<1x4x8x128xf32>
      %114 = vector.shape_cast %113 : vector<1x4x8x128xf32> to vector<4x8x128xf32>
      %115 = vector.shape_cast %14 : vector<1x128xf32> to vector<1x1x128xf32>
      %116 = vector.broadcast %115 : vector<1x1x128xf32> to vector<4x8x128xf32>
      %117 = arith.subf %114, %116 : vector<4x8x128xf32>
      %118 = vector.shape_cast %16 : vector<1x128xf32> to vector<1x1x128xf32>
      %119 = vector.broadcast %118 : vector<1x1x128xf32> to vector<4x8x128xf32>
      %120 = arith.mulf %117, %119 : vector<4x8x128xf32>
      %cst_64 = arith.constant 0.000000e+00 : f32
      %121 = vector.broadcast %cst_64 : f32 to vector<4x8x128xf32>
      %122 = arith.maximumf %120, %121 : vector<4x8x128xf32>
      %123 = vector.shape_cast %122 : vector<4x8x128xf32> to vector<32x128xf32>
      %c9_i32_65 = arith.constant 9 : i32
      %124 = arith.muli %arg2, %c9_i32_65 : i32
      %c3_i32_66 = arith.constant 3 : i32
      %125 = arith.addi %124, %c3_i32_66 : i32
      %c2_i32_67 = arith.constant 2 : i32
      %126 = arith.addi %125, %c2_i32_67 : i32
      %127 = arith.index_cast %126 : i32 to index
      %c0_68 = arith.constant 0 : index
      %c0_69 = arith.constant 0 : index
      %128 = vector.load %arg6[%127, %c0_68, %c0_69] : memref<27x128x128xf32, #tpu.memory_space<vmem>>, vector<1x128x128xf32>
      %129 = vector.shape_cast %128 : vector<1x128x128xf32> to vector<128x128xf32>
      %cst_70 = arith.constant dense<0.000000e+00> : vector<32x128xf32>
      %130 = tpu.matmul %123, %129, %cst_70 {dimension_numbers = #tpu.dot_dimension_numbers<[1], [0], [0], [1], [0, 0, 1, 1], [], []>} : vector<32x128xf32>, vector<128x128xf32>, vector<32x128xf32> -> vector<32x128xf32>
      %131 = arith.addf %112, %130 : vector<32x128xf32>
      %c0_71 = arith.constant 0 : index
      %c1_72 = arith.constant 1 : index
      %c0_73 = arith.constant 0 : index
      %c0_74 = arith.constant 0 : index
      %132 = vector.load %arg5[%c0_71, %c1_72, %c0_73, %c0_74] : memref<1x10x18x128xf32, #tpu.memory_space<vmem>>, vector<1x4x8x128xf32>
      %133 = vector.shape_cast %132 : vector<1x4x8x128xf32> to vector<4x8x128xf32>
      %134 = vector.shape_cast %14 : vector<1x128xf32> to vector<1x1x128xf32>
      %135 = vector.broadcast %134 : vector<1x1x128xf32> to vector<4x8x128xf32>
      %136 = arith.subf %133, %135 : vector<4x8x128xf32>
      %137 = vector.shape_cast %16 : vector<1x128xf32> to vector<1x1x128xf32>
      %138 = vector.broadcast %137 : vector<1x1x128xf32> to vector<4x8x128xf32>
      %139 = arith.mulf %136, %138 : vector<4x8x128xf32>
      %cst_75 = arith.constant 0.000000e+00 : f32
      %140 = vector.broadcast %cst_75 : f32 to vector<4x8x128xf32>
      %141 = arith.maximumf %139, %140 : vector<4x8x128xf32>
      %142 = vector.shape_cast %141 : vector<4x8x128xf32> to vector<32x128xf32>
      %c9_i32_76 = arith.constant 9 : i32
      %143 = arith.muli %arg2, %c9_i32_76 : i32
      %c6_i32 = arith.constant 6 : i32
      %144 = arith.addi %143, %c6_i32 : i32
      %c0_i32_77 = arith.constant 0 : i32
      %145 = arith.addi %144, %c0_i32_77 : i32
      %146 = arith.index_cast %145 : i32 to index
      %c0_78 = arith.constant 0 : index
      %c0_79 = arith.constant 0 : index
      %147 = vector.load %arg6[%146, %c0_78, %c0_79] : memref<27x128x128xf32, #tpu.memory_space<vmem>>, vector<1x128x128xf32>
      %148 = vector.shape_cast %147 : vector<1x128x128xf32> to vector<128x128xf32>
      %cst_80 = arith.constant dense<0.000000e+00> : vector<32x128xf32>
      %149 = tpu.matmul %142, %148, %cst_80 {dimension_numbers = #tpu.dot_dimension_numbers<[1], [0], [0], [1], [0, 0, 1, 1], [], []>} : vector<32x128xf32>, vector<128x128xf32>, vector<32x128xf32> -> vector<32x128xf32>
      %150 = arith.addf %131, %149 : vector<32x128xf32>
      %c0_81 = arith.constant 0 : index
      %c1_82 = arith.constant 1 : index
      %c9_83 = arith.constant 9 : index
      %c0_84 = arith.constant 0 : index
      %151 = vector.load %arg5[%c0_81, %c1_82, %c9_83, %c0_84] : memref<1x10x18x128xf32, #tpu.memory_space<vmem>>, vector<1x4x8x128xf32>
      %152 = vector.shape_cast %151 : vector<1x4x8x128xf32> to vector<4x8x128xf32>
      %153 = vector.shape_cast %14 : vector<1x128xf32> to vector<1x1x128xf32>
      %154 = vector.broadcast %153 : vector<1x1x128xf32> to vector<4x8x128xf32>
      %155 = arith.subf %152, %154 : vector<4x8x128xf32>
      %156 = vector.shape_cast %16 : vector<1x128xf32> to vector<1x1x128xf32>
      %157 = vector.broadcast %156 : vector<1x1x128xf32> to vector<4x8x128xf32>
      %158 = arith.mulf %155, %157 : vector<4x8x128xf32>
      %cst_85 = arith.constant 0.000000e+00 : f32
      %159 = vector.broadcast %cst_85 : f32 to vector<4x8x128xf32>
      %160 = arith.maximumf %158, %159 : vector<4x8x128xf32>
      %161 = vector.shape_cast %160 : vector<4x8x128xf32> to vector<32x128xf32>
      %c9_i32_86 = arith.constant 9 : i32
      %162 = arith.muli %arg2, %c9_i32_86 : i32
      %c6_i32_87 = arith.constant 6 : i32
      %163 = arith.addi %162, %c6_i32_87 : i32
      %c1_i32_88 = arith.constant 1 : i32
      %164 = arith.addi %163, %c1_i32_88 : i32
      %165 = arith.index_cast %164 : i32 to index
      %c0_89 = arith.constant 0 : index
      %c0_90 = arith.constant 0 : index
      %166 = vector.load %arg6[%165, %c0_89, %c0_90] : memref<27x128x128xf32, #tpu.memory_space<vmem>>, vector<1x128x128xf32>
      %167 = vector.shape_cast %166 : vector<1x128x128xf32> to vector<128x128xf32>
      %cst_91 = arith.constant dense<0.000000e+00> : vector<32x128xf32>
      %168 = tpu.matmul %161, %167, %cst_91 {dimension_numbers = #tpu.dot_dimension_numbers<[1], [0], [0], [1], [0, 0, 1, 1], [], []>} : vector<32x128xf32>, vector<128x128xf32>, vector<32x128xf32> -> vector<32x128xf32>
      %169 = arith.addf %150, %168 : vector<32x128xf32>
      %c0_92 = arith.constant 0 : index
      %c1_93 = arith.constant 1 : index
      %c1_94 = arith.constant 1 : index
      %c0_95 = arith.constant 0 : index
      %170 = vector.load %arg5[%c0_92, %c1_93, %c1_94, %c0_95] : memref<1x10x18x128xf32, #tpu.memory_space<vmem>>, vector<1x4x8x128xf32>
      %171 = vector.shape_cast %170 : vector<1x4x8x128xf32> to vector<4x8x128xf32>
      %172 = vector.shape_cast %14 : vector<1x128xf32> to vector<1x1x128xf32>
      %173 = vector.broadcast %172 : vector<1x1x128xf32> to vector<4x8x128xf32>
      %174 = arith.subf %171, %173 : vector<4x8x128xf32>
      %175 = vector.shape_cast %16 : vector<1x128xf32> to vector<1x1x128xf32>
      %176 = vector.broadcast %175 : vector<1x1x128xf32> to vector<4x8x128xf32>
      %177 = arith.mulf %174, %176 : vector<4x8x128xf32>
      %cst_96 = arith.constant 0.000000e+00 : f32
      %178 = vector.broadcast %cst_96 : f32 to vector<4x8x128xf32>
      %179 = arith.maximumf %177, %178 : vector<4x8x128xf32>
      %180 = vector.shape_cast %179 : vector<4x8x128xf32> to vector<32x128xf32>
      %c9_i32_97 = arith.constant 9 : i32
      %181 = arith.muli %arg2, %c9_i32_97 : i32
      %c6_i32_98 = arith.constant 6 : i32
      %182 = arith.addi %181, %c6_i32_98 : i32
      %c2_i32_99 = arith.constant 2 : i32
      %183 = arith.addi %182, %c2_i32_99 : i32
      %184 = arith.index_cast %183 : i32 to index
      %c0_100 = arith.constant 0 : index
      %c0_101 = arith.constant 0 : index
      %185 = vector.load %arg6[%184, %c0_100, %c0_101] : memref<27x128x128xf32, #tpu.memory_space<vmem>>, vector<1x128x128xf32>
      %186 = vector.shape_cast %185 : vector<1x128x128xf32> to vector<128x128xf32>
      %cst_102 = arith.constant dense<0.000000e+00> : vector<32x128xf32>
      %187 = tpu.matmul %180, %186, %cst_102 {dimension_numbers = #tpu.dot_dimension_numbers<[1], [0], [0], [1], [0, 0, 1, 1], [], []>} : vector<32x128xf32>, vector<128x128xf32>, vector<32x128xf32> -> vector<32x128xf32>
      %188 = arith.addf %169, %187 : vector<32x128xf32>
      %c0_103 = arith.constant 0 : index
      %c0_104 = arith.constant 0 : index
      %189 = vector.load %arg9[%c0_103, %c0_104] : memref<32x128xf32, #tpu.memory_space<vmem>>, vector<32x128xf32>
      %190 = arith.addf %189, %188 : vector<32x128xf32>
      %c0_105 = arith.constant 0 : index
      %c0_106 = arith.constant 0 : index
      %191 = vector.load %arg9[%c0_105, %c0_106] : memref<32x128xf32, #tpu.memory_space<vmem>>, vector<32x128xf32>
      tpu.vector_store %arg9[%c0_105, %c0_106], %190 {strides = array<i32>} : memref<32x128xf32, #tpu.memory_space<vmem>>, vector<32x128xf32>,
    } else {
    }
    %c2_i32_3 = arith.constant 2 : i32
    %10 = arith.cmpi eq, %arg2, %c2_i32_3 : i32
    %11 = arith.extui %10 : i1 to i32
    %c0_i32_4 = arith.constant 0 : i32
    %12 = arith.cmpi ne, %11, %c0_i32_4 : i32
    scf.if %12 {
      %c0 = arith.constant 0 : index
      %c0_5 = arith.constant 0 : index
      %13 = vector.load %arg9[%c0, %c0_5] : memref<32x128xf32, #tpu.memory_space<vmem>>, vector<32x128xf32>
      %c0_6 = arith.constant 0 : index
      %c0_7 = arith.constant 0 : index
      %14 = vector.load %arg7[%c0_6, %c0_7] : memref<1x128xf32, #tpu.memory_space<vmem>>, vector<1x128xf32>
      %15 = vector.broadcast %14 : vector<1x128xf32> to vector<32x128xf32>
      %16 = arith.addf %13, %15 : vector<32x128xf32>
      %c0_8 = arith.constant 0 : index
      %c0_9 = arith.constant 0 : index
      %c0_10 = arith.constant 0 : index
      %17 = vector.load %arg8[%c0_8, %c0_9, %c0_10] : memref<1x32x128xf32, #tpu.memory_space<vmem>>, vector<1x32x128xf32>
      %18 = vector.shape_cast %17 : vector<1x32x128xf32> to vector<32x128xf32>
      %19 = vector.shape_cast %16 : vector<32x128xf32> to vector<1x32x128xf32>
      tpu.vector_store %arg8[%c0_8, %c0_9, %c0_10], %19 {strides = array<i32>} : memref<1x32x128xf32, #tpu.memory_space<vmem>>, vector<1x32x128xf32>,
    } else {
    }
    return
  }
  func.func @transform_0(%arg0: i32, %arg1: i32, %arg2: i32) -> (i32, i32, i32) {
    %c0_i32 = arith.constant 0 : i32
    %c0_i32_0 = arith.constant 0 : i32
    %c0_i32_1 = arith.constant 0 : i32
    return %arg0, %c0_i32, %c0_i32_0 : i32, i32, i32
  }
  func.func @transform_1(%arg0: i32, %arg1: i32, %arg2: i32) -> (i32, i32, i32) {
    %c0_i32 = arith.constant 0 : i32
    %c0_i32_0 = arith.constant 0 : i32
    %c0_i32_1 = arith.constant 0 : i32
    return %arg0, %c0_i32, %c0_i32_0 : i32, i32, i32
  }
  func.func @transform_2(%arg0: i32, %arg1: i32, %arg2: i32) -> (i32, i32, i32, i32) {
    %c10_i32 = arith.constant 10 : i32
    %0 = arith.muli %arg0, %c10_i32 : i32
    %c2_i32 = arith.constant 2 : i32
    %1 = arith.muli %arg1, %c2_i32 : i32
    %2 = arith.addi %0, %1 : i32
    %3 = arith.addi %2, %arg2 : i32
    %c0_i32 = arith.constant 0 : i32
    %c0_i32_0 = arith.constant 0 : i32
    %c0_i32_1 = arith.constant 0 : i32
    %c0_i32_2 = arith.constant 0 : i32
    return %3, %c0_i32, %c0_i32_0, %c0_i32_1 : i32, i32, i32, i32
  }
  func.func @transform_3(%arg0: i32, %arg1: i32, %arg2: i32) -> (i32, i32, i32) {
    %c0_i32 = arith.constant 0 : i32
    %c0_i32_0 = arith.constant 0 : i32
    %c0_i32_1 = arith.constant 0 : i32
    %c0_i32_2 = arith.constant 0 : i32
    return %c0_i32, %c0_i32_0, %c0_i32_1 : i32, i32, i32
  }
  func.func @transform_4(%arg0: i32, %arg1: i32, %arg2: i32) -> (i32, i32) {
    %c0_i32 = arith.constant 0 : i32
    %c0_i32_0 = arith.constant 0 : i32
    %c0_i32_1 = arith.constant 0 : i32
    return %c0_i32, %c0_i32_0 : i32, i32
  }
  func.func @transform_5(%arg0: i32, %arg1: i32, %arg2: i32) -> (i32, i32, i32) {
    %c4_i32 = arith.constant 4 : i32
    %0 = arith.muli %arg0, %c4_i32 : i32
    %1 = arith.addi %0, %arg1 : i32
    %c0_i32 = arith.constant 0 : i32
    %c0_i32_0 = arith.constant 0 : i32
    %c0_i32_1 = arith.constant 0 : i32
    return %1, %c0_i32, %c0_i32_0 : i32, i32, i32
  }
}

module attributes {stable_mosaic.version = 11 : i64} {
  func.func @_stats_kernel(%arg0: i32, %arg1: i32, %arg2: memref<1x64x128xf32, #tpu.memory_space<vmem>>, %arg3: memref<1x1x128xf32, #tpu.memory_space<vmem>>, %arg4: memref<1x1x128xf32, #tpu.memory_space<vmem>>, %arg5: memref<1x128xf32, #tpu.memory_space<vmem>>, %arg6: memref<1x128xf32, #tpu.memory_space<vmem>>) attributes {dimension_semantics = [#tpu.dimension_semantics<parallel>, #tpu.dimension_semantics<arbitrary>], iteration_bounds = array<i64: 2, 1>, scalar_prefetch = 0 : i64, scratch_operands = 2 : i64, tpu.core_type = #tpu.core_type<tc>, window_params = [{transform_indices = @transform_0, window_bounds = array<i64: 1, 64, 128>}, {transform_indices = @transform_1, window_bounds = array<i64: 1, 1, 128>}, {transform_indices = @transform_2, window_bounds = array<i64: 1, 1, 128>}]} {
    %c0_i32 = arith.constant 0 : i32
    %0 = arith.cmpi eq, %arg1, %c0_i32 : i32
    %1 = arith.extui %0 : i1 to i32
    %c0_i32_0 = arith.constant 0 : i32
    %2 = arith.cmpi ne, %1, %c0_i32_0 : i32
    scf.if %2 {
      %cst_14 = arith.constant 0.000000e+00 : f32
      %19 = vector.broadcast %cst_14 : f32 to vector<1x128xf32>
      %c0_15 = arith.constant 0 : index
      %c0_16 = arith.constant 0 : index
      %20 = vector.load %arg5[%c0_15, %c0_16] : memref<1x128xf32, #tpu.memory_space<vmem>>, vector<1x128xf32>
      tpu.vector_store %arg5[%c0_15, %c0_16], %19 {strides = array<i32>} : memref<1x128xf32, #tpu.memory_space<vmem>>, vector<1x128xf32>,
      %cst_17 = arith.constant 0.000000e+00 : f32
      %21 = vector.broadcast %cst_17 : f32 to vector<1x128xf32>
      %c0_18 = arith.constant 0 : index
      %c0_19 = arith.constant 0 : index
      %22 = vector.load %arg6[%c0_18, %c0_19] : memref<1x128xf32, #tpu.memory_space<vmem>>, vector<1x128xf32>
      tpu.vector_store %arg6[%c0_18, %c0_19], %21 {strides = array<i32>} : memref<1x128xf32, #tpu.memory_space<vmem>>, vector<1x128xf32>,
    } else {
    }
    %c0 = arith.constant 0 : index
    %c0_1 = arith.constant 0 : index
    %c0_2 = arith.constant 0 : index
    %3 = vector.load %arg2[%c0, %c0_1, %c0_2] : memref<1x64x128xf32, #tpu.memory_space<vmem>>, vector<1x64x128xf32>
    %4 = vector.shape_cast %3 : vector<1x64x128xf32> to vector<64x128xf32>
    %c0_3 = arith.constant 0 : index
    %c0_4 = arith.constant 0 : index
    %5 = vector.load %arg5[%c0_3, %c0_4] : memref<1x128xf32, #tpu.memory_space<vmem>>, vector<1x128xf32>
    %cst = arith.constant dense<0.000000e+00> : vector<128xf32>
    %6 = vector.multi_reduction <add>, %4, %cst [0] : vector<64x128xf32> to vector<128xf32>
    %7 = vector.shape_cast %6 : vector<128xf32> to vector<1x128xf32>
    %8 = arith.addf %5, %7 : vector<1x128xf32>
    %c0_5 = arith.constant 0 : index
    %c0_6 = arith.constant 0 : index
    %9 = vector.load %arg5[%c0_5, %c0_6] : memref<1x128xf32, #tpu.memory_space<vmem>>, vector<1x128xf32>
    tpu.vector_store %arg5[%c0_5, %c0_6], %8 {strides = array<i32>} : memref<1x128xf32, #tpu.memory_space<vmem>>, vector<1x128xf32>,
    %c0_7 = arith.constant 0 : index
    %c0_8 = arith.constant 0 : index
    %10 = vector.load %arg6[%c0_7, %c0_8] : memref<1x128xf32, #tpu.memory_space<vmem>>, vector<1x128xf32>
    %11 = arith.mulf %4, %4 : vector<64x128xf32>
    %cst_9 = arith.constant dense<0.000000e+00> : vector<128xf32>
    %12 = vector.multi_reduction <add>, %11, %cst_9 [0] : vector<64x128xf32> to vector<128xf32>
    %13 = vector.shape_cast %12 : vector<128xf32> to vector<1x128xf32>
    %14 = arith.addf %10, %13 : vector<1x128xf32>
    %c0_10 = arith.constant 0 : index
    %c0_11 = arith.constant 0 : index
    %15 = vector.load %arg6[%c0_10, %c0_11] : memref<1x128xf32, #tpu.memory_space<vmem>>, vector<1x128xf32>
    tpu.vector_store %arg6[%c0_10, %c0_11], %14 {strides = array<i32>} : memref<1x128xf32, #tpu.memory_space<vmem>>, vector<1x128xf32>,
    %c0_i32_12 = arith.constant 0 : i32
    %16 = arith.cmpi eq, %arg1, %c0_i32_12 : i32
    %17 = arith.extui %16 : i1 to i32
    %c0_i32_13 = arith.constant 0 : i32
    %18 = arith.cmpi ne, %17, %c0_i32_13 : i32
    scf.if %18 {
      %c0_14 = arith.constant 0 : index
      %c0_15 = arith.constant 0 : index
      %19 = vector.load %arg5[%c0_14, %c0_15] : memref<1x128xf32, #tpu.memory_space<vmem>>, vector<1x128xf32>
      %cst_16 = arith.constant 1.562500e-02 : f32
      %20 = vector.broadcast %cst_16 : f32 to vector<1x128xf32>
      %21 = arith.mulf %19, %20 : vector<1x128xf32>
      %c0_17 = arith.constant 0 : index
      %c0_18 = arith.constant 0 : index
      %22 = vector.load %arg6[%c0_17, %c0_18] : memref<1x128xf32, #tpu.memory_space<vmem>>, vector<1x128xf32>
      %cst_19 = arith.constant 1.562500e-02 : f32
      %23 = vector.broadcast %cst_19 : f32 to vector<1x128xf32>
      %24 = arith.mulf %22, %23 : vector<1x128xf32>
      %25 = arith.mulf %21, %21 : vector<1x128xf32>
      %26 = arith.subf %24, %25 : vector<1x128xf32>
      %c0_20 = arith.constant 0 : index
      %c0_21 = arith.constant 0 : index
      %c0_22 = arith.constant 0 : index
      %27 = vector.load %arg3[%c0_20, %c0_21, %c0_22] : memref<1x1x128xf32, #tpu.memory_space<vmem>>, vector<1x1x128xf32>
      %28 = vector.shape_cast %27 : vector<1x1x128xf32> to vector<1x128xf32>
      %29 = vector.shape_cast %21 : vector<1x128xf32> to vector<1x1x128xf32>
      tpu.vector_store %arg3[%c0_20, %c0_21, %c0_22], %29 {strides = array<i32>} : memref<1x1x128xf32, #tpu.memory_space<vmem>>, vector<1x1x128xf32>,
      %cst_23 = arith.constant 9.99999974E-6 : f32
      %30 = vector.broadcast %cst_23 : f32 to vector<1x128xf32>
      %31 = arith.addf %26, %30 : vector<1x128xf32>
      %32 = math.rsqrt %31 : vector<1x128xf32>
      %c0_24 = arith.constant 0 : index
      %c0_25 = arith.constant 0 : index
      %c0_26 = arith.constant 0 : index
      %33 = vector.load %arg4[%c0_24, %c0_25, %c0_26] : memref<1x1x128xf32, #tpu.memory_space<vmem>>, vector<1x1x128xf32>
      %34 = vector.shape_cast %33 : vector<1x1x128xf32> to vector<1x128xf32>
      %35 = vector.shape_cast %32 : vector<1x128xf32> to vector<1x1x128xf32>
      tpu.vector_store %arg4[%c0_24, %c0_25, %c0_26], %35 {strides = array<i32>} : memref<1x1x128xf32, #tpu.memory_space<vmem>>, vector<1x1x128xf32>,
    } else {
    }
    return
  }
  func.func @transform_0(%arg0: i32, %arg1: i32) -> (i32, i32, i32) {
    %c0_i32 = arith.constant 0 : i32
    %c0_i32_0 = arith.constant 0 : i32
    return %arg0, %arg1, %c0_i32 : i32, i32, i32
  }
  func.func @transform_1(%arg0: i32, %arg1: i32) -> (i32, i32, i32) {
    %c0_i32 = arith.constant 0 : i32
    %c0_i32_0 = arith.constant 0 : i32
    %c0_i32_1 = arith.constant 0 : i32
    return %arg0, %c0_i32, %c0_i32_0 : i32, i32, i32
  }
  func.func @transform_2(%arg0: i32, %arg1: i32) -> (i32, i32, i32) {
    %c0_i32 = arith.constant 0 : i32
    %c0_i32_0 = arith.constant 0 : i32
    %c0_i32_1 = arith.constant 0 : i32
    return %arg0, %c0_i32, %c0_i32_0 : i32, i32, i32
  }
}

module attributes {stable_mosaic.version = 11 : i64} {
  func.func @kernel(%arg0: i32, %arg1: i32, %arg2: i32, %arg3: memref<1x1x128xf32, #tpu.memory_space<vmem>>, %arg4: memref<1x1x128xf32, #tpu.memory_space<vmem>>, %arg5: memref<1x6x10x128xf32, #tpu.memory_space<vmem>>, %arg6: memref<27x128x128xf32, #tpu.memory_space<vmem>>, %arg7: memref<1x128xf32, #tpu.memory_space<vmem>>, %arg8: memref<1x4x8x128xf32, #tpu.memory_space<vmem>>, %arg9: memref<128x128xf32, #tpu.memory_space<vmem>>, %arg10: memref<1x32x128xf32, #tpu.memory_space<vmem>>, %arg11: memref<32x128xf32, #tpu.memory_space<vmem>>) attributes {dimension_semantics = [#tpu.dimension_semantics<parallel>, #tpu.dimension_semantics<parallel>, #tpu.dimension_semantics<arbitrary>], iteration_bounds = array<i64: 2, 4, 3>, scalar_prefetch = 0 : i64, scratch_operands = 1 : i64, tpu.core_type = #tpu.core_type<tc>, window_params = [{transform_indices = @transform_0, window_bounds = array<i64: 1, 1, 128>}, {transform_indices = @transform_1, window_bounds = array<i64: 1, 1, 128>}, {transform_indices = @transform_2, window_bounds = array<i64: 1, 6, 10, 128>}, {pipeline_mode = #tpu.pipeline_mode<synchronous>, transform_indices = @transform_3, window_bounds = array<i64: 27, 128, 128>}, {pipeline_mode = #tpu.pipeline_mode<synchronous>, transform_indices = @transform_4, window_bounds = array<i64: 1, 128>}, {transform_indices = @transform_5, window_bounds = array<i64: 1, 4, 8, 128>}, {pipeline_mode = #tpu.pipeline_mode<synchronous>, transform_indices = @transform_6, window_bounds = array<i64: 128, 128>}, {transform_indices = @transform_7, window_bounds = array<i64: 1, 32, 128>}]} {
    %c0_i32 = arith.constant 0 : i32
    %0 = arith.cmpi eq, %arg2, %c0_i32 : i32
    %1 = arith.extui %0 : i1 to i32
    %c0_i32_0 = arith.constant 0 : i32
    %2 = arith.cmpi ne, %1, %c0_i32_0 : i32
    scf.if %2 {
      %cst = arith.constant 0.000000e+00 : f32
      %13 = vector.broadcast %cst : f32 to vector<32x128xf32>
      %c0 = arith.constant 0 : index
      %c0_4 = arith.constant 0 : index
      %14 = vector.load %arg11[%c0, %c0_4] : memref<32x128xf32, #tpu.memory_space<vmem>>, vector<32x128xf32>
      tpu.vector_store %arg11[%c0, %c0_4], %13 {strides = array<i32>} : memref<32x128xf32, #tpu.memory_space<vmem>>, vector<32x128xf32>,
    } else {
    }
    %c1_i32 = arith.constant 1 : i32
    %3 = arith.muli %arg1, %c1_i32 : i32
    %4 = arith.addi %3, %arg2 : i32
    %c0_i32_1 = arith.constant 0 : i32
    %5 = arith.cmpi sgt, %4, %c0_i32_1 : i32
    %c5_i32 = arith.constant 5 : i32
    %6 = arith.cmpi slt, %4, %c5_i32 : i32
    %7 = arith.andi %5, %6 : i1
    %8 = arith.extui %7 : i1 to i32
    %c0_i32_2 = arith.constant 0 : i32
    %9 = arith.cmpi ne, %8, %c0_i32_2 : i32
    scf.if %9 {
      %c0 = arith.constant 0 : index
      %c0_4 = arith.constant 0 : index
      %c0_5 = arith.constant 0 : index
      %13 = vector.load %arg3[%c0, %c0_4, %c0_5] : memref<1x1x128xf32, #tpu.memory_space<vmem>>, vector<1x1x128xf32>
      %14 = vector.shape_cast %13 : vector<1x1x128xf32> to vector<1x128xf32>
      %c0_6 = arith.constant 0 : index
      %c0_7 = arith.constant 0 : index
      %c0_8 = arith.constant 0 : index
      %15 = vector.load %arg4[%c0_6, %c0_7, %c0_8] : memref<1x1x128xf32, #tpu.memory_space<vmem>>, vector<1x1x128xf32>
      %16 = vector.shape_cast %15 : vector<1x1x128xf32> to vector<1x128xf32>
      %cst = arith.constant 0.000000e+00 : f32
      %17 = vector.broadcast %cst : f32 to vector<32x128xf32>
      %c0_9 = arith.constant 0 : index
      %c0_10 = arith.constant 0 : index
      %c0_11 = arith.constant 0 : index
      %c0_12 = arith.constant 0 : index
      %18 = vector.load %arg5[%c0_9, %c0_10, %c0_11, %c0_12] : memref<1x6x10x128xf32, #tpu.memory_space<vmem>>, vector<1x4x8x128xf32>
      %19 = vector.shape_cast %18 : vector<1x4x8x128xf32> to vector<4x8x128xf32>
      %20 = vector.shape_cast %14 : vector<1x128xf32> to vector<1x1x128xf32>
      %21 = vector.broadcast %20 : vector<1x1x128xf32> to vector<4x8x128xf32>
      %22 = arith.subf %19, %21 : vector<4x8x128xf32>
      %23 = vector.shape_cast %16 : vector<1x128xf32> to vector<1x1x128xf32>
      %24 = vector.broadcast %23 : vector<1x1x128xf32> to vector<4x8x128xf32>
      %25 = arith.mulf %22, %24 : vector<4x8x128xf32>
      %cst_13 = arith.constant 0.000000e+00 : f32
      %26 = vector.broadcast %cst_13 : f32 to vector<4x8x128xf32>
      %27 = arith.maximumf %25, %26 : vector<4x8x128xf32>
      %28 = vector.shape_cast %27 : vector<4x8x128xf32> to vector<32x128xf32>
      %c9_i32 = arith.constant 9 : i32
      %29 = arith.muli %arg2, %c9_i32 : i32
      %c0_i32_14 = arith.constant 0 : i32
      %30 = arith.addi %29, %c0_i32_14 : i32
      %c0_i32_15 = arith.constant 0 : i32
      %31 = arith.addi %30, %c0_i32_15 : i32
      %32 = arith.index_cast %31 : i32 to index
      %c0_16 = arith.constant 0 : index
      %c0_17 = arith.constant 0 : index
      %33 = vector.load %arg6[%32, %c0_16, %c0_17] : memref<27x128x128xf32, #tpu.memory_space<vmem>>, vector<1x128x128xf32>
      %34 = vector.shape_cast %33 : vector<1x128x128xf32> to vector<128x128xf32>
      %cst_18 = arith.constant dense<0.000000e+00> : vector<32x128xf32>
      %35 = tpu.matmul %28, %34, %cst_18 {dimension_numbers = #tpu.dot_dimension_numbers<[1], [0], [0], [1], [0, 0, 1, 1], [], []>} : vector<32x128xf32>, vector<128x128xf32>, vector<32x128xf32> -> vector<32x128xf32>
      %36 = arith.addf %17, %35 : vector<32x128xf32>
      %c0_19 = arith.constant 0 : index
      %c0_20 = arith.constant 0 : index
      %c1 = arith.constant 1 : index
      %c0_21 = arith.constant 0 : index
      %37 = vector.load %arg5[%c0_19, %c0_20, %c1, %c0_21] : memref<1x6x10x128xf32, #tpu.memory_space<vmem>>, vector<1x4x8x128xf32>
      %38 = vector.shape_cast %37 : vector<1x4x8x128xf32> to vector<4x8x128xf32>
      %39 = vector.shape_cast %14 : vector<1x128xf32> to vector<1x1x128xf32>
      %40 = vector.broadcast %39 : vector<1x1x128xf32> to vector<4x8x128xf32>
      %41 = arith.subf %38, %40 : vector<4x8x128xf32>
      %42 = vector.shape_cast %16 : vector<1x128xf32> to vector<1x1x128xf32>
      %43 = vector.broadcast %42 : vector<1x1x128xf32> to vector<4x8x128xf32>
      %44 = arith.mulf %41, %43 : vector<4x8x128xf32>
      %cst_22 = arith.constant 0.000000e+00 : f32
      %45 = vector.broadcast %cst_22 : f32 to vector<4x8x128xf32>
      %46 = arith.maximumf %44, %45 : vector<4x8x128xf32>
      %47 = vector.shape_cast %46 : vector<4x8x128xf32> to vector<32x128xf32>
      %c9_i32_23 = arith.constant 9 : i32
      %48 = arith.muli %arg2, %c9_i32_23 : i32
      %c0_i32_24 = arith.constant 0 : i32
      %49 = arith.addi %48, %c0_i32_24 : i32
      %c1_i32_25 = arith.constant 1 : i32
      %50 = arith.addi %49, %c1_i32_25 : i32
      %51 = arith.index_cast %50 : i32 to index
      %c0_26 = arith.constant 0 : index
      %c0_27 = arith.constant 0 : index
      %52 = vector.load %arg6[%51, %c0_26, %c0_27] : memref<27x128x128xf32, #tpu.memory_space<vmem>>, vector<1x128x128xf32>
      %53 = vector.shape_cast %52 : vector<1x128x128xf32> to vector<128x128xf32>
      %cst_28 = arith.constant dense<0.000000e+00> : vector<32x128xf32>
      %54 = tpu.matmul %47, %53, %cst_28 {dimension_numbers = #tpu.dot_dimension_numbers<[1], [0], [0], [1], [0, 0, 1, 1], [], []>} : vector<32x128xf32>, vector<128x128xf32>, vector<32x128xf32> -> vector<32x128xf32>
      %55 = arith.addf %36, %54 : vector<32x128xf32>
      %c0_29 = arith.constant 0 : index
      %c0_30 = arith.constant 0 : index
      %c2 = arith.constant 2 : index
      %c0_31 = arith.constant 0 : index
      %56 = vector.load %arg5[%c0_29, %c0_30, %c2, %c0_31] : memref<1x6x10x128xf32, #tpu.memory_space<vmem>>, vector<1x4x8x128xf32>
      %57 = vector.shape_cast %56 : vector<1x4x8x128xf32> to vector<4x8x128xf32>
      %58 = vector.shape_cast %14 : vector<1x128xf32> to vector<1x1x128xf32>
      %59 = vector.broadcast %58 : vector<1x1x128xf32> to vector<4x8x128xf32>
      %60 = arith.subf %57, %59 : vector<4x8x128xf32>
      %61 = vector.shape_cast %16 : vector<1x128xf32> to vector<1x1x128xf32>
      %62 = vector.broadcast %61 : vector<1x1x128xf32> to vector<4x8x128xf32>
      %63 = arith.mulf %60, %62 : vector<4x8x128xf32>
      %cst_32 = arith.constant 0.000000e+00 : f32
      %64 = vector.broadcast %cst_32 : f32 to vector<4x8x128xf32>
      %65 = arith.maximumf %63, %64 : vector<4x8x128xf32>
      %66 = vector.shape_cast %65 : vector<4x8x128xf32> to vector<32x128xf32>
      %c9_i32_33 = arith.constant 9 : i32
      %67 = arith.muli %arg2, %c9_i32_33 : i32
      %c0_i32_34 = arith.constant 0 : i32
      %68 = arith.addi %67, %c0_i32_34 : i32
      %c2_i32_35 = arith.constant 2 : i32
      %69 = arith.addi %68, %c2_i32_35 : i32
      %70 = arith.index_cast %69 : i32 to index
      %c0_36 = arith.constant 0 : index
      %c0_37 = arith.constant 0 : index
      %71 = vector.load %arg6[%70, %c0_36, %c0_37] : memref<27x128x128xf32, #tpu.memory_space<vmem>>, vector<1x128x128xf32>
      %72 = vector.shape_cast %71 : vector<1x128x128xf32> to vector<128x128xf32>
      %cst_38 = arith.constant dense<0.000000e+00> : vector<32x128xf32>
      %73 = tpu.matmul %66, %72, %cst_38 {dimension_numbers = #tpu.dot_dimension_numbers<[1], [0], [0], [1], [0, 0, 1, 1], [], []>} : vector<32x128xf32>, vector<128x128xf32>, vector<32x128xf32> -> vector<32x128xf32>
      %74 = arith.addf %55, %73 : vector<32x128xf32>
      %c0_39 = arith.constant 0 : index
      %c1_40 = arith.constant 1 : index
      %c0_41 = arith.constant 0 : index
      %c0_42 = arith.constant 0 : index
      %75 = vector.load %arg5[%c0_39, %c1_40, %c0_41, %c0_42] : memref<1x6x10x128xf32, #tpu.memory_space<vmem>>, vector<1x4x8x128xf32>
      %76 = vector.shape_cast %75 : vector<1x4x8x128xf32> to vector<4x8x128xf32>
      %77 = vector.shape_cast %14 : vector<1x128xf32> to vector<1x1x128xf32>
      %78 = vector.broadcast %77 : vector<1x1x128xf32> to vector<4x8x128xf32>
      %79 = arith.subf %76, %78 : vector<4x8x128xf32>
      %80 = vector.shape_cast %16 : vector<1x128xf32> to vector<1x1x128xf32>
      %81 = vector.broadcast %80 : vector<1x1x128xf32> to vector<4x8x128xf32>
      %82 = arith.mulf %79, %81 : vector<4x8x128xf32>
      %cst_43 = arith.constant 0.000000e+00 : f32
      %83 = vector.broadcast %cst_43 : f32 to vector<4x8x128xf32>
      %84 = arith.maximumf %82, %83 : vector<4x8x128xf32>
      %85 = vector.shape_cast %84 : vector<4x8x128xf32> to vector<32x128xf32>
      %c9_i32_44 = arith.constant 9 : i32
      %86 = arith.muli %arg2, %c9_i32_44 : i32
      %c3_i32 = arith.constant 3 : i32
      %87 = arith.addi %86, %c3_i32 : i32
      %c0_i32_45 = arith.constant 0 : i32
      %88 = arith.addi %87, %c0_i32_45 : i32
      %89 = arith.index_cast %88 : i32 to index
      %c0_46 = arith.constant 0 : index
      %c0_47 = arith.constant 0 : index
      %90 = vector.load %arg6[%89, %c0_46, %c0_47] : memref<27x128x128xf32, #tpu.memory_space<vmem>>, vector<1x128x128xf32>
      %91 = vector.shape_cast %90 : vector<1x128x128xf32> to vector<128x128xf32>
      %cst_48 = arith.constant dense<0.000000e+00> : vector<32x128xf32>
      %92 = tpu.matmul %85, %91, %cst_48 {dimension_numbers = #tpu.dot_dimension_numbers<[1], [0], [0], [1], [0, 0, 1, 1], [], []>} : vector<32x128xf32>, vector<128x128xf32>, vector<32x128xf32> -> vector<32x128xf32>
      %93 = arith.addf %74, %92 : vector<32x128xf32>
      %c0_49 = arith.constant 0 : index
      %c1_50 = arith.constant 1 : index
      %c1_51 = arith.constant 1 : index
      %c0_52 = arith.constant 0 : index
      %94 = vector.load %arg5[%c0_49, %c1_50, %c1_51, %c0_52] : memref<1x6x10x128xf32, #tpu.memory_space<vmem>>, vector<1x4x8x128xf32>
      %95 = vector.shape_cast %94 : vector<1x4x8x128xf32> to vector<4x8x128xf32>
      %96 = vector.shape_cast %14 : vector<1x128xf32> to vector<1x1x128xf32>
      %97 = vector.broadcast %96 : vector<1x1x128xf32> to vector<4x8x128xf32>
      %98 = arith.subf %95, %97 : vector<4x8x128xf32>
      %99 = vector.shape_cast %16 : vector<1x128xf32> to vector<1x1x128xf32>
      %100 = vector.broadcast %99 : vector<1x1x128xf32> to vector<4x8x128xf32>
      %101 = arith.mulf %98, %100 : vector<4x8x128xf32>
      %cst_53 = arith.constant 0.000000e+00 : f32
      %102 = vector.broadcast %cst_53 : f32 to vector<4x8x128xf32>
      %103 = arith.maximumf %101, %102 : vector<4x8x128xf32>
      %104 = vector.shape_cast %103 : vector<4x8x128xf32> to vector<32x128xf32>
      %c9_i32_54 = arith.constant 9 : i32
      %105 = arith.muli %arg2, %c9_i32_54 : i32
      %c3_i32_55 = arith.constant 3 : i32
      %106 = arith.addi %105, %c3_i32_55 : i32
      %c1_i32_56 = arith.constant 1 : i32
      %107 = arith.addi %106, %c1_i32_56 : i32
      %108 = arith.index_cast %107 : i32 to index
      %c0_57 = arith.constant 0 : index
      %c0_58 = arith.constant 0 : index
      %109 = vector.load %arg6[%108, %c0_57, %c0_58] : memref<27x128x128xf32, #tpu.memory_space<vmem>>, vector<1x128x128xf32>
      %110 = vector.shape_cast %109 : vector<1x128x128xf32> to vector<128x128xf32>
      %cst_59 = arith.constant dense<0.000000e+00> : vector<32x128xf32>
      %111 = tpu.matmul %104, %110, %cst_59 {dimension_numbers = #tpu.dot_dimension_numbers<[1], [0], [0], [1], [0, 0, 1, 1], [], []>} : vector<32x128xf32>, vector<128x128xf32>, vector<32x128xf32> -> vector<32x128xf32>
      %112 = arith.addf %93, %111 : vector<32x128xf32>
      %c0_60 = arith.constant 0 : index
      %c1_61 = arith.constant 1 : index
      %c2_62 = arith.constant 2 : index
      %c0_63 = arith.constant 0 : index
      %113 = vector.load %arg5[%c0_60, %c1_61, %c2_62, %c0_63] : memref<1x6x10x128xf32, #tpu.memory_space<vmem>>, vector<1x4x8x128xf32>
      %114 = vector.shape_cast %113 : vector<1x4x8x128xf32> to vector<4x8x128xf32>
      %115 = vector.shape_cast %14 : vector<1x128xf32> to vector<1x1x128xf32>
      %116 = vector.broadcast %115 : vector<1x1x128xf32> to vector<4x8x128xf32>
      %117 = arith.subf %114, %116 : vector<4x8x128xf32>
      %118 = vector.shape_cast %16 : vector<1x128xf32> to vector<1x1x128xf32>
      %119 = vector.broadcast %118 : vector<1x1x128xf32> to vector<4x8x128xf32>
      %120 = arith.mulf %117, %119 : vector<4x8x128xf32>
      %cst_64 = arith.constant 0.000000e+00 : f32
      %121 = vector.broadcast %cst_64 : f32 to vector<4x8x128xf32>
      %122 = arith.maximumf %120, %121 : vector<4x8x128xf32>
      %123 = vector.shape_cast %122 : vector<4x8x128xf32> to vector<32x128xf32>
      %c9_i32_65 = arith.constant 9 : i32
      %124 = arith.muli %arg2, %c9_i32_65 : i32
      %c3_i32_66 = arith.constant 3 : i32
      %125 = arith.addi %124, %c3_i32_66 : i32
      %c2_i32_67 = arith.constant 2 : i32
      %126 = arith.addi %125, %c2_i32_67 : i32
      %127 = arith.index_cast %126 : i32 to index
      %c0_68 = arith.constant 0 : index
      %c0_69 = arith.constant 0 : index
      %128 = vector.load %arg6[%127, %c0_68, %c0_69] : memref<27x128x128xf32, #tpu.memory_space<vmem>>, vector<1x128x128xf32>
      %129 = vector.shape_cast %128 : vector<1x128x128xf32> to vector<128x128xf32>
      %cst_70 = arith.constant dense<0.000000e+00> : vector<32x128xf32>
      %130 = tpu.matmul %123, %129, %cst_70 {dimension_numbers = #tpu.dot_dimension_numbers<[1], [0], [0], [1], [0, 0, 1, 1], [], []>} : vector<32x128xf32>, vector<128x128xf32>, vector<32x128xf32> -> vector<32x128xf32>
      %131 = arith.addf %112, %130 : vector<32x128xf32>
      %c0_71 = arith.constant 0 : index
      %c2_72 = arith.constant 2 : index
      %c0_73 = arith.constant 0 : index
      %c0_74 = arith.constant 0 : index
      %132 = vector.load %arg5[%c0_71, %c2_72, %c0_73, %c0_74] : memref<1x6x10x128xf32, #tpu.memory_space<vmem>>, vector<1x4x8x128xf32>
      %133 = vector.shape_cast %132 : vector<1x4x8x128xf32> to vector<4x8x128xf32>
      %134 = vector.shape_cast %14 : vector<1x128xf32> to vector<1x1x128xf32>
      %135 = vector.broadcast %134 : vector<1x1x128xf32> to vector<4x8x128xf32>
      %136 = arith.subf %133, %135 : vector<4x8x128xf32>
      %137 = vector.shape_cast %16 : vector<1x128xf32> to vector<1x1x128xf32>
      %138 = vector.broadcast %137 : vector<1x1x128xf32> to vector<4x8x128xf32>
      %139 = arith.mulf %136, %138 : vector<4x8x128xf32>
      %cst_75 = arith.constant 0.000000e+00 : f32
      %140 = vector.broadcast %cst_75 : f32 to vector<4x8x128xf32>
      %141 = arith.maximumf %139, %140 : vector<4x8x128xf32>
      %142 = vector.shape_cast %141 : vector<4x8x128xf32> to vector<32x128xf32>
      %c9_i32_76 = arith.constant 9 : i32
      %143 = arith.muli %arg2, %c9_i32_76 : i32
      %c6_i32 = arith.constant 6 : i32
      %144 = arith.addi %143, %c6_i32 : i32
      %c0_i32_77 = arith.constant 0 : i32
      %145 = arith.addi %144, %c0_i32_77 : i32
      %146 = arith.index_cast %145 : i32 to index
      %c0_78 = arith.constant 0 : index
      %c0_79 = arith.constant 0 : index
      %147 = vector.load %arg6[%146, %c0_78, %c0_79] : memref<27x128x128xf32, #tpu.memory_space<vmem>>, vector<1x128x128xf32>
      %148 = vector.shape_cast %147 : vector<1x128x128xf32> to vector<128x128xf32>
      %cst_80 = arith.constant dense<0.000000e+00> : vector<32x128xf32>
      %149 = tpu.matmul %142, %148, %cst_80 {dimension_numbers = #tpu.dot_dimension_numbers<[1], [0], [0], [1], [0, 0, 1, 1], [], []>} : vector<32x128xf32>, vector<128x128xf32>, vector<32x128xf32> -> vector<32x128xf32>
      %150 = arith.addf %131, %149 : vector<32x128xf32>
      %c0_81 = arith.constant 0 : index
      %c2_82 = arith.constant 2 : index
      %c1_83 = arith.constant 1 : index
      %c0_84 = arith.constant 0 : index
      %151 = vector.load %arg5[%c0_81, %c2_82, %c1_83, %c0_84] : memref<1x6x10x128xf32, #tpu.memory_space<vmem>>, vector<1x4x8x128xf32>
      %152 = vector.shape_cast %151 : vector<1x4x8x128xf32> to vector<4x8x128xf32>
      %153 = vector.shape_cast %14 : vector<1x128xf32> to vector<1x1x128xf32>
      %154 = vector.broadcast %153 : vector<1x1x128xf32> to vector<4x8x128xf32>
      %155 = arith.subf %152, %154 : vector<4x8x128xf32>
      %156 = vector.shape_cast %16 : vector<1x128xf32> to vector<1x1x128xf32>
      %157 = vector.broadcast %156 : vector<1x1x128xf32> to vector<4x8x128xf32>
      %158 = arith.mulf %155, %157 : vector<4x8x128xf32>
      %cst_85 = arith.constant 0.000000e+00 : f32
      %159 = vector.broadcast %cst_85 : f32 to vector<4x8x128xf32>
      %160 = arith.maximumf %158, %159 : vector<4x8x128xf32>
      %161 = vector.shape_cast %160 : vector<4x8x128xf32> to vector<32x128xf32>
      %c9_i32_86 = arith.constant 9 : i32
      %162 = arith.muli %arg2, %c9_i32_86 : i32
      %c6_i32_87 = arith.constant 6 : i32
      %163 = arith.addi %162, %c6_i32_87 : i32
      %c1_i32_88 = arith.constant 1 : i32
      %164 = arith.addi %163, %c1_i32_88 : i32
      %165 = arith.index_cast %164 : i32 to index
      %c0_89 = arith.constant 0 : index
      %c0_90 = arith.constant 0 : index
      %166 = vector.load %arg6[%165, %c0_89, %c0_90] : memref<27x128x128xf32, #tpu.memory_space<vmem>>, vector<1x128x128xf32>
      %167 = vector.shape_cast %166 : vector<1x128x128xf32> to vector<128x128xf32>
      %cst_91 = arith.constant dense<0.000000e+00> : vector<32x128xf32>
      %168 = tpu.matmul %161, %167, %cst_91 {dimension_numbers = #tpu.dot_dimension_numbers<[1], [0], [0], [1], [0, 0, 1, 1], [], []>} : vector<32x128xf32>, vector<128x128xf32>, vector<32x128xf32> -> vector<32x128xf32>
      %169 = arith.addf %150, %168 : vector<32x128xf32>
      %c0_92 = arith.constant 0 : index
      %c2_93 = arith.constant 2 : index
      %c2_94 = arith.constant 2 : index
      %c0_95 = arith.constant 0 : index
      %170 = vector.load %arg5[%c0_92, %c2_93, %c2_94, %c0_95] : memref<1x6x10x128xf32, #tpu.memory_space<vmem>>, vector<1x4x8x128xf32>
      %171 = vector.shape_cast %170 : vector<1x4x8x128xf32> to vector<4x8x128xf32>
      %172 = vector.shape_cast %14 : vector<1x128xf32> to vector<1x1x128xf32>
      %173 = vector.broadcast %172 : vector<1x1x128xf32> to vector<4x8x128xf32>
      %174 = arith.subf %171, %173 : vector<4x8x128xf32>
      %175 = vector.shape_cast %16 : vector<1x128xf32> to vector<1x1x128xf32>
      %176 = vector.broadcast %175 : vector<1x1x128xf32> to vector<4x8x128xf32>
      %177 = arith.mulf %174, %176 : vector<4x8x128xf32>
      %cst_96 = arith.constant 0.000000e+00 : f32
      %178 = vector.broadcast %cst_96 : f32 to vector<4x8x128xf32>
      %179 = arith.maximumf %177, %178 : vector<4x8x128xf32>
      %180 = vector.shape_cast %179 : vector<4x8x128xf32> to vector<32x128xf32>
      %c9_i32_97 = arith.constant 9 : i32
      %181 = arith.muli %arg2, %c9_i32_97 : i32
      %c6_i32_98 = arith.constant 6 : i32
      %182 = arith.addi %181, %c6_i32_98 : i32
      %c2_i32_99 = arith.constant 2 : i32
      %183 = arith.addi %182, %c2_i32_99 : i32
      %184 = arith.index_cast %183 : i32 to index
      %c0_100 = arith.constant 0 : index
      %c0_101 = arith.constant 0 : index
      %185 = vector.load %arg6[%184, %c0_100, %c0_101] : memref<27x128x128xf32, #tpu.memory_space<vmem>>, vector<1x128x128xf32>
      %186 = vector.shape_cast %185 : vector<1x128x128xf32> to vector<128x128xf32>
      %cst_102 = arith.constant dense<0.000000e+00> : vector<32x128xf32>
      %187 = tpu.matmul %180, %186, %cst_102 {dimension_numbers = #tpu.dot_dimension_numbers<[1], [0], [0], [1], [0, 0, 1, 1], [], []>} : vector<32x128xf32>, vector<128x128xf32>, vector<32x128xf32> -> vector<32x128xf32>
      %188 = arith.addf %169, %187 : vector<32x128xf32>
      %c0_103 = arith.constant 0 : index
      %c0_104 = arith.constant 0 : index
      %189 = vector.load %arg11[%c0_103, %c0_104] : memref<32x128xf32, #tpu.memory_space<vmem>>, vector<32x128xf32>
      %190 = arith.addf %189, %188 : vector<32x128xf32>
      %c0_105 = arith.constant 0 : index
      %c0_106 = arith.constant 0 : index
      %191 = vector.load %arg11[%c0_105, %c0_106] : memref<32x128xf32, #tpu.memory_space<vmem>>, vector<32x128xf32>
      tpu.vector_store %arg11[%c0_105, %c0_106], %190 {strides = array<i32>} : memref<32x128xf32, #tpu.memory_space<vmem>>, vector<32x128xf32>,
    } else {
    }
    %c2_i32 = arith.constant 2 : i32
    %10 = arith.cmpi eq, %arg2, %c2_i32 : i32
    %11 = arith.extui %10 : i1 to i32
    %c0_i32_3 = arith.constant 0 : i32
    %12 = arith.cmpi ne, %11, %c0_i32_3 : i32
    scf.if %12 {
      %c0 = arith.constant 0 : index
      %c0_4 = arith.constant 0 : index
      %13 = vector.load %arg11[%c0, %c0_4] : memref<32x128xf32, #tpu.memory_space<vmem>>, vector<32x128xf32>
      %c0_5 = arith.constant 0 : index
      %c0_6 = arith.constant 0 : index
      %14 = vector.load %arg7[%c0_5, %c0_6] : memref<1x128xf32, #tpu.memory_space<vmem>>, vector<1x128xf32>
      %15 = vector.broadcast %14 : vector<1x128xf32> to vector<32x128xf32>
      %16 = arith.addf %13, %15 : vector<32x128xf32>
      %c0_7 = arith.constant 0 : index
      %c0_8 = arith.constant 0 : index
      %c0_9 = arith.constant 0 : index
      %c0_10 = arith.constant 0 : index
      %17 = vector.load %arg8[%c0_7, %c0_8, %c0_9, %c0_10] : memref<1x4x8x128xf32, #tpu.memory_space<vmem>>, vector<1x4x8x128xf32>
      %18 = vector.shape_cast %17 : vector<1x4x8x128xf32> to vector<4x8x128xf32>
      %19 = vector.shape_cast %18 : vector<4x8x128xf32> to vector<32x128xf32>
      %c0_11 = arith.constant 0 : index
      %c0_12 = arith.constant 0 : index
      %20 = vector.load %arg9[%c0_11, %c0_12] : memref<128x128xf32, #tpu.memory_space<vmem>>, vector<128x128xf32>
      %cst = arith.constant dense<0.000000e+00> : vector<32x128xf32>
      %21 = tpu.matmul %19, %20, %cst {dimension_numbers = #tpu.dot_dimension_numbers<[1], [0], [0], [1], [0, 0, 1, 1], [], []>} : vector<32x128xf32>, vector<128x128xf32>, vector<32x128xf32> -> vector<32x128xf32>
      %22 = arith.addf %16, %21 : vector<32x128xf32>
      %c0_13 = arith.constant 0 : index
      %c0_14 = arith.constant 0 : index
      %c0_15 = arith.constant 0 : index
      %23 = vector.load %arg10[%c0_13, %c0_14, %c0_15] : memref<1x32x128xf32, #tpu.memory_space<vmem>>, vector<1x32x128xf32>
      %24 = vector.shape_cast %23 : vector<1x32x128xf32> to vector<32x128xf32>
      %25 = vector.shape_cast %22 : vector<32x128xf32> to vector<1x32x128xf32>
      tpu.vector_store %arg10[%c0_13, %c0_14, %c0_15], %25 {strides = array<i32>} : memref<1x32x128xf32, #tpu.memory_space<vmem>>, vector<1x32x128xf32>,
    } else {
    }
    return
  }
  func.func @transform_0(%arg0: i32, %arg1: i32, %arg2: i32) -> (i32, i32, i32) {
    %c0_i32 = arith.constant 0 : i32
    %c0_i32_0 = arith.constant 0 : i32
    %c0_i32_1 = arith.constant 0 : i32
    return %arg0, %c0_i32, %c0_i32_0 : i32, i32, i32
  }
  func.func @transform_1(%arg0: i32, %arg1: i32, %arg2: i32) -> (i32, i32, i32) {
    %c0_i32 = arith.constant 0 : i32
    %c0_i32_0 = arith.constant 0 : i32
    %c0_i32_1 = arith.constant 0 : i32
    return %arg0, %c0_i32, %c0_i32_0 : i32, i32, i32
  }
  func.func @transform_2(%arg0: i32, %arg1: i32, %arg2: i32) -> (i32, i32, i32, i32) {
    %c6_i32 = arith.constant 6 : i32
    %0 = arith.muli %arg0, %c6_i32 : i32
    %c1_i32 = arith.constant 1 : i32
    %1 = arith.muli %arg1, %c1_i32 : i32
    %2 = arith.addi %0, %1 : i32
    %3 = arith.addi %2, %arg2 : i32
    %c0_i32 = arith.constant 0 : i32
    %c0_i32_0 = arith.constant 0 : i32
    %c0_i32_1 = arith.constant 0 : i32
    %c0_i32_2 = arith.constant 0 : i32
    return %3, %c0_i32, %c0_i32_0, %c0_i32_1 : i32, i32, i32, i32
  }
  func.func @transform_3(%arg0: i32, %arg1: i32, %arg2: i32) -> (i32, i32, i32) {
    %c0_i32 = arith.constant 0 : i32
    %c0_i32_0 = arith.constant 0 : i32
    %c0_i32_1 = arith.constant 0 : i32
    %c0_i32_2 = arith.constant 0 : i32
    return %c0_i32, %c0_i32_0, %c0_i32_1 : i32, i32, i32
  }
  func.func @transform_4(%arg0: i32, %arg1: i32, %arg2: i32) -> (i32, i32) {
    %c0_i32 = arith.constant 0 : i32
    %c0_i32_0 = arith.constant 0 : i32
    %c0_i32_1 = arith.constant 0 : i32
    return %c0_i32, %c0_i32_0 : i32, i32
  }
  func.func @transform_5(%arg0: i32, %arg1: i32, %arg2: i32) -> (i32, i32, i32, i32) {
    %c4_i32 = arith.constant 4 : i32
    %0 = arith.muli %arg0, %c4_i32 : i32
    %1 = arith.addi %0, %arg1 : i32
    %c0_i32 = arith.constant 0 : i32
    %c0_i32_0 = arith.constant 0 : i32
    %c0_i32_1 = arith.constant 0 : i32
    %c0_i32_2 = arith.constant 0 : i32
    return %1, %c0_i32, %c0_i32_0, %c0_i32_1 : i32, i32, i32, i32
  }
  func.func @transform_6(%arg0: i32, %arg1: i32, %arg2: i32) -> (i32, i32) {
    %c0_i32 = arith.constant 0 : i32
    %c0_i32_0 = arith.constant 0 : i32
    %c0_i32_1 = arith.constant 0 : i32
    return %c0_i32, %c0_i32_0 : i32, i32
  }
  func.func @transform_7(%arg0: i32, %arg1: i32, %arg2: i32) -> (i32, i32, i32) {
    %c4_i32 = arith.constant 4 : i32
    %0 = arith.muli %arg0, %c4_i32 : i32
    %1 = arith.addi %0, %arg1 : i32
    %c0_i32 = arith.constant 0 : i32
    %c0_i32_0 = arith.constant 0 : i32
    %c0_i32_1 = arith.constant 0 : i32
    return %1, %c0_i32, %c0_i32_0 : i32, i32, i32
  }
}

</mosaic_0001>

<llo_original>
// kernel: down_block_forward.4
$region0: #{down_block_forward.4}
  #allocation0 [shape = 'u32[]', space=smem, size = 0x4, offset = 0x4, fixed_abs, tag = 'smem constant byte address 0x4 - core index']
  #allocation1 [shape = 'u32[144,128]{1,0:T(1,128)}', space=vmem, size = 0x12000, scoped, tag = 'internal scratch']
  #allocation2 [shape = 'f32[1,128]{1,0:T(1,128)}', space=vmem, size = 0x200, scoped, tag = 'scratch operand']
  #allocation3 [shape = 'f32[1,128]{1,0:T(1,128)}', space=vmem, size = 0x200, scoped, tag = 'scratch operand']
  %s0 = inlined_call_operand.vmem [shape: f32[2,512,128], index: 0, kind: input, shape index: {}]
  %s1 = inlined_call_operand.vmem [shape: f32[2,1,128], index: 1, kind: output, shape index: {0}]
  %s2 = inlined_call_operand.vmem [shape: f32[2,1,128], index: 2, kind: output, shape index: {1}]
  %3 = xla_tuple %s1, %s2
  %s4 = sld [smem:[#allocation0]]
  $region53: #{down_block_forward.4} parent=0
    _
  %s6 = ssub.s32 1, %s4
  %s7 = scalar_select 0, %s6, %s4
  loop: start=0, step=1, limit=4
  $region2: #{down_block_forward.4} parent=0 // loop_pre_header
    _
  $region3: #{down_block_forward.4} parent=0 // loop_header
    %s9 = sphi 0, %s13
    %p10 = scmp.ge.s32.totalorder %s9, 4
    %s16 = sphi 0, %s28
    %s17 = sphi 0, %s24
    %s18 = sphi 0, %s16
    %s19 = sphi 0, %s17
    %s20 = sphi 0, %s18
    %s21 = sphi 0, %s19
    %s33 = sphi 0, %s35
    %s36 = sphi 0, %s33
    %s37 = sphi 0, %s36
    %s53 = sphi 0, %s37
    %s59 = sphi 0, %s61
    %s62 = sphi 0, %s59
    %s63 = sphi 0, %s62
    %s79 = sphi 0, %s63
    %s85 = sphi 0, %s87
    %s88 = sphi 0, %s85
    %s89 = sphi 0, %s88
    %s105 = sphi 0, %s89
  $region4: #{down_block_forward.4} parent=0 // loop_header_branch
    %12 = sbr.rel (%p10) target = $region8
  $region5: #{down_block_forward.4} parent=0 // loop_body
    %s14 = ssub.s32 %s9, 1
    %s15 = ssub.s32 %s9, 2
    %s22 = sadd.s32 1, %s17
    %p23 = scmp.ge.s32.totalorder %s22, 1
    %s24 = scalar_select %p23, 0, %s22
    %s25 = sadd.s32 1, %s16
    %s26 = scalar_select %p23, %s25, %s16
    %p27 = scmp.ge.s32.totalorder %s26, 2
    %s28 = scalar_select %p27, 0, %s26
    %s29 = ssub.s32 %s16, %s28
    %s30 = ssub.s32 %s17, %s24
    %s31 = sor.u32 %s29, %s30
    %p32 = scmp.eq.s32.totalorder %s31, 0
    %s34 = sadd.s32 %s33, 1
    %s35 = scalar_select %p32, %s33, %s34
    %p38 = pneg %p32
    %p39 = scmp.eq.s32.totalorder %s9, 1
    %p40 = por %p38, %p39
    %p41 = scmp.ne.s32.totalorder %s33, %s36
    %p42 = scmp.eq.s32.totalorder %s9, 0
    %p43 = por %p41, %p42
    %p44 = scmp.ne.s32.totalorder %s33, %s36
    %p45 = scmp.eq.s32.totalorder %s14, 1
    %p46 = por %p44, %p45
    %p47 = scmp.ne.s32.totalorder %s36, %s37
    %p48 = scmp.eq.s32.totalorder %s14, 0
    %p49 = por %p47, %p48
    %p50 = scmp.ne.s32.totalorder %s36, %s37
    %p51 = scmp.eq.s32.totalorder %s15, 1
    %p52 = por %p50, %p51
    %p54 = scmp.ne.s32.totalorder %s37, %s53
    %p55 = scmp.eq.s32.totalorder %s15, 0
    %p56 = por %p54, %p55
    %s57 = ssub.s32 %s16, %s28
    %p58 = scmp.eq.s32.totalorder %s57, 0
    %s60 = sadd.s32 %s59, 1
    %s61 = scalar_select %p58, %s59, %s60
    %p64 = pneg %p58
    %p65 = scmp.eq.s32.totalorder %s9, 1
    %p66 = por %p64, %p65
    %p67 = scmp.ne.s32.totalorder %s59, %s62
    %p68 = scmp.eq.s32.totalorder %s9, 0
    %p69 = por %p67, %p68
    %p70 = scmp.ne.s32.totalorder %s59, %s62
    %p71 = scmp.eq.s32.totalorder %s14, 1
    %p72 = por %p70, %p71
    %p73 = scmp.ne.s32.totalorder %s62, %s63
    %p74 = scmp.eq.s32.totalorder %s14, 0
    %p75 = por %p73, %p74
    %p76 = scmp.ne.s32.totalorder %s62, %s63
    %p77 = scmp.eq.s32.totalorder %s15, 1
    %p78 = por %p76, %p77
    %p80 = scmp.ne.s32.totalorder %s63, %s79
    %p81 = scmp.eq.s32.totalorder %s15, 0
    %p82 = por %p80, %p81
    %s83 = ssub.s32 %s16, %s28
    %p84 = scmp.eq.s32.totalorder %s83, 0
    %s86 = sadd.s32 %s85, 1
    %s87 = scalar_select %p84, %s85, %s86
    %p90 = pneg %p84
    %p91 = scmp.eq.s32.totalorder %s9, 1
    %p92 = por %p90, %p91
    %p93 = scmp.ne.s32.totalorder %s85, %s88
    %p94 = scmp.eq.s32.totalorder %s9, 0
    %p95 = por %p93, %p94
    %p96 = scmp.ne.s32.totalorder %s85, %s88
    %p97 = scmp.eq.s32.totalorder %s14, 1
    %p98 = por %p96, %p97
    %p99 = scmp.ne.s32.totalorder %s88, %s89
    %p100 = scmp.eq.s32.totalorder %s14, 0
    %p101 = por %p99, %p100
    %p102 = scmp.ne.s32.totalorder %s88, %s89
    %p103 = scmp.eq.s32.totalorder %s15, 1
    %p104 = por %p102, %p103
    %p106 = scmp.ne.s32.totalorder %s89, %s105
    %p107 = scmp.eq.s32.totalorder %s15, 0
    %p108 = por %p106, %p107
    %p109 = scmp.le.s32.totalorder 1, %s9
    %p110 = scmp.lt.s32.totalorder %s9, 3
    %p111 = pnand %p109, %p110
    %p112 = pneg %p111
    // Predicated region
    $region9: #{down_block_forward.4} parent=5 // pred_check
      _
    $region10: #{down_block_forward.4} parent=5 // pred_check_branch
      %114 = sbr.rel (%p111) target = $region12
    $region11: #{down_block_forward.4} parent=5 // pred_region
      %s115 = ssub.s32 %s9, 1
    $region12: #{down_block_forward.4} parent=5 // pred_fallthru
      _
    %p116 = scmp.lt.s32.totalorder %s9, 2
    // Predicated region
    $region13: #{down_block_forward.4} parent=5 // pred_check
      %p117 = pneg %p116
    $region14: #{down_block_forward.4} parent=5 // pred_check_branch
      %119 = sbr.rel (%p117) target = $region16
    $region15: #{down_block_forward.4} parent=5 // pred_region
      // Predicated region
      $region17: #{down_block_forward.4} parent=15 // pred_check
        %p120 = pneg %p43
      $region18: #{down_block_forward.4} parent=15 // pred_check_branch
        %122 = sbr.rel (%p120) target = $region20
      $region19: #{down_block_forward.4} parent=15 // pred_region
        %s123 = smul.u32 64, %s17
        %p124 = scmp.lt.s32.totalorder %s16, 1
        %s125 = scalar_select %p124, %s16, 1
        %p126 = scmp.lt.s32.totalorder %s123, 63
        %s127 = scalar_select %p126, %s123, 63
        %s128 = smul.addr %s125, 64
        %s129 = sadd.s32 %s127, %s128
        %s130 = smul.addr %s129, 8
        %s131 = scalar_lea.vmem %s0, %s130
        %s132 = smul.u32 64, %s17
      $region20: #{down_block_forward.4} parent=15 // pred_fallthru
        _
    $region16: #{down_block_forward.4} parent=5 // pred_fallthru
      _
    %p133 = scmp.le.s32.totalorder 1, %s9
    %p134 = scmp.lt.s32.totalorder %s9, 3
    %p135 = pnand %p133, %p134
    %p136 = pneg %p135
    // Predicated region
    $region21: #{down_block_forward.4} parent=5 // pred_check
      _
    $region22: #{down_block_forward.4} parent=5 // pred_check_branch
      %138 = sbr.rel (%p135) target = $region24
    $region23: #{down_block_forward.4} parent=5 // pred_region
      %s139 = ssub.s32 %s9, 1
      %s140 = smul.u32 64, %s19
      %p141 = scmp.lt.s32.totalorder %s18, 1
      %s142 = scalar_select %p141, %s18, 1
      %p143 = scmp.lt.s32.totalorder %s140, 63
      %s144 = scalar_select %p143, %s140, 63
      %s145 = smul.addr %s142, 64
      %s146 = sadd.s32 %s144, %s145
      %s147 = smul.addr %s146, 8
      %s148 = scalar_lea.vmem %s0, %s147
      %p149 = pneg %p49
      %p150 = pneg %p46
      %p151 = pneg %p75
      %p152 = pneg %p72
      %p153 = scmp.lt.s32.totalorder %s18, 1
      %s154 = scalar_select %p153, %s18, 1
      %s155 = scalar_lea.vmem %s1, %s154
      %p156 = pneg %p101
      %p157 = pneg %p98
      %p158 = scmp.lt.s32.totalorder %s18, 1
      %s159 = scalar_select %p158, %s18, 1
      %s160 = scalar_lea.vmem %s2, %s159
      %s161 = smul.u32 64, %s19
      %p162 = scmp.lt.s32.totalorder %s18, 1
      %s163 = scalar_select %p162, %s18, 1
      %p164 = scmp.lt.s32.totalorder %s161, 63
      %s165 = scalar_select %p164, %s161, 63
      %s166 = smul.addr %s163, 64
      %s167 = sadd.s32 %s165, %s166
      %s168 = smul.addr %s167, 8
      %s169 = scalar_lea.vmem %s0, %s168
      %s170 = smul.u32 64, %s19
      %p171 = scmp.lt.s32.totalorder %s18, 1
      %s172 = scalar_select %p171, %s18, 1
      %s173 = scalar_lea.vmem %s1, %s172
      %p174 = scmp.lt.s32.totalorder %s18, 1
      %s175 = scalar_select %p174, %s18, 1
      %s176 = scalar_lea.vmem %s2, %s175
      %p177 = scmp.eq.s32.totalorder %s19, 0
      // Predicated region
      $region25: #{down_block_forward.4} parent=23 // pred_check
        %p178 = pneg %p177
      $region26: #{down_block_forward.4} parent=23 // pred_check_branch
        %180 = sbr.rel (%p178) target = $region28
      $region27: #{down_block_forward.4} parent=23 // pred_region
        %181 = vst [vmem:[#allocation2] sm:$0x1] 0.0
        %182 = vst [vmem:[#allocation3] sm:$0x1] 0.0
      $region28: #{down_block_forward.4} parent=23 // pred_fallthru
        _
      %v183 = vld [vmem:[%s169] sm:$0xff]
      %v184 = vld [vmem:[%s169 + $0x8] sm:$0xff]
      %v185 = vld [vmem:[%s169 + $0x10] sm:$0xff]
      %v186 = vld [vmem:[%s169 + $0x18] sm:$0xff]
      %v187 = vld [vmem:[%s169 + $0x20] sm:$0xff]
      %v188 = vld [vmem:[%s169 + $0x28] sm:$0xff]
      %v189 = vld [vmem:[%s169 + $0x30] sm:$0xff]
      %v190 = vld [vmem:[%s169 + $0x38] sm:$0xff]
      %v191 = vld [vmem:[%s169 + $0x40] sm:$0xff]
      %v192 = vld [vmem:[%s169 + $0x48] sm:$0xff]
      %v193 = vld [vmem:[%s169 + $0x50] sm:$0xff]
      %v194 = vld [vmem:[%s169 + $0x58] sm:$0xff]
      %v195 = vld [vmem:[%s169 + $0x60] sm:$0xff]
      %v196 = vld [vmem:[%s169 + $0x68] sm:$0xff]
      %v197 = vld [vmem:[%s169 + $0x70] sm:$0xff]
      %v198 = vld [vmem:[%s169 + $0x78] sm:$0xff]
      %v199 = vld [vmem:[%s169 + $0x80] sm:$0xff]
      %v200 = vld [vmem:[%s169 + $0x88] sm:$0xff]
      %v201 = vld [vmem:[%s169 + $0x90] sm:$0xff]
      %v202 = vld [vmem:[%s169 + $0x98] sm:$0xff]
      %v203 = vld [vmem:[%s169 + $0xa0] sm:$0xff]
      %v204 = vld [vmem:[%s169 + $0xa8] sm:$0xff]
      %v205 = vld [vmem:[%s169 + $0xb0] sm:$0xff]
      %v206 = vld [vmem:[%s169 + $0xb8] sm:$0xff]
      %v207 = vld [vmem:[%s169 + $0xc0] sm:$0xff]
      %v208 = vld [vmem:[%s169 + $0xc8] sm:$0xff]
      %v209 = vld [vmem:[%s169 + $0xd0] sm:$0xff]
      %v210 = vld [vmem:[%s169 + $0xd8] sm:$0xff]
      %v211 = vld [vmem:[%s169 + $0xe0] sm:$0xff]
      %v212 = vld [vmem:[%s169 + $0xe8] sm:$0xff]
      %v213 = vld [vmem:[%s169 + $0xf0] sm:$0xff]
      %v214 = vld [vmem:[%s169 + $0xf8] sm:$0xff]
      %v215 = vld [vmem:[%s169 + $0x100] sm:$0xff]
      %v216 = vld [vmem:[%s169 + $0x108] sm:$0xff]
      %v217 = vld [vmem:[%s169 + $0x110] sm:$0xff]
      %v218 = vld [vmem:[%s169 + $0x118] sm:$0xff]
      %v219 = vld [vmem:[%s169 + $0x120] sm:$0xff]
      %v220 = vld [vmem:[%s169 + $0x128] sm:$0xff]
      %v221 = vld [vmem:[%s169 + $0x130] sm:$0xff]
      %v222 = vld [vmem:[%s169 + $0x138] sm:$0xff]
      %v223 = vld [vmem:[%s169 + $0x140] sm:$0xff]
      %v224 = vld [vmem:[%s169 + $0x148] sm:$0xff]
      %v225 = vld [vmem:[%s169 + $0x150] sm:$0xff]
      %v226 = vld [vmem:[%s169 + $0x158] sm:$0xff]
      %v227 = vld [vmem:[%s169 + $0x160] sm:$0xff]
      %v228 = vld [vmem:[%s169 + $0x168] sm:$0xff]
      %v229 = vld [vmem:[%s169 + $0x170] sm:$0xff]
      %v230 = vld [vmem:[%s169 + $0x178] sm:$0xff]
      %v231 = vld [vmem:[%s169 + $0x180] sm:$0xff]
      %v232 = vld [vmem:[%s169 + $0x188] sm:$0xff]
      %v233 = vld [vmem:[%s169 + $0x190] sm:$0xff]
      %v234 = vld [vmem:[%s169 + $0x198] sm:$0xff]
      %v235 = vld [vmem:[%s169 + $0x1a0] sm:$0xff]
      %v236 = vld [vmem:[%s169 + $0x1a8] sm:$0xff]
      %v237 = vld [vmem:[%s169 + $0x1b0] sm:$0xff]
      %v238 = vld [vmem:[%s169 + $0x1b8] sm:$0xff]
      %v239 = vld [vmem:[%s169 + $0x1c0] sm:$0xff]
      %v240 = vld [vmem:[%s169 + $0x1c8] sm:$0xff]
      %v241 = vld [vmem:[%s169 + $0x1d0] sm:$0xff]
      %v242 = vld [vmem:[%s169 + $0x1d8] sm:$0xff]
      %v243 = vld [vmem:[%s169 + $0x1e0] sm:$0xff]
      %v244 = vld [vmem:[%s169 + $0x1e8] sm:$0xff]
      %v245 = vld [vmem:[%s169 + $0x1f0] sm:$0xff]
      %v246 = vld [vmem:[%s169 + $0x1f8] sm:$0xff]
      %v247 = vld [vmem:[#allocation2] sm:$0x1]
      %v248 = vadd.f32 %v183, %v184
      %v249 = vadd.f32 %v248, %v185
      %v250 = vadd.f32 %v249, %v186
      %v251 = vadd.f32 %v250, %v187
      %v252 = vadd.f32 %v251, %v188
      %v253 = vadd.f32 %v252, %v189
      %v254 = vadd.f32 %v253, %v190
      %v255 = vadd.f32 %v254, %v191
      %v256 = vadd.f32 %v255, %v192
      %v257 = vadd.f32 %v256, %v193
      %v258 = vadd.f32 %v257, %v194
      %v259 = vadd.f32 %v258, %v195
      %v260 = vadd.f32 %v259, %v196
      %v261 = vadd.f32 %v260, %v197
      %v262 = vadd.f32 %v261, %v198
      %v263 = vadd.f32 %v262, %v199
      %v264 = vadd.f32 %v263, %v200
      %v265 = vadd.f32 %v264, %v201
      %v266 = vadd.f32 %v265, %v202
      %v267 = vadd.f32 %v266, %v203
      %v268 = vadd.f32 %v267, %v204
      %v269 = vadd.f32 %v268, %v205
      %v270 = vadd.f32 %v269, %v206
      %v271 = vadd.f32 %v270, %v207
      %v272 = vadd.f32 %v271, %v208
      %v273 = vadd.f32 %v272, %v209
      %v274 = vadd.f32 %v273, %v210
      %v275 = vadd.f32 %v274, %v211
      %v276 = vadd.f32 %v275, %v212
      %v277 = vadd.f32 %v276, %v213
      %v278 = vadd.f32 %v277, %v214
      %v279 = vadd.f32 %v278, %v215
      %v280 = vadd.f32 %v279, %v216
      %v281 = vadd.f32 %v280, %v217
      %v282 = vadd.f32 %v281, %v218
      %v283 = vadd.f32 %v282, %v219
      %v284 = vadd.f32 %v283, %v220
      %v285 = vadd.f32 %v284, %v221
      %v286 = vadd.f32 %v285, %v222
      %v287 = vadd.f32 %v286, %v223
      %v288 = vadd.f32 %v287, %v224
      %v289 = vadd.f32 %v288, %v225
      %v290 = vadd.f32 %v289, %v226
      %v291 = vadd.f32 %v290, %v227
      %v292 = vadd.f32 %v291, %v228
      %v293 = vadd.f32 %v292, %v229
      %v294 = vadd.f32 %v293, %v230
      %v295 = vadd.f32 %v294, %v231
      %v296 = vadd.f32 %v295, %v232
      %v297 = vadd.f32 %v296, %v233
      %v298 = vadd.f32 %v297, %v234
      %v299 = vadd.f32 %v298, %v235
      %v300 = vadd.f32 %v299, %v236
      %v301 = vadd.f32 %v300, %v237
      %v302 = vadd.f32 %v301, %v238
      %v303 = vadd.f32 %v302, %v239
      %v304 = vadd.f32 %v303, %v240
      %v305 = vadd.f32 %v304, %v241
      %v306 = vadd.f32 %v305, %v242
      %v307 = vadd.f32 %v306, %v243
      %v308 = vadd.f32 %v307, %v244
      %v309 = vadd.f32 %v308, %v245
      %v310 = vadd.f32 %v309, %v246
      %v311 = vrot.slane %v310, 4
      %v312 = vadd.f32 %v310, %v311
      %v313 = vrot.slane %v312, 2
      %v314 = vadd.f32 %v312, %v313
      %v315 = vrot.slane %v314, 1
      %v316 = vadd.f32 %v314, %v315
      %v317 = vadd.f32 %v247, %v316
      %318 = vst [vmem:[#allocation2] sm:$0x1] %v317
      %v319 = vld [vmem:[#allocation3] sm:$0x1]
      %v320 = vmul.f32 %v183, %v183
      %v321 = vmul.f32 %v184, %v184
      %v322 = vmul.f32 %v185, %v185
      %v323 = vmul.f32 %v186, %v186
      %v324 = vmul.f32 %v187, %v187
      %v325 = vmul.f32 %v188, %v188
      %v326 = vmul.f32 %v189, %v189
      %v327 = vmul.f32 %v190, %v190
      %v328 = vmul.f32 %v191, %v191
      %v329 = vmul.f32 %v192, %v192
      %v330 = vmul.f32 %v193, %v193
      %v331 = vmul.f32 %v194, %v194
      %v332 = vmul.f32 %v195, %v195
      %v333 = vmul.f32 %v196, %v196
      %v334 = vmul.f32 %v197, %v197
      %v335 = vmul.f32 %v198, %v198
      %v336 = vmul.f32 %v199, %v199
      %v337 = vmul.f32 %v200, %v200
      %v338 = vmul.f32 %v201, %v201
      %v339 = vmul.f32 %v202, %v202
      %v340 = vmul.f32 %v203, %v203
      %v341 = vmul.f32 %v204, %v204
      %v342 = vmul.f32 %v205, %v205
      %v343 = vmul.f32 %v206, %v206
      %v344 = vmul.f32 %v207, %v207
      %v345 = vmul.f32 %v208, %v208
      %v346 = vmul.f32 %v209, %v209
      %v347 = vmul.f32 %v210, %v210
      %v348 = vmul.f32 %v211, %v211
      %v349 = vmul.f32 %v212, %v212
      %v350 = vmul.f32 %v213, %v213
      %v351 = vmul.f32 %v214, %v214
      %v352 = vmul.f32 %v215, %v215
      %v353 = vmul.f32 %v216, %v216
      %v354 = vmul.f32 %v217, %v217
      %v355 = vmul.f32 %v218, %v218
      %v356 = vmul.f32 %v219, %v219
      %v357 = vmul.f32 %v220, %v220
      %v358 = vmul.f32 %v221, %v221
      %v359 = vmul.f32 %v222, %v222
      %v360 = vmul.f32 %v223, %v223
      %v361 = vmul.f32 %v224, %v224
      %v362 = vmul.f32 %v225, %v225
      %v363 = vmul.f32 %v226, %v226
      %v364 = vmul.f32 %v227, %v227
      %v365 = vmul.f32 %v228, %v228
      %v366 = vmul.f32 %v229, %v229
      %v367 = vmul.f32 %v230, %v230
      %v368 = vmul.f32 %v231, %v231
      %v369 = vmul.f32 %v232, %v232
      %v370 = vmul.f32 %v233, %v233
      %v371 = vmul.f32 %v234, %v234
      %v372 = vmul.f32 %v235, %v235
      %v373 = vmul.f32 %v236, %v236
      %v374 = vmul.f32 %v237, %v237
      %v375 = vmul.f32 %v238, %v238
      %v376 = vmul.f32 %v239, %v239
      %v377 = vmul.f32 %v240, %v240
      %v378 = vmul.f32 %v241, %v241
      %v379 = vmul.f32 %v242, %v242
      %v380 = vmul.f32 %v243, %v243
      %v381 = vmul.f32 %v244, %v244
      %v382 = vmul.f32 %v245, %v245
      %v383 = vmul.f32 %v246, %v246
      %v384 = vadd.f32 %v320, %v321
      %v385 = vadd.f32 %v384, %v322
      %v386 = vadd.f32 %v385, %v323
      %v387 = vadd.f32 %v386, %v324
      %v388 = vadd.f32 %v387, %v325
      %v389 = vadd.f32 %v388, %v326
      %v390 = vadd.f32 %v389, %v327
      %v391 = vadd.f32 %v390, %v328
      %v392 = vadd.f32 %v391, %v329
      %v393 = vadd.f32 %v392, %v330
      %v394 = vadd.f32 %v393, %v331
      %v395 = vadd.f32 %v394, %v332
      %v396 = vadd.f32 %v395, %v333
      %v397 = vadd.f32 %v396, %v334
      %v398 = vadd.f32 %v397, %v335
      %v399 = vadd.f32 %v398, %v336
      %v400 = vadd.f32 %v399, %v337
      %v401 = vadd.f32 %v400, %v338
      %v402 = vadd.f32 %v401, %v339
      %v403 = vadd.f32 %v402, %v340
      %v404 = vadd.f32 %v403, %v341
      %v405 = vadd.f32 %v404, %v342
      %v406 = vadd.f32 %v405, %v343
      %v407 = vadd.f32 %v406, %v344
      %v408 = vadd.f32 %v407, %v345
      %v409 = vadd.f32 %v408, %v346
      %v410 = vadd.f32 %v409, %v347
      %v411 = vadd.f32 %v410, %v348
      %v412 = vadd.f32 %v411, %v349
      %v413 = vadd.f32 %v412, %v350
      %v414 = vadd.f32 %v413, %v351
      %v415 = vadd.f32 %v414, %v352
      %v416 = vadd.f32 %v415, %v353
      %v417 = vadd.f32 %v416, %v354
      %v418 = vadd.f32 %v417, %v355
      %v419 = vadd.f32 %v418, %v356
      %v420 = vadd.f32 %v419, %v357
      %v421 = vadd.f32 %v420, %v358
      %v422 = vadd.f32 %v421, %v359
      %v423 = vadd.f32 %v422, %v360
      %v424 = vadd.f32 %v423, %v361
      %v425 = vadd.f32 %v424, %v362
      %v426 = vadd.f32 %v425, %v363
      %v427 = vadd.f32 %v426, %v364
      %v428 = vadd.f32 %v427, %v365
      %v429 = vadd.f32 %v428, %v366
      %v430 = vadd.f32 %v429, %v367
      %v431 = vadd.f32 %v430, %v368
      %v432 = vadd.f32 %v431, %v369
      %v433 = vadd.f32 %v432, %v370
      %v434 = vadd.f32 %v433, %v371
      %v435 = vadd.f32 %v434, %v372
      %v436 = vadd.f32 %v435, %v373
      %v437 = vadd.f32 %v436, %v374
      %v438 = vadd.f32 %v437, %v375
      %v439 = vadd.f32 %v438, %v376
      %v440 = vadd.f32 %v439, %v377
      %v441 = vadd.f32 %v440, %v378
      %v442 = vadd.f32 %v441, %v379
      %v443 = vadd.f32 %v442, %v380
      %v444 = vadd.f32 %v443, %v381
      %v445 = vadd.f32 %v444, %v382
      %v446 = vadd.f32 %v445, %v383
      %v447 = vrot.slane %v446, 4
      %v448 = vadd.f32 %v446, %v447
      %v449 = vrot.slane %v448, 2
      %v450 = vadd.f32 %v448, %v449
      %v451 = vrot.slane %v450, 1
      %v452 = vadd.f32 %v450, %v451
      %v453 = vadd.f32 %v319, %v452
      %454 = vst [vmem:[#allocation3] sm:$0x1] %v453
      // Predicated region
      $region29: #{down_block_forward.4} parent=23 // pred_check
        %p455 = pneg %p177
      $region30: #{down_block_forward.4} parent=23 // pred_check_branch
        %457 = sbr.rel (%p455) target = $region32
      $region31: #{down_block_forward.4} parent=23 // pred_region
        %v458 = vld [vmem:[#allocation2] sm:$0x1]
        %v459 = vmul.f32 %v458, 0.001953125
        %v460 = vld [vmem:[#allocation3] sm:$0x1]
        %v461 = vmul.f32 %v460, 0.001953125
        %v462 = vmul.f32 %v459, %v459
        %v463 = vsub.f32 %v461, %v462
        %464 = vst [vmem:[%s173] sm:$0x1] %v459
        %v465 = vadd.f32 %v463, 1e-05
        %v466 = vrsqrt.pop %v465
        %467 = vst [vmem:[%s176] sm:$0x1] %v466
      $region32: #{down_block_forward.4} parent=23 // pred_fallthru
        _
      %p468 = scmp.lt.s32.totalorder %s18, 1
      %s469 = scalar_select %p468, %s18, 1
      %s470 = scalar_lea.vmem %s1, %s469
      %p471 = scmp.lt.s32.totalorder %s18, 1
      %s472 = scalar_select %p471, %s18, 1
      %s473 = scalar_lea.vmem %s2, %s472
      // Predicated region
      $region33: #{down_block_forward.4} parent=23 // pred_check
        %p474 = pneg %p72
      $region34: #{down_block_forward.4} parent=23 // pred_check_branch
        %476 = sbr.rel (%p474) target = $region36
      $region35: #{down_block_forward.4} parent=23 // pred_region
        _
      $region36: #{down_block_forward.4} parent=23 // pred_fallthru
        _
      // Predicated region
      $region37: #{down_block_forward.4} parent=23 // pred_check
        %p477 = pneg %p98
      $region38: #{down_block_forward.4} parent=23 // pred_check_branch
        %479 = sbr.rel (%p477) target = $region40
      $region39: #{down_block_forward.4} parent=23 // pred_region
        _
      $region40: #{down_block_forward.4} parent=23 // pred_fallthru
        _
    $region24: #{down_block_forward.4} parent=5 // pred_fallthru
      _
    %p480 = scmp.le.s32.totalorder 2, %s9
    // Predicated region
    $region41: #{down_block_forward.4} parent=5 // pred_check
      %p481 = pneg %p480
    $region42: #{down_block_forward.4} parent=5 // pred_check_branch
      %483 = sbr.rel (%p481) target = $region44
    $region43: #{down_block_forward.4} parent=5 // pred_region
      %s484 = ssub.s32 %s9, 2
      // Predicated region
      $region45: #{down_block_forward.4} parent=43 // pred_check
        %p485 = pneg %p78
      $region46: #{down_block_forward.4} parent=43 // pred_check_branch
        %487 = sbr.rel (%p485) target = $region48
      $region47: #{down_block_forward.4} parent=43 // pred_region
        %p488 = scmp.lt.s32.totalorder %s20, 1
        %s489 = scalar_select %p488, %s20, 1
        %s490 = scalar_lea.vmem %s1, %s489
      $region48: #{down_block_forward.4} parent=43 // pred_fallthru
        _
      // Predicated region
      $region49: #{down_block_forward.4} parent=43 // pred_check
        %p491 = pneg %p104
      $region50: #{down_block_forward.4} parent=43 // pred_check_branch
        %493 = sbr.rel (%p491) target = $region52
      $region51: #{down_block_forward.4} parent=43 // pred_region
        %p494 = scmp.lt.s32.totalorder %s20, 1
        %s495 = scalar_select %p494, %s20, 1
        %s496 = scalar_lea.vmem %s2, %s495
      $region52: #{down_block_forward.4} parent=43 // pred_fallthru
        _
    $region44: #{down_block_forward.4} parent=5 // pred_fallthru
      _
  $region6: #{down_block_forward.4} parent=0 // loop_footer
    %s13 = sadd.s32 1, %s9
  $region7: #{down_block_forward.4} parent=0 // loop_footer_branch
    %8 = sbr.rel target = $region3
  $region8: #{down_block_forward.4} parent=0 // loop_exit
    _

// kernel: down_block_forward.6
$region0: #{down_block_forward.6}
  #allocation0 [shape = 'u32[]', space=smem, size = 0x4, offset = 0x4, fixed_abs, tag = 'smem constant byte address 0x4 - core index']
  #allocation1 [shape = 'u32[144,128]{1,0:T(1,128)}', space=vmem, size = 0x12000, scoped, tag = 'internal scratch']
  #allocation2 [shape = 'f32[1,128]{1,0:T(1,128)}', space=vmem, size = 0x200, scoped, tag = 'scratch operand']
  #allocation3 [shape = 'f32[1,128]{1,0:T(1,128)}', space=vmem, size = 0x200, scoped, tag = 'scratch operand']
  %s0 = inlined_call_operand.vmem [shape: f32[2,64,128], index: 0, kind: input, shape index: {}]
  %s1 = inlined_call_operand.vmem [shape: f32[2,1,128], index: 1, kind: output, shape index: {0}]
  %s2 = inlined_call_operand.vmem [shape: f32[2,1,128], index: 2, kind: output, shape index: {1}]
  %3 = xla_tuple %s1, %s2
  %s4 = sld [smem:[#allocation0]]
  $region53: #{down_block_forward.6} parent=0
    _
  %s6 = ssub.s32 1, %s4
  %s7 = scalar_select 0, %s6, %s4
  loop: start=0, step=1, limit=4
  $region2: #{down_block_forward.6} parent=0 // loop_pre_header
    _
  $region3: #{down_block_forward.6} parent=0 // loop_header
    %s9 = sphi 0, %s13
    %p10 = scmp.ge.s32.totalorder %s9, 4
    %s16 = sphi 0, %s28
    %s17 = sphi 0, %s24
    %s18 = sphi 0, %s16
    %s19 = sphi 0, %s17
    %s20 = sphi 0, %s18
    %s21 = sphi 0, %s19
    %s33 = sphi 0, %s35
    %s36 = sphi 0, %s33
    %s37 = sphi 0, %s36
    %s53 = sphi 0, %s37
    %s59 = sphi 0, %s61
    %s62 = sphi 0, %s59
    %s63 = sphi 0, %s62
    %s79 = sphi 0, %s63
    %s85 = sphi 0, %s87
    %s88 = sphi 0, %s85
    %s89 = sphi 0, %s88
    %s105 = sphi 0, %s89
  $region4: #{down_block_forward.6} parent=0 // loop_header_branch
    %12 = sbr.rel (%p10) target = $region8
  $region5: #{down_block_forward.6} parent=0 // loop_body
    %s14 = ssub.s32 %s9, 1
    %s15 = ssub.s32 %s9, 2
    %s22 = sadd.s32 1, %s17
    %p23 = scmp.ge.s32.totalorder %s22, 1
    %s24 = scalar_select %p23, 0, %s22
    %s25 = sadd.s32 1, %s16
    %s26 = scalar_select %p23, %s25, %s16
    %p27 = scmp.ge.s32.totalorder %s26, 2
    %s28 = scalar_select %p27, 0, %s26
    %s29 = ssub.s32 %s16, %s28
    %s30 = ssub.s32 %s17, %s24
    %s31 = sor.u32 %s29, %s30
    %p32 = scmp.eq.s32.totalorder %s31, 0
    %s34 = sadd.s32 %s33, 1
    %s35 = scalar_select %p32, %s33, %s34
    %p38 = pneg %p32
    %p39 = scmp.eq.s32.totalorder %s9, 1
    %p40 = por %p38, %p39
    %p41 = scmp.ne.s32.totalorder %s33, %s36
    %p42 = scmp.eq.s32.totalorder %s9, 0
    %p43 = por %p41, %p42
    %p44 = scmp.ne.s32.totalorder %s33, %s36
    %p45 = scmp.eq.s32.totalorder %s14, 1
    %p46 = por %p44, %p45
    %p47 = scmp.ne.s32.totalorder %s36, %s37
    %p48 = scmp.eq.s32.totalorder %s14, 0
    %p49 = por %p47, %p48
    %p50 = scmp.ne.s32.totalorder %s36, %s37
    %p51 = scmp.eq.s32.totalorder %s15, 1
    %p52 = por %p50, %p51
    %p54 = scmp.ne.s32.totalorder %s37, %s53
    %p55 = scmp.eq.s32.totalorder %s15, 0
    %p56 = por %p54, %p55
    %s57 = ssub.s32 %s16, %s28
    %p58 = scmp.eq.s32.totalorder %s57, 0
    %s60 = sadd.s32 %s59, 1
    %s61 = scalar_select %p58, %s59, %s60
    %p64 = pneg %p58
    %p65 = scmp.eq.s32.totalorder %s9, 1
    %p66 = por %p64, %p65
    %p67 = scmp.ne.s32.totalorder %s59, %s62
    %p68 = scmp.eq.s32.totalorder %s9, 0
    %p69 = por %p67, %p68
    %p70 = scmp.ne.s32.totalorder %s59, %s62
    %p71 = scmp.eq.s32.totalorder %s14, 1
    %p72 = por %p70, %p71
    %p73 = scmp.ne.s32.totalorder %s62, %s63
    %p74 = scmp.eq.s32.totalorder %s14, 0
    %p75 = por %p73, %p74
    %p76 = scmp.ne.s32.totalorder %s62, %s63
    %p77 = scmp.eq.s32.totalorder %s15, 1
    %p78 = por %p76, %p77
    %p80 = scmp.ne.s32.totalorder %s63, %s79
    %p81 = scmp.eq.s32.totalorder %s15, 0
    %p82 = por %p80, %p81
    %s83 = ssub.s32 %s16, %s28
    %p84 = scmp.eq.s32.totalorder %s83, 0
    %s86 = sadd.s32 %s85, 1
    %s87 = scalar_select %p84, %s85, %s86
    %p90 = pneg %p84
    %p91 = scmp.eq.s32.totalorder %s9, 1
    %p92 = por %p90, %p91
    %p93 = scmp.ne.s32.totalorder %s85, %s88
    %p94 = scmp.eq.s32.totalorder %s9, 0
    %p95 = por %p93, %p94
    %p96 = scmp.ne.s32.totalorder %s85, %s88
    %p97 = scmp.eq.s32.totalorder %s14, 1
    %p98 = por %p96, %p97
    %p99 = scmp.ne.s32.totalorder %s88, %s89
    %p100 = scmp.eq.s32.totalorder %s14, 0
    %p101 = por %p99, %p100
    %p102 = scmp.ne.s32.totalorder %s88, %s89
    %p103 = scmp.eq.s32.totalorder %s15, 1
    %p104 = por %p102, %p103
    %p106 = scmp.ne.s32.totalorder %s89, %s105
    %p107 = scmp.eq.s32.totalorder %s15, 0
    %p108 = por %p106, %p107
    %p109 = scmp.le.s32.totalorder 1, %s9
    %p110 = scmp.lt.s32.totalorder %s9, 3
    %p111 = pnand %p109, %p110
    %p112 = pneg %p111
    // Predicated region
    $region9: #{down_block_forward.6} parent=5 // pred_check
      _
    $region10: #{down_block_forward.6} parent=5 // pred_check_branch
      %114 = sbr.rel (%p111) target = $region12
    $region11: #{down_block_forward.6} parent=5 // pred_region
      %s115 = ssub.s32 %s9, 1
    $region12: #{down_block_forward.6} parent=5 // pred_fallthru
      _
    %p116 = scmp.lt.s32.totalorder %s9, 2
    // Predicated region
    $region13: #{down_block_forward.6} parent=5 // pred_check
      %p117 = pneg %p116
    $region14: #{down_block_forward.6} parent=5 // pred_check_branch
      %119 = sbr.rel (%p117) target = $region16
    $region15: #{down_block_forward.6} parent=5 // pred_region
      // Predicated region
      $region17: #{down_block_forward.6} parent=15 // pred_check
        %p120 = pneg %p43
      $region18: #{down_block_forward.6} parent=15 // pred_check_branch
        %122 = sbr.rel (%p120) target = $region20
      $region19: #{down_block_forward.6} parent=15 // pred_region
        %s123 = smul.u32 8, %s17
        %p124 = scmp.lt.s32.totalorder %s16, 1
        %s125 = scalar_select %p124, %s16, 1
        %p126 = scmp.lt.s32.totalorder %s123, 7
        %s127 = scalar_select %p126, %s123, 7
        %s128 = smul.addr %s125, 8
        %s129 = sadd.s32 %s127, %s128
        %s130 = smul.addr %s129, 8
        %s131 = scalar_lea.vmem %s0, %s130
        %s132 = smul.u32 8, %s17
      $region20: #{down_block_forward.6} parent=15 // pred_fallthru
        _
    $region16: #{down_block_forward.6} parent=5 // pred_fallthru
      _
    %p133 = scmp.le.s32.totalorder 1, %s9
    %p134 = scmp.lt.s32.totalorder %s9, 3
    %p135 = pnand %p133, %p134
    %p136 = pneg %p135
    // Predicated region
    $region21: #{down_block_forward.6} parent=5 // pred_check
      _
    $region22: #{down_block_forward.6} parent=5 // pred_check_branch
      %138 = sbr.rel (%p135) target = $region24
    $region23: #{down_block_forward.6} parent=5 // pred_region
      %s139 = ssub.s32 %s9, 1
      %s140 = smul.u32 8, %s19
      %p141 = scmp.lt.s32.totalorder %s18, 1
      %s142 = scalar_select %p141, %s18, 1
      %p143 = scmp.lt.s32.totalorder %s140, 7
      %s144 = scalar_select %p143, %s140, 7
      %s145 = smul.addr %s142, 8
      %s146 = sadd.s32 %s144, %s145
      %s147 = smul.addr %s146, 8
      %s148 = scalar_lea.vmem %s0, %s147
      %p149 = pneg %p49
      %p150 = pneg %p46
      %p151 = pneg %p75
      %p152 = pneg %p72
      %p153 = scmp.lt.s32.totalorder %s18, 1
      %s154 = scalar_select %p153, %s18, 1
      %s155 = scalar_lea.vmem %s1, %s154
      %p156 = pneg %p101
      %p157 = pneg %p98
      %p158 = scmp.lt.s32.totalorder %s18, 1
      %s159 = scalar_select %p158, %s18, 1
      %s160 = scalar_lea.vmem %s2, %s159
      %s161 = smul.u32 8, %s19
      %p162 = scmp.lt.s32.totalorder %s18, 1
      %s163 = scalar_select %p162, %s18, 1
      %p164 = scmp.lt.s32.totalorder %s161, 7
      %s165 = scalar_select %p164, %s161, 7
      %s166 = smul.addr %s163, 8
      %s167 = sadd.s32 %s165, %s166
      %s168 = smul.addr %s167, 8
      %s169 = scalar_lea.vmem %s0, %s168
      %s170 = smul.u32 8, %s19
      %p171 = scmp.lt.s32.totalorder %s18, 1
      %s172 = scalar_select %p171, %s18, 1
      %s173 = scalar_lea.vmem %s1, %s172
      %p174 = scmp.lt.s32.totalorder %s18, 1
      %s175 = scalar_select %p174, %s18, 1
      %s176 = scalar_lea.vmem %s2, %s175
      %p177 = scmp.eq.s32.totalorder %s19, 0
      // Predicated region
      $region25: #{down_block_forward.6} parent=23 // pred_check
        %p178 = pneg %p177
      $region26: #{down_block_forward.6} parent=23 // pred_check_branch
        %180 = sbr.rel (%p178) target = $region28
      $region27: #{down_block_forward.6} parent=23 // pred_region
        %181 = vst [vmem:[#allocation2] sm:$0x1] 0.0
        %182 = vst [vmem:[#allocation3] sm:$0x1] 0.0
      $region28: #{down_block_forward.6} parent=23 // pred_fallthru
        _
      %v183 = vld [vmem:[%s169] sm:$0xff]
      %v184 = vld [vmem:[%s169 + $0x8] sm:$0xff]
      %v185 = vld [vmem:[%s169 + $0x10] sm:$0xff]
      %v186 = vld [vmem:[%s169 + $0x18] sm:$0xff]
      %v187 = vld [vmem:[%s169 + $0x20] sm:$0xff]
      %v188 = vld [vmem:[%s169 + $0x28] sm:$0xff]
      %v189 = vld [vmem:[%s169 + $0x30] sm:$0xff]
      %v190 = vld [vmem:[%s169 + $0x38] sm:$0xff]
      %v191 = vld [vmem:[#allocation2] sm:$0x1]
      %v192 = vadd.f32 %v183, %v184
      %v193 = vadd.f32 %v192, %v185
      %v194 = vadd.f32 %v193, %v186
      %v195 = vadd.f32 %v194, %v187
      %v196 = vadd.f32 %v195, %v188
      %v197 = vadd.f32 %v196, %v189
      %v198 = vadd.f32 %v197, %v190
      %v199 = vrot.slane %v198, 4
      %v200 = vadd.f32 %v198, %v199
      %v201 = vrot.slane %v200, 2
      %v202 = vadd.f32 %v200, %v201
      %v203 = vrot.slane %v202, 1
      %v204 = vadd.f32 %v202, %v203
      %v205 = vadd.f32 %v191, %v204
      %206 = vst [vmem:[#allocation2] sm:$0x1] %v205
      %v207 = vld [vmem:[#allocation3] sm:$0x1]
      %v208 = vmul.f32 %v183, %v183
      %v209 = vmul.f32 %v184, %v184
      %v210 = vmul.f32 %v185, %v185
      %v211 = vmul.f32 %v186, %v186
      %v212 = vmul.f32 %v187, %v187
      %v213 = vmul.f32 %v188, %v188
      %v214 = vmul.f32 %v189, %v189
      %v215 = vmul.f32 %v190, %v190
      %v216 = vadd.f32 %v208, %v209
      %v217 = vadd.f32 %v216, %v210
      %v218 = vadd.f32 %v217, %v211
      %v219 = vadd.f32 %v218, %v212
      %v220 = vadd.f32 %v219, %v213
      %v221 = vadd.f32 %v220, %v214
      %v222 = vadd.f32 %v221, %v215
      %v223 = vrot.slane %v222, 4
      %v224 = vadd.f32 %v222, %v223
      %v225 = vrot.slane %v224, 2
      %v226 = vadd.f32 %v224, %v225
      %v227 = vrot.slane %v226, 1
      %v228 = vadd.f32 %v226, %v227
      %v229 = vadd.f32 %v207, %v228
      %230 = vst [vmem:[#allocation3] sm:$0x1] %v229
      // Predicated region
      $region29: #{down_block_forward.6} parent=23 // pred_check
        %p231 = pneg %p177
      $region30: #{down_block_forward.6} parent=23 // pred_check_branch
        %233 = sbr.rel (%p231) target = $region32
      $region31: #{down_block_forward.6} parent=23 // pred_region
        %v234 = vld [vmem:[#allocation2] sm:$0x1]
        %v235 = vmul.f32 %v234, 0.015625
        %v236 = vld [vmem:[#allocation3] sm:$0x1]
        %v237 = vmul.f32 %v236, 0.015625
        %v238 = vmul.f32 %v235, %v235
        %v239 = vsub.f32 %v237, %v238
        %240 = vst [vmem:[%s173] sm:$0x1] %v235
        %v241 = vadd.f32 %v239, 1e-05
        %v242 = vrsqrt.pop %v241
        %243 = vst [vmem:[%s176] sm:$0x1] %v242
      $region32: #{down_block_forward.6} parent=23 // pred_fallthru
        _
      %p244 = scmp.lt.s32.totalorder %s18, 1
      %s245 = scalar_select %p244, %s18, 1
      %s246 = scalar_lea.vmem %s1, %s245
      %p247 = scmp.lt.s32.totalorder %s18, 1
      %s248 = scalar_select %p247, %s18, 1
      %s249 = scalar_lea.vmem %s2, %s248
      // Predicated region
      $region33: #{down_block_forward.6} parent=23 // pred_check
        %p250 = pneg %p72
      $region34: #{down_block_forward.6} parent=23 // pred_check_branch
        %252 = sbr.rel (%p250) target = $region36
      $region35: #{down_block_forward.6} parent=23 // pred_region
        _
      $region36: #{down_block_forward.6} parent=23 // pred_fallthru
        _
      // Predicated region
      $region37: #{down_block_forward.6} parent=23 // pred_check
        %p253 = pneg %p98
      $region38: #{down_block_forward.6} parent=23 // pred_check_branch
        %255 = sbr.rel (%p253) target = $region40
      $region39: #{down_block_forward.6} parent=23 // pred_region
        _
      $region40: #{down_block_forward.6} parent=23 // pred_fallthru
        _
    $region24: #{down_block_forward.6} parent=5 // pred_fallthru
      _
    %p256 = scmp.le.s32.totalorder 2, %s9
    // Predicated region
    $region41: #{down_block_forward.6} parent=5 // pred_check
      %p257 = pneg %p256
    $region42: #{down_block_forward.6} parent=5 // pred_check_branch
      %259 = sbr.rel (%p257) target = $region44
    $region43: #{down_block_forward.6} parent=5 // pred_region
      %s260 = ssub.s32 %s9, 2
      // Predicated region
      $region45: #{down_block_forward.6} parent=43 // pred_check
        %p261 = pneg %p78
      $region46: #{down_block_forward.6} parent=43 // pred_check_branch
        %263 = sbr.rel (%p261) target = $region48
      $region47: #{down_block_forward.6} parent=43 // pred_region
        %p264 = scmp.lt.s32.totalorder %s20, 1
        %s265 = scalar_select %p264, %s20, 1
        %s266 = scalar_lea.vmem %s1, %s265
      $region48: #{down_block_forward.6} parent=43 // pred_fallthru
        _
      // Predicated region
      $region49: #{down_block_forward.6} parent=43 // pred_check
        %p267 = pneg %p104
      $region50: #{down_block_forward.6} parent=43 // pred_check_branch
        %269 = sbr.rel (%p267) target = $region52
      $region51: #{down_block_forward.6} parent=43 // pred_region
        %p270 = scmp.lt.s32.totalorder %s20, 1
        %s271 = scalar_select %p270, %s20, 1
        %s272 = scalar_lea.vmem %s2, %s271
      $region52: #{down_block_forward.6} parent=43 // pred_fallthru
        _
    $region44: #{down_block_forward.6} parent=5 // pred_fallthru
      _
  $region6: #{down_block_forward.6} parent=0 // loop_footer
    %s13 = sadd.s32 1, %s9
  $region7: #{down_block_forward.6} parent=0 // loop_footer_branch
    %8 = sbr.rel target = $region3
  $region8: #{down_block_forward.6} parent=0 // loop_exit
    _

// kernel: down_block_forward.5
$region0: #{down_block_forward.5}
  #allocation0 [shape = 'u32[]', space=smem, size = 0x4, offset = 0x4, fixed_abs, tag = 'smem constant byte address 0x4 - core index']
  #allocation1 [shape = 'u32[144,128]{1,0:T(1,128)}', space=vmem, size = 0x12000, scoped, tag = 'internal scratch']
  #allocation2 [shape = 'f32[32,128]{1,0:T(8,128)}', space=vmem, size = 0x4000, scoped, tag = 'scratch operand']
  %s0 = inlined_call_operand.vmem [shape: f32[2,1,128], index: 0, kind: input, shape index: {}]
  %s1 = inlined_call_operand.vmem [shape: f32[2,1,128], index: 1, kind: input, shape index: {}]
  %s2 = inlined_call_operand.vmem [shape: f32[20,10,18,128], index: 2, kind: input, shape index: {}]
  %s3 = inlined_call_operand.vmem [shape: f32[27,128,128], index: 3, kind: input, shape index: {}]
  %s4 = inlined_call_operand.vmem [shape: f32[1,128], index: 4, kind: input, shape index: {}]
  %s5 = inlined_call_operand.vmem [shape: f32[8,32,128], index: 5, kind: output, shape index: {}]
  %s6 = sld [smem:[#allocation0]]
  $region65: #{down_block_forward.5} parent=0
    _
  %s8 = ssub.s32 1, %s6
  %s9 = scalar_select 0, %s8, %s6
  loop: start=0, step=1, limit=26
  $region2: #{down_block_forward.5} parent=0 // loop_pre_header
    _
  $region3: #{down_block_forward.5} parent=0 // loop_header
    %s11 = sphi 0, %s15
    %p12 = scmp.ge.s32.totalorder %s11, 26
    %s18 = sphi 0, %s37
    %s19 = sphi 0, %s33
    %s20 = sphi 0, %s29
    %s21 = sphi 0, %s18
    %s22 = sphi 0, %s19
    %s23 = sphi 0, %s20
    %s24 = sphi 0, %s21
    %s25 = sphi 0, %s22
    %s26 = sphi 0, %s23
    %s40 = sphi 0, %s42
    %s43 = sphi 0, %s40
    %s44 = sphi 0, %s43
    %s60 = sphi 0, %s44
    %s66 = sphi 0, %s68
    %s69 = sphi 0, %s66
    %s70 = sphi 0, %s69
    %s86 = sphi 0, %s70
    %s100 = sphi 0, %s102
    %s103 = sphi 0, %s100
    %s104 = sphi 0, %s103
    %s120 = sphi 0, %s104
    %s124 = sphi 0, %s124
    %s126 = sphi 0, %s124
    %s127 = sphi 0, %s126
    %s141 = sphi 0, %s127
    %s145 = sphi 0, %s145
    %s147 = sphi 0, %s145
    %s148 = sphi 0, %s147
    %s162 = sphi 0, %s148
    %s172 = sphi 0, %s174
    %s175 = sphi 0, %s172
    %s176 = sphi 0, %s175
    %s192 = sphi 0, %s176
  $region4: #{down_block_forward.5} parent=0 // loop_header_branch
    %14 = sbr.rel (%p12) target = $region8
  $region5: #{down_block_forward.5} parent=0 // loop_body
    %s16 = ssub.s32 %s11, 1
    %s17 = ssub.s32 %s11, 2
    %s27 = sadd.s32 1, %s20
    %p28 = scmp.ge.s32.totalorder %s27, 3
    %s29 = scalar_select %p28, 0, %s27
    %s30 = sadd.s32 1, %s19
    %s31 = scalar_select %p28, %s30, %s19
    %p32 = scmp.ge.s32.totalorder %s31, 4
    %s33 = scalar_select %p32, 0, %s31
    %s34 = sadd.s32 1, %s18
    %s35 = scalar_select %p32, %s34, %s18
    %p36 = scmp.ge.s32.totalorder %s35, 2
    %s37 = scalar_select %p36, 0, %s35
    %s38 = ssub.s32 %s18, %s37
    %p39 = scmp.eq.s32.totalorder %s38, 0
    %s41 = sadd.s32 %s40, 1
    %s42 = scalar_select %p39, %s40, %s41
    %p45 = pneg %p39
    %p46 = scmp.eq.s32.totalorder %s11, 23
    %p47 = por %p45, %p46
    %p48 = scmp.ne.s32.totalorder %s40, %s43
    %p49 = scmp.eq.s32.totalorder %s11, 0
    %p50 = por %p48, %p49
    %p51 = scmp.ne.s32.totalorder %s40, %s43
    %p52 = scmp.eq.s32.totalorder %s16, 23
    %p53 = por %p51, %p52
    %p54 = scmp.ne.s32.totalorder %s43, %s44
    %p55 = scmp.eq.s32.totalorder %s16, 0
    %p56 = por %p54, %p55
    %p57 = scmp.ne.s32.totalorder %s43, %s44
    %p58 = scmp.eq.s32.totalorder %s17, 23
    %p59 = por %p57, %p58
    %p61 = scmp.ne.s32.totalorder %s44, %s60
    %p62 = scmp.eq.s32.totalorder %s17, 0
    %p63 = por %p61, %p62
    %s64 = ssub.s32 %s18, %s37
    %p65 = scmp.eq.s32.totalorder %s64, 0
    %s67 = sadd.s32 %s66, 1
    %s68 = scalar_select %p65, %s66, %s67
    %p71 = pneg %p65
    %p72 = scmp.eq.s32.totalorder %s11, 23
    %p73 = por %p71, %p72
    %p74 = scmp.ne.s32.totalorder %s66, %s69
    %p75 = scmp.eq.s32.totalorder %s11, 0
    %p76 = por %p74, %p75
    %p77 = scmp.ne.s32.totalorder %s66, %s69
    %p78 = scmp.eq.s32.totalorder %s16, 23
    %p79 = por %p77, %p78
    %p80 = scmp.ne.s32.totalorder %s69, %s70
    %p81 = scmp.eq.s32.totalorder %s16, 0
    %p82 = por %p80, %p81
    %p83 = scmp.ne.s32.totalorder %s69, %s70
    %p84 = scmp.eq.s32.totalorder %s17, 23
    %p85 = por %p83, %p84
    %p87 = scmp.ne.s32.totalorder %s70, %s86
    %p88 = scmp.eq.s32.totalorder %s17, 0
    %p89 = por %p87, %p88
    %s90 = smul.u32 %s18, 10
    %s91 = smul.u32 %s19, 2
    %s92 = sadd.s32 %s90, %s91
    %s93 = sadd.s32 %s92, %s20
    %s94 = smul.u32 %s37, 10
    %s95 = smul.u32 %s33, 2
    %s96 = sadd.s32 %s94, %s95
    %s97 = sadd.s32 %s96, %s29
    %s98 = ssub.s32 %s93, %s97
    %p99 = scmp.eq.s32.totalorder %s98, 0
    %s101 = sadd.s32 %s100, 1
    %s102 = scalar_select %p99, %s100, %s101
    %p105 = pneg %p99
    %p106 = scmp.eq.s32.totalorder %s11, 23
    %p107 = por %p105, %p106
    %p108 = scmp.ne.s32.totalorder %s100, %s103
    %p109 = scmp.eq.s32.totalorder %s11, 0
    %p110 = por %p108, %p109
    %p111 = scmp.ne.s32.totalorder %s100, %s103
    %p112 = scmp.eq.s32.totalorder %s16, 23
    %p113 = por %p111, %p112
    %p114 = scmp.ne.s32.totalorder %s103, %s104
    %p115 = scmp.eq.s32.totalorder %s16, 0
    %p116 = por %p114, %p115
    %p117 = scmp.ne.s32.totalorder %s103, %s104
    %p118 = scmp.eq.s32.totalorder %s17, 23
    %p119 = por %p117, %p118
    %p121 = scmp.ne.s32.totalorder %s104, %s120
    %p122 = scmp.eq.s32.totalorder %s17, 0
    %p123 = por %p121, %p122
    %s125 = sadd.s32 %s124, 1
    %p128 = scmp.eq.s32.totalorder %s11, 23
    %p129 = scmp.ne.s32.totalorder %s124, %s126
    %p130 = scmp.eq.s32.totalorder %s11, 0
    %p131 = por %p129, %p130
    %p132 = scmp.ne.s32.totalorder %s124, %s126
    %p133 = scmp.eq.s32.totalorder %s16, 23
    %p134 = por %p132, %p133
    %p135 = scmp.ne.s32.totalorder %s126, %s127
    %p136 = scmp.eq.s32.totalorder %s16, 0
    %p137 = por %p135, %p136
    %p138 = scmp.ne.s32.totalorder %s126, %s127
    %p139 = scmp.eq.s32.totalorder %s17, 23
    %p140 = por %p138, %p139
    %p142 = scmp.ne.s32.totalorder %s127, %s141
    %p143 = scmp.eq.s32.totalorder %s17, 0
    %p144 = por %p142, %p143
    %s146 = sadd.s32 %s145, 1
    %p149 = scmp.eq.s32.totalorder %s11, 23
    %p150 = scmp.ne.s32.totalorder %s145, %s147
    %p151 = scmp.eq.s32.totalorder %s11, 0
    %p152 = por %p150, %p151
    %p153 = scmp.ne.s32.totalorder %s145, %s147
    %p154 = scmp.eq.s32.totalorder %s16, 23
    %p155 = por %p153, %p154
    %p156 = scmp.ne.s32.totalorder %s147, %s148
    %p157 = scmp.eq.s32.totalorder %s16, 0
    %p158 = por %p156, %p157
    %p159 = scmp.ne.s32.totalorder %s147, %s148
    %p160 = scmp.eq.s32.totalorder %s17, 23
    %p161 = por %p159, %p160
    %p163 = scmp.ne.s32.totalorder %s148, %s162
    %p164 = scmp.eq.s32.totalorder %s17, 0
    %p165 = por %p163, %p164
    %s166 = smul.u32 %s18, 4
    %s167 = sadd.s32 %s166, %s19
    %s168 = smul.u32 %s37, 4
    %s169 = sadd.s32 %s168, %s33
    %s170 = ssub.s32 %s167, %s169
    %p171 = scmp.eq.s32.totalorder %s170, 0
    %s173 = sadd.s32 %s172, 1
    %s174 = scalar_select %p171, %s172, %s173
    %p177 = pneg %p171
    %p178 = scmp.eq.s32.totalorder %s11, 23
    %p179 = por %p177, %p178
    %p180 = scmp.ne.s32.totalorder %s172, %s175
    %p181 = scmp.eq.s32.totalorder %s11, 0
    %p182 = por %p180, %p181
    %p183 = scmp.ne.s32.totalorder %s172, %s175
    %p184 = scmp.eq.s32.totalorder %s16, 23
    %p185 = por %p183, %p184
    %p186 = scmp.ne.s32.totalorder %s175, %s176
    %p187 = scmp.eq.s32.totalorder %s16, 0
    %p188 = por %p186, %p187
    %p189 = scmp.ne.s32.totalorder %s175, %s176
    %p190 = scmp.eq.s32.totalorder %s17, 23
    %p191 = por %p189, %p190
    %p193 = scmp.ne.s32.totalorder %s176, %s192
    %p194 = scmp.eq.s32.totalorder %s17, 0
    %p195 = por %p193, %p194
    %p196 = scmp.le.s32.totalorder 1, %s11
    %p197 = scmp.lt.s32.totalorder %s11, 25
    %p198 = pnand %p196, %p197
    %p199 = pneg %p198
    // Predicated region
    $region9: #{down_block_forward.5} parent=5 // pred_check
      _
    $region10: #{down_block_forward.5} parent=5 // pred_check_branch
      %201 = sbr.rel (%p198) target = $region12
    $region11: #{down_block_forward.5} parent=5 // pred_region
      %s202 = ssub.s32 %s11, 1
      // Predicated region
      $region13: #{down_block_forward.5} parent=11 // pred_check
        %p203 = pneg %p137
      $region14: #{down_block_forward.5} parent=11 // pred_check_branch
        %205 = sbr.rel (%p203) target = $region16
      $region15: #{down_block_forward.5} parent=11 // pred_region
        _
      $region16: #{down_block_forward.5} parent=11 // pred_fallthru
        _
      // Predicated region
      $region17: #{down_block_forward.5} parent=11 // pred_check
        %p206 = pneg %p158
      $region18: #{down_block_forward.5} parent=11 // pred_check_branch
        %208 = sbr.rel (%p206) target = $region20
      $region19: #{down_block_forward.5} parent=11 // pred_region
        _
      $region20: #{down_block_forward.5} parent=11 // pred_fallthru
        _
    $region12: #{down_block_forward.5} parent=5 // pred_fallthru
      _
    %p209 = scmp.lt.s32.totalorder %s11, 24
    // Predicated region
    $region21: #{down_block_forward.5} parent=5 // pred_check
      %p210 = pneg %p209
    $region22: #{down_block_forward.5} parent=5 // pred_check_branch
      %212 = sbr.rel (%p210) target = $region24
    $region23: #{down_block_forward.5} parent=5 // pred_region
      // Predicated region
      $region25: #{down_block_forward.5} parent=23 // pred_check
        %p213 = pneg %p50
      $region26: #{down_block_forward.5} parent=23 // pred_check_branch
        %215 = sbr.rel (%p213) target = $region28
      $region27: #{down_block_forward.5} parent=23 // pred_region
        %p216 = scmp.lt.s32.totalorder %s18, 1
        %s217 = scalar_select %p216, %s18, 1
        %s218 = scalar_lea.vmem %s0, %s217
      $region28: #{down_block_forward.5} parent=23 // pred_fallthru
        _
      // Predicated region
      $region29: #{down_block_forward.5} parent=23 // pred_check
        %p219 = pneg %p76
      $region30: #{down_block_forward.5} parent=23 // pred_check_branch
        %221 = sbr.rel (%p219) target = $region32
      $region31: #{down_block_forward.5} parent=23 // pred_region
        %p222 = scmp.lt.s32.totalorder %s18, 1
        %s223 = scalar_select %p222, %s18, 1
        %s224 = scalar_lea.vmem %s1, %s223
      $region32: #{down_block_forward.5} parent=23 // pred_fallthru
        _
      // Predicated region
      $region33: #{down_block_forward.5} parent=23 // pred_check
        %p225 = pneg %p110
      $region34: #{down_block_forward.5} parent=23 // pred_check_branch
        %227 = sbr.rel (%p225) target = $region36
      $region35: #{down_block_forward.5} parent=23 // pred_region
        %s228 = smul.u32 %s18, 10
        %s229 = smul.u32 %s19, 2
        %s230 = sadd.s32 %s228, %s229
        %s231 = sadd.s32 %s230, %s20
        %p232 = scmp.lt.s32.totalorder %s231, 19
        %s233 = scalar_select %p232, %s231, 19
        %s234 = smul.addr %s233, 30
        %s235 = smul.addr %s234, 8
        %s236 = scalar_lea.vmem %s2, %s235
        %s237 = smul.u32 %s18, 10
        %s238 = smul.u32 %s19, 2
        %s239 = sadd.s32 %s237, %s238
        %s240 = sadd.s32 %s239, %s20
      $region36: #{down_block_forward.5} parent=23 // pred_fallthru
        _
    $region24: #{down_block_forward.5} parent=5 // pred_fallthru
      _
    %p241 = scmp.le.s32.totalorder 1, %s11
    %p242 = scmp.lt.s32.totalorder %s11, 25
    %p243 = pnand %p241, %p242
    %p244 = pneg %p243
    // Predicated region
    $region37: #{down_block_forward.5} parent=5 // pred_check
      _
    $region38: #{down_block_forward.5} parent=5 // pred_check_branch
      %246 = sbr.rel (%p243) target = $region40
    $region39: #{down_block_forward.5} parent=5 // pred_region
      %s247 = ssub.s32 %s11, 1
      %p248 = scmp.lt.s32.totalorder %s21, 1
      %s249 = scalar_select %p248, %s21, 1
      %s250 = scalar_lea.vmem %s0, %s249
      %p251 = pneg %p56
      %p252 = pneg %p53
      %p253 = scmp.lt.s32.totalorder %s21, 1
      %s254 = scalar_select %p253, %s21, 1
      %s255 = scalar_lea.vmem %s1, %s254
      %p256 = pneg %p82
      %p257 = pneg %p79
      %s258 = smul.u32 %s21, 10
      %s259 = smul.u32 %s22, 2
      %s260 = sadd.s32 %s258, %s259
      %s261 = sadd.s32 %s260, %s23
      %p262 = scmp.lt.s32.totalorder %s261, 19
      %s263 = scalar_select %p262, %s261, 19
      %s264 = smul.addr %s263, 30
      %s265 = smul.addr %s264, 8
      %s266 = scalar_lea.vmem %s2, %s265
      %p267 = pneg %p116
      %p268 = pneg %p113
      %p269 = pneg %p137
      %p270 = pneg %p134
      %p271 = pneg %p158
      %p272 = pneg %p155
      %p273 = pneg %p188
      %p274 = pneg %p185
      %s275 = smul.u32 %s21, 4
      %s276 = sadd.s32 %s275, %s22
      %p277 = scmp.lt.s32.totalorder %s276, 7
      %s278 = scalar_select %p277, %s276, 7
      %s279 = smul.addr %s278, 4
      %s280 = smul.addr %s279, 8
      %s281 = scalar_lea.vmem %s5, %s280
      %p282 = scmp.lt.s32.totalorder %s21, 1
      %s283 = scalar_select %p282, %s21, 1
      %s284 = scalar_lea.vmem %s0, %s283
      %p285 = scmp.lt.s32.totalorder %s21, 1
      %s286 = scalar_select %p285, %s21, 1
      %s287 = scalar_lea.vmem %s1, %s286
      %s288 = smul.u32 %s21, 10
      %s289 = smul.u32 %s22, 2
      %s290 = sadd.s32 %s288, %s289
      %s291 = sadd.s32 %s290, %s23
      %p292 = scmp.lt.s32.totalorder %s291, 19
      %s293 = scalar_select %p292, %s291, 19
      %s294 = smul.addr %s293, 30
      %s295 = smul.addr %s294, 8
      %s296 = scalar_lea.vmem %s2, %s295
      %s297 = smul.u32 %s21, 10
      %s298 = smul.u32 %s22, 2
      %s299 = sadd.s32 %s297, %s298
      %s300 = sadd.s32 %s299, %s23
      %s301 = smul.u32 %s21, 4
      %s302 = sadd.s32 %s301, %s22
      %p303 = scmp.lt.s32.totalorder %s302, 7
      %s304 = scalar_select %p303, %s302, 7
      %s305 = smul.addr %s304, 4
      %s306 = smul.addr %s305, 8
      %s307 = scalar_lea.vmem %s5, %s306
      %s308 = smul.u32 %s21, 4
      %s309 = sadd.s32 %s308, %s22
      %p310 = scmp.eq.s32.totalorder %s23, 0
      // Predicated region
      $region41: #{down_block_forward.5} parent=39 // pred_check
        %p311 = pneg %p310
      $region42: #{down_block_forward.5} parent=39 // pred_check_branch
        %313 = sbr.rel (%p311) target = $region44
      $region43: #{down_block_forward.5} parent=39 // pred_region
        %314 = vst [vmem:[#allocation2] sm:$0xff] 0.0
        %315 = vst [vmem:[#allocation2 + $0x8] sm:$0xff] 0.0
        %316 = vst [vmem:[#allocation2 + $0x10] sm:$0xff] 0.0
        %317 = vst [vmem:[#allocation2 + $0x18] sm:$0xff] 0.0
      $region44: #{down_block_forward.5} parent=39 // pred_fallthru
        _
      %s318 = smul.u32 %s22, 2
      %s319 = sadd.s32 %s318, %s23
      %p320 = scmp.gt.s32.totalorder %s319, 0
      %p321 = scmp.lt.s32.totalorder %s319, 9
      %p322 = pnand %p320, %p321
      %p323 = pneg %p322
      // Predicated region
      $region45: #{down_block_forward.5} parent=39 // pred_check
        _
      $region46: #{down_block_forward.5} parent=39 // pred_check_branch
        %325 = sbr.rel (%p322) target = $region48
      $region47: #{down_block_forward.5} parent=39 // pred_region
        %v326 = vld [vmem:[%s284] sm:$0x1]
        %v327 = vld [vmem:[%s287] sm:$0x1]
        %v328 = vld [vmem:[%s296] sm:$0xff]
        %v329 = vld [vmem:[%s296 + $0x18] sm:$0xff]
        %v330 = vld [vmem:[%s296 + $0x30] sm:$0xff]
        %v331 = vld [vmem:[%s296 + $0x48] sm:$0xff]
        %v333 = vlaneseq
        %v334 = vshrl.u32 %v333, 7
        %v335 = vsub.s32 0, %v334
        %v336 = vrot.slane %v326, %v335
        %v338 = vsub.f32 %v328, %v336
        %v339 = vsub.f32 %v329, %v336
        %v340 = vsub.f32 %v330, %v336
        %v341 = vsub.f32 %v331, %v336
        %v343 = vlaneseq
        %v344 = vshrl.u32 %v343, 7
        %v345 = vsub.s32 0, %v344
        %v346 = vrot.slane %v327, %v345
        %v348 = vmul.f32 %v338, %v346
        %v349 = vmul.f32 %v339, %v346
        %v350 = vmul.f32 %v340, %v346
        %v351 = vmul.f32 %v341, %v346
        %v352 = vmax.f32 %v348, 0.0
        %v353 = vmax.f32 %v349, 0.0
        %v354 = vmax.f32 %v350, 0.0
        %v355 = vmax.f32 %v351, 0.0
        %s356 = smul.u32 %s23, 9
        %s357 = smul.u32 %s356, 128
        %s358 = scalar_lea.vmem %s3, %s357
        %v359 = vld [vmem:[%s358] sm:$0xff]
        %v360 = vld [vmem:[%s358 + $0x8] sm:$0xff]
        %v361 = vld [vmem:[%s358 + $0x10] sm:$0xff]
        %v362 = vld [vmem:[%s358 + $0x18] sm:$0xff]
        %v363 = vld [vmem:[%s358 + $0x20] sm:$0xff]
        %v364 = vld [vmem:[%s358 + $0x28] sm:$0xff]
        %v365 = vld [vmem:[%s358 + $0x30] sm:$0xff]
        %v366 = vld [vmem:[%s358 + $0x38] sm:$0xff]
        %v367 = vld [vmem:[%s358 + $0x40] sm:$0xff]
        %v368 = vld [vmem:[%s358 + $0x48] sm:$0xff]
        %v369 = vld [vmem:[%s358 + $0x50] sm:$0xff]
        %v370 = vld [vmem:[%s358 + $0x58] sm:$0xff]
        %v371 = vld [vmem:[%s358 + $0x60] sm:$0xff]
        %v372 = vld [vmem:[%s358 + $0x68] sm:$0xff]
        %v373 = vld [vmem:[%s358 + $0x70] sm:$0xff]
        %v374 = vld [vmem:[%s358 + $0x78] sm:$0xff]
        %v375 = vld [vmem:[%s296 + $0x9] sm:$0xff]
        %v376 = vld [vmem:[%s296 + $0x21] sm:$0xff]
        %v377 = vld [vmem:[%s296 + $0x39] sm:$0xff]
        %v378 = vld [vmem:[%s296 + $0x51] sm:$0xff]
        %v379 = vsub.f32 %v375, %v336
        %v380 = vsub.f32 %v376, %v336
        %v381 = vsub.f32 %v377, %v336
        %v382 = vsub.f32 %v378, %v336
        %v383 = vmul.f32 %v379, %v346
        %v384 = vmul.f32 %v380, %v346
        %v385 = vmul.f32 %v381, %v346
        %v386 = vmul.f32 %v382, %v346
        %v387 = vmax.f32 %v383, 0.0
        %v388 = vmax.f32 %v384, 0.0
        %v389 = vmax.f32 %v385, 0.0
        %v390 = vmax.f32 %v386, 0.0
        %s391 = sadd.s32 %s356, 1
        %s392 = smul.u32 %s391, 128
        %s393 = scalar_lea.vmem %s3, %s392
        %v394 = vld [vmem:[%s393] sm:$0xff]
        %v395 = vld [vmem:[%s393 + $0x8] sm:$0xff]
        %v396 = vld [vmem:[%s393 + $0x10] sm:$0xff]
        %v397 = vld [vmem:[%s393 + $0x18] sm:$0xff]
        %v398 = vld [vmem:[%s393 + $0x20] sm:$0xff]
        %v399 = vld [vmem:[%s393 + $0x28] sm:$0xff]
        %v400 = vld [vmem:[%s393 + $0x30] sm:$0xff]
        %v401 = vld [vmem:[%s393 + $0x38] sm:$0xff]
        %v402 = vld [vmem:[%s393 + $0x40] sm:$0xff]
        %v403 = vld [vmem:[%s393 + $0x48] sm:$0xff]
        %v404 = vld [vmem:[%s393 + $0x50] sm:$0xff]
        %v405 = vld [vmem:[%s393 + $0x58] sm:$0xff]
        %v406 = vld [vmem:[%s393 + $0x60] sm:$0xff]
        %v407 = vld [vmem:[%s393 + $0x68] sm:$0xff]
        %v408 = vld [vmem:[%s393 + $0x70] sm:$0xff]
        %v409 = vld [vmem:[%s393 + $0x78] sm:$0xff]
        %410 = vmatprep.subr.mxu0 0.0
        %411 = vmatpush1.msra.mxu0 %v394
        %412 = vmatprep.subr.mxu0 0.0
        %413 = vmatpush1.msra.mxu0 %v395
        %414 = vmatprep.subr.mxu0 0.0
        %415 = vmatpush1.msra.mxu0 %v396
        %416 = vmatprep.subr.mxu0 0.0
        %417 = vmatpush1.msra.mxu0 %v397
        %418 = vmatprep.subr.mxu0 0.0
        %419 = vmatpush1.msra.mxu0 %v398
        %420 = vmatprep.subr.mxu0 0.0
        %421 = vmatpush1.msra.mxu0 %v399
        %422 = vmatprep.subr.mxu0 0.0
        %423 = vmatpush1.msra.mxu0 %v400
        %424 = vmatprep.subr.mxu0 0.0
        %425 = vmatpush1.msra.mxu0 %v401
        %426 = vmatprep.subr.mxu0 0.0
        %427 = vmatpush1.msra.mxu0 %v402
        %428 = vmatprep.subr.mxu0 0.0
        %429 = vmatpush1.msra.mxu0 %v403
        %430 = vmatprep.subr.mxu0 0.0
        %431 = vmatpush1.msra.mxu0 %v404
        %432 = vmatprep.subr.mxu0 0.0
        %433 = vmatpush1.msra.mxu0 %v405
        %434 = vmatprep.subr.mxu0 0.0
        %435 = vmatpush1.msra.mxu0 %v406
        %436 = vmatprep.subr.mxu0 0.0
        %437 = vmatpush1.msra.mxu0 %v407
        %438 = vmatprep.subr.mxu0 0.0
        %439 = vmatpush1.msra.mxu0 %v408
        %440 = vmatprep.subr.mxu0 0.0
        %441 = vmatpush1.msra.mxu0 %v409
        %442 = vmatprep.subr.mxu0 0.0
        %443 = vmatpush1.msra.mxu0 0.0
        %444 = vmatprep.subr.mxu0 0.0
        %445 = vmatpush1.msra.mxu0 0.0
        %446 = vmatprep.subr.mxu0 0.0
        %447 = vmatpush1.msra.mxu0 0.0
        %448 = vmatprep.subr.mxu0 0.0
        %449 = vmatpush1.msra.mxu0 0.0
        %450 = vmatprep.subr.mxu0 0.0
        %451 = vmatpush1.msra.mxu0 0.0
        %452 = vmatprep.subr.mxu0 0.0
        %453 = vmatpush1.msra.mxu0 0.0
        %454 = vmatprep.subr.mxu0 0.0
        %455 = vmatpush1.msra.mxu0 0.0
        %456 = vmatprep.subr.mxu0 0.0
        %457 = vmatpush1.msra.mxu0 0.0
        %458 = vmatprep.subr.mxu0 0.0
        %459 = vmatpush1.msra.mxu0 0.0
        %460 = vmatprep.subr.mxu0 0.0
        %461 = vmatpush1.msra.mxu0 0.0
        %462 = vmatprep.subr.mxu0 0.0
        %463 = vmatpush1.msra.mxu0 0.0
        %464 = vmatprep.subr.mxu0 0.0
        %465 = vmatpush1.msra.mxu0 0.0
        %466 = vmatprep.subr.mxu0 0.0
        %467 = vmatpush1.msra.mxu0 0.0
        %468 = vmatprep.subr.mxu0 0.0
        %469 = vmatpush1.msra.mxu0 0.0
        %470 = vmatprep.subr.mxu0 0.0
        %471 = vmatpush1.msra.mxu0 0.0
        %472 = vmatprep.subr.mxu0 0.0
        %473 = vmatpush1.msra.mxu0 0.0
        %474 = vmatprep.mubr.f32.mxu0 0.0
        %475 = vmatmul.mubr.f32.gmra.mrb[0].mxu0 %v387
        %v476 = vpop.f32.mrb[0].mxu0
        %v477 = vadd.f32 0.0, %v476
        %v478 = vpop.f32.mrb[0].mxu0
        %479 = vmatprep.mubr.f32.mxu0 0.0
        %480 = vmatmul.mubr.f32.gmra.mrb[0].mxu0 %v388
        %v481 = vpop.f32.mrb[0].mxu0
        %v482 = vadd.f32 0.0, %v481
        %v483 = vpop.f32.mrb[0].mxu0
        %484 = vmatprep.mubr.f32.mxu0 0.0
        %485 = vmatmul.mubr.f32.gmra.mrb[0].mxu0 %v389
        %v486 = vpop.f32.mrb[0].mxu0
        %v487 = vadd.f32 0.0, %v486
        %v488 = vpop.f32.mrb[0].mxu0
        %489 = vmatprep.mubr.f32.mxu0 0.0
        %490 = vmatmul.mubr.f32.gmra.mrb[0].mxu0 %v390
        %v491 = vpop.f32.mrb[0].mxu0
        %v492 = vadd.f32 0.0, %v491
        %v493 = vpop.f32.mrb[0].mxu0
        %494 = vdwg.mxu0
        %495 = vmatprep.subr.mxu0 0.0
        %496 = vmatpush1.msra.mxu0 %v359
        %497 = vmatprep.subr.mxu0 0.0
        %498 = vmatpush1.msra.mxu0 %v360
        %499 = vmatprep.subr.mxu0 0.0
        %500 = vmatpush1.msra.mxu0 %v361
        %501 = vmatprep.subr.mxu0 0.0
        %502 = vmatpush1.msra.mxu0 %v362
        %503 = vmatprep.subr.mxu0 0.0
        %504 = vmatpush1.msra.mxu0 %v363
        %505 = vmatprep.subr.mxu0 0.0
        %506 = vmatpush1.msra.mxu0 %v364
        %507 = vmatprep.subr.mxu0 0.0
        %508 = vmatpush1.msra.mxu0 %v365
        %509 = vmatprep.subr.mxu0 0.0
        %510 = vmatpush1.msra.mxu0 %v366
        %511 = vmatprep.subr.mxu0 0.0
        %512 = vmatpush1.msra.mxu0 %v367
        %513 = vmatprep.subr.mxu0 0.0
        %514 = vmatpush1.msra.mxu0 %v368
        %515 = vmatprep.subr.mxu0 0.0
        %516 = vmatpush1.msra.mxu0 %v369
        %517 = vmatprep.subr.mxu0 0.0
        %518 = vmatpush1.msra.mxu0 %v370
        %519 = vmatprep.subr.mxu0 0.0
        %520 = vmatpush1.msra.mxu0 %v371
        %521 = vmatprep.subr.mxu0 0.0
        %522 = vmatpush1.msra.mxu0 %v372
        %523 = vmatprep.subr.mxu0 0.0
        %524 = vmatpush1.msra.mxu0 %v373
        %525 = vmatprep.subr.mxu0 0.0
        %526 = vmatpush1.msra.mxu0 %v374
        %527 = vmatprep.subr.mxu0 0.0
        %528 = vmatpush1.msra.mxu0 0.0
        %529 = vmatprep.subr.mxu0 0.0
        %530 = vmatpush1.msra.mxu0 0.0
        %531 = vmatprep.subr.mxu0 0.0
        %532 = vmatpush1.msra.mxu0 0.0
        %533 = vmatprep.subr.mxu0 0.0
        %534 = vmatpush1.msra.mxu0 0.0
        %535 = vmatprep.subr.mxu0 0.0
        %536 = vmatpush1.msra.mxu0 0.0
        %537 = vmatprep.subr.mxu0 0.0
        %538 = vmatpush1.msra.mxu0 0.0
        %539 = vmatprep.subr.mxu0 0.0
        %540 = vmatpush1.msra.mxu0 0.0
        %541 = vmatprep.subr.mxu0 0.0
        %542 = vmatpush1.msra.mxu0 0.0
        %543 = vmatprep.subr.mxu0 0.0
        %544 = vmatpush1.msra.mxu0 0.0
        %545 = vmatprep.subr.mxu0 0.0
        %546 = vmatpush1.msra.mxu0 0.0
        %547 = vmatprep.subr.mxu0 0.0
        %548 = vmatpush1.msra.mxu0 0.0
        %549 = vmatprep.subr.mxu0 0.0
        %550 = vmatpush1.msra.mxu0 0.0
        %551 = vmatprep.subr.mxu0 0.0
        %552 = vmatpush1.msra.mxu0 0.0
        %553 = vmatprep.subr.mxu0 0.0
        %554 = vmatpush1.msra.mxu0 0.0
        %555 = vmatprep.subr.mxu0 0.0
        %556 = vmatpush1.msra.mxu0 0.0
        %557 = vmatprep.subr.mxu0 0.0
        %558 = vmatpush1.msra.mxu0 0.0
        %559 = vmatprep.mubr.f32.mxu0 0.0
        %560 = vmatmul.mubr.f32.gmra.mrb[0].mxu0 %v352
        %v561 = vpop.f32.mrb[0].mxu0
        %v562 = vadd.f32 %v477, %v561
        %v563 = vpop.f32.mrb[0].mxu0
        %564 = vmatprep.mubr.f32.mxu0 0.0
        %565 = vmatmul.mubr.f32.gmra.mrb[0].mxu0 %v353
        %v566 = vpop.f32.mrb[0].mxu0
        %v567 = vadd.f32 %v482, %v566
        %v568 = vpop.f32.mrb[0].mxu0
        %569 = vmatprep.mubr.f32.mxu0 0.0
        %570 = vmatmul.mubr.f32.gmra.mrb[0].mxu0 %v354
        %v571 = vpop.f32.mrb[0].mxu0
        %v572 = vadd.f32 %v487, %v571
        %v573 = vpop.f32.mrb[0].mxu0
        %574 = vmatprep.mubr.f32.mxu0 0.0
        %575 = vmatmul.mubr.f32.gmra.mrb[0].mxu0 %v355
        %v576 = vpop.f32.mrb[0].mxu0
        %v577 = vadd.f32 %v492, %v576
        %v578 = vpop.f32.mrb[0].mxu0
        %579 = vdwg.mxu0
        %v580 = vld [vmem:[%s296 + $0x1] sm:$0xff]
        %v581 = vld [vmem:[%s296 + $0x19] sm:$0xff]
        %v582 = vld [vmem:[%s296 + $0x31] sm:$0xff]
        %v583 = vld [vmem:[%s296 + $0x49] sm:$0xff]
        %v584 = vsub.f32 %v580, %v336
        %v585 = vsub.f32 %v581, %v336
        %v586 = vsub.f32 %v582, %v336
        %v587 = vsub.f32 %v583, %v336
        %v588 = vmul.f32 %v584, %v346
        %v589 = vmul.f32 %v585, %v346
        %v590 = vmul.f32 %v586, %v346
        %v591 = vmul.f32 %v587, %v346
        %v592 = vmax.f32 %v588, 0.0
        %v593 = vmax.f32 %v589, 0.0
        %v594 = vmax.f32 %v590, 0.0
        %v595 = vmax.f32 %v591, 0.0
        %s596 = sadd.s32 %s356, 2
        %s597 = smul.u32 %s596, 128
        %s598 = scalar_lea.vmem %s3, %s597
        %v599 = vld [vmem:[%s598] sm:$0xff]
        %v600 = vld [vmem:[%s598 + $0x8] sm:$0xff]
        %v601 = vld [vmem:[%s598 + $0x10] sm:$0xff]
        %v602 = vld [vmem:[%s598 + $0x18] sm:$0xff]
        %v603 = vld [vmem:[%s598 + $0x20] sm:$0xff]
        %v604 = vld [vmem:[%s598 + $0x28] sm:$0xff]
        %v605 = vld [vmem:[%s598 + $0x30] sm:$0xff]
        %v606 = vld [vmem:[%s598 + $0x38] sm:$0xff]
        %v607 = vld [vmem:[%s598 + $0x40] sm:$0xff]
        %v608 = vld [vmem:[%s598 + $0x48] sm:$0xff]
        %v609 = vld [vmem:[%s598 + $0x50] sm:$0xff]
        %v610 = vld [vmem:[%s598 + $0x58] sm:$0xff]
        %v611 = vld [vmem:[%s598 + $0x60] sm:$0xff]
        %v612 = vld [vmem:[%s598 + $0x68] sm:$0xff]
        %v613 = vld [vmem:[%s598 + $0x70] sm:$0xff]
        %v614 = vld [vmem:[%s598 + $0x78] sm:$0xff]
        %615 = vmatprep.subr.mxu0 0.0
        %616 = vmatpush1.msra.mxu0 %v599
        %617 = vmatprep.subr.mxu0 0.0
        %618 = vmatpush1.msra.mxu0 %v600
        %619 = vmatprep.subr.mxu0 0.0
        %620 = vmatpush1.msra.mxu0 %v601
        %621 = vmatprep.subr.mxu0 0.0
        %622 = vmatpush1.msra.mxu0 %v602
        %623 = vmatprep.subr.mxu0 0.0
        %624 = vmatpush1.msra.mxu0 %v603
        %625 = vmatprep.subr.mxu0 0.0
        %626 = vmatpush1.msra.mxu0 %v604
        %627 = vmatprep.subr.mxu0 0.0
        %628 = vmatpush1.msra.mxu0 %v605
        %629 = vmatprep.subr.mxu0 0.0
        %630 = vmatpush1.msra.mxu0 %v606
        %631 = vmatprep.subr.mxu0 0.0
        %632 = vmatpush1.msra.mxu0 %v607
        %633 = vmatprep.subr.mxu0 0.0
        %634 = vmatpush1.msra.mxu0 %v608
        %635 = vmatprep.subr.mxu0 0.0
        %636 = vmatpush1.msra.mxu0 %v609
        %637 = vmatprep.subr.mxu0 0.0
        %638 = vmatpush1.msra.mxu0 %v610
        %639 = vmatprep.subr.mxu0 0.0
        %640 = vmatpush1.msra.mxu0 %v611
        %641 = vmatprep.subr.mxu0 0.0
        %642 = vmatpush1.msra.mxu0 %v612
        %643 = vmatprep.subr.mxu0 0.0
        %644 = vmatpush1.msra.mxu0 %v613
        %645 = vmatprep.subr.mxu0 0.0
        %646 = vmatpush1.msra.mxu0 %v614
        %647 = vmatprep.subr.mxu0 0.0
        %648 = vmatpush1.msra.mxu0 0.0
        %649 = vmatprep.subr.mxu0 0.0
        %650 = vmatpush1.msra.mxu0 0.0
        %651 = vmatprep.subr.mxu0 0.0
        %652 = vmatpush1.msra.mxu0 0.0
        %653 = vmatprep.subr.mxu0 0.0
        %654 = vmatpush1.msra.mxu0 0.0
        %655 = vmatprep.subr.mxu0 0.0
        %656 = vmatpush1.msra.mxu0 0.0
        %657 = vmatprep.subr.mxu0 0.0
        %658 = vmatpush1.msra.mxu0 0.0
        %659 = vmatprep.subr.mxu0 0.0
        %660 = vmatpush1.msra.mxu0 0.0
        %661 = vmatprep.subr.mxu0 0.0
        %662 = vmatpush1.msra.mxu0 0.0
        %663 = vmatprep.subr.mxu0 0.0
        %664 = vmatpush1.msra.mxu0 0.0
        %665 = vmatprep.subr.mxu0 0.0
        %666 = vmatpush1.msra.mxu0 0.0
        %667 = vmatprep.subr.mxu0 0.0
        %668 = vmatpush1.msra.mxu0 0.0
        %669 = vmatprep.subr.mxu0 0.0
        %670 = vmatpush1.msra.mxu0 0.0
        %671 = vmatprep.subr.mxu0 0.0
        %672 = vmatpush1.msra.mxu0 0.0
        %673 = vmatprep.subr.mxu0 0.0
        %674 = vmatpush1.msra.mxu0 0.0
        %675 = vmatprep.subr.mxu0 0.0
        %676 = vmatpush1.msra.mxu0 0.0
        %677 = vmatprep.subr.mxu0 0.0
        %678 = vmatpush1.msra.mxu0 0.0
        %679 = vmatprep.mubr.f32.mxu0 0.0
        %680 = vmatmul.mubr.f32.gmra.mrb[0].mxu0 %v592
        %v681 = vpop.f32.mrb[0].mxu0
        %v682 = vadd.f32 0.0, %v681
        %v683 = vpop.f32.mrb[0].mxu0
        %684 = vmatprep.mubr.f32.mxu0 0.0
        %685 = vmatmul.mubr.f32.gmra.mrb[0].mxu0 %v593
        %v686 = vpop.f32.mrb[0].mxu0
        %v687 = vadd.f32 0.0, %v686
        %v688 = vpop.f32.mrb[0].mxu0
        %689 = vmatprep.mubr.f32.mxu0 0.0
        %690 = vmatmul.mubr.f32.gmra.mrb[0].mxu0 %v594
        %v691 = vpop.f32.mrb[0].mxu0
        %v692 = vadd.f32 0.0, %v691
        %v693 = vpop.f32.mrb[0].mxu0
        %694 = vmatprep.mubr.f32.mxu0 0.0
        %695 = vmatmul.mubr.f32.gmra.mrb[0].mxu0 %v595
        %v696 = vpop.f32.mrb[0].mxu0
        %v697 = vadd.f32 0.0, %v696
        %v698 = vpop.f32.mrb[0].mxu0
        %699 = vdwg.mxu0
        %v700 = vadd.f32 %v562, %v682
        %v701 = vadd.f32 %v567, %v687
        %v702 = vadd.f32 %v572, %v692
        %v703 = vadd.f32 %v577, %v697
        %s704 = scalar_lea.vmem %s296, 120
        %v705 = vld [vmem:[%s704] sm:$0xff]
        %v706 = vld [vmem:[%s704 + $0x18] sm:$0xff]
        %v707 = vld [vmem:[%s704 + $0x30] sm:$0xff]
        %v708 = vld [vmem:[%s704 + $0x48] sm:$0xff]
        %v709 = vsub.f32 %v705, %v336
        %v710 = vsub.f32 %v706, %v336
        %v711 = vsub.f32 %v707, %v336
        %v712 = vsub.f32 %v708, %v336
        %v713 = vmul.f32 %v709, %v346
        %v714 = vmul.f32 %v710, %v346
        %v715 = vmul.f32 %v711, %v346
        %v716 = vmul.f32 %v712, %v346
        %v717 = vmax.f32 %v713, 0.0
        %v718 = vmax.f32 %v714, 0.0
        %v719 = vmax.f32 %v715, 0.0
        %v720 = vmax.f32 %v716, 0.0
        %s721 = sadd.s32 %s356, 3
        %s722 = smul.u32 %s721, 128
        %s723 = scalar_lea.vmem %s3, %s722
        %v724 = vld [vmem:[%s723] sm:$0xff]
        %v725 = vld [vmem:[%s723 + $0x8] sm:$0xff]
        %v726 = vld [vmem:[%s723 + $0x10] sm:$0xff]
        %v727 = vld [vmem:[%s723 + $0x18] sm:$0xff]
        %v728 = vld [vmem:[%s723 + $0x20] sm:$0xff]
        %v729 = vld [vmem:[%s723 + $0x28] sm:$0xff]
        %v730 = vld [vmem:[%s723 + $0x30] sm:$0xff]
        %v731 = vld [vmem:[%s723 + $0x38] sm:$0xff]
        %v732 = vld [vmem:[%s723 + $0x40] sm:$0xff]
        %v733 = vld [vmem:[%s723 + $0x48] sm:$0xff]
        %v734 = vld [vmem:[%s723 + $0x50] sm:$0xff]
        %v735 = vld [vmem:[%s723 + $0x58] sm:$0xff]
        %v736 = vld [vmem:[%s723 + $0x60] sm:$0xff]
        %v737 = vld [vmem:[%s723 + $0x68] sm:$0xff]
        %v738 = vld [vmem:[%s723 + $0x70] sm:$0xff]
        %v739 = vld [vmem:[%s723 + $0x78] sm:$0xff]
        %740 = vmatprep.subr.mxu0 0.0
        %741 = vmatpush1.msra.mxu0 %v724
        %742 = vmatprep.subr.mxu0 0.0
        %743 = vmatpush1.msra.mxu0 %v725
        %744 = vmatprep.subr.mxu0 0.0
        %745 = vmatpush1.msra.mxu0 %v726
        %746 = vmatprep.subr.mxu0 0.0
        %747 = vmatpush1.msra.mxu0 %v727
        %748 = vmatprep.subr.mxu0 0.0
        %749 = vmatpush1.msra.mxu0 %v728
        %750 = vmatprep.subr.mxu0 0.0
        %751 = vmatpush1.msra.mxu0 %v729
        %752 = vmatprep.subr.mxu0 0.0
        %753 = vmatpush1.msra.mxu0 %v730
        %754 = vmatprep.subr.mxu0 0.0
        %755 = vmatpush1.msra.mxu0 %v731
        %756 = vmatprep.subr.mxu0 0.0
        %757 = vmatpush1.msra.mxu0 %v732
        %758 = vmatprep.subr.mxu0 0.0
        %759 = vmatpush1.msra.mxu0 %v733
        %760 = vmatprep.subr.mxu0 0.0
        %761 = vmatpush1.msra.mxu0 %v734
        %762 = vmatprep.subr.mxu0 0.0
        %763 = vmatpush1.msra.mxu0 %v735
        %764 = vmatprep.subr.mxu0 0.0
        %765 = vmatpush1.msra.mxu0 %v736
        %766 = vmatprep.subr.mxu0 0.0
        %767 = vmatpush1.msra.mxu0 %v737
        %768 = vmatprep.subr.mxu0 0.0
        %769 = vmatpush1.msra.mxu0 %v738
        %770 = vmatprep.subr.mxu0 0.0
        %771 = vmatpush1.msra.mxu0 %v739
        %772 = vmatprep.subr.mxu0 0.0
        %773 = vmatpush1.msra.mxu0 0.0
        %774 = vmatprep.subr.mxu0 0.0
        %775 = vmatpush1.msra.mxu0 0.0
        %776 = vmatprep.subr.mxu0 0.0
        %777 = vmatpush1.msra.mxu0 0.0
        %778 = vmatprep.subr.mxu0 0.0
        %779 = vmatpush1.msra.mxu0 0.0
        %780 = vmatprep.subr.mxu0 0.0
        %781 = vmatpush1.msra.mxu0 0.0
        %782 = vmatprep.subr.mxu0 0.0
        %783 = vmatpush1.msra.mxu0 0.0
        %784 = vmatprep.subr.mxu0 0.0
        %785 = vmatpush1.msra.mxu0 0.0
        %786 = vmatprep.subr.mxu0 0.0
        %787 = vmatpush1.msra.mxu0 0.0
        %788 = vmatprep.subr.mxu0 0.0
        %789 = vmatpush1.msra.mxu0 0.0
        %790 = vmatprep.subr.mxu0 0.0
        %791 = vmatpush1.msra.mxu0 0.0
        %792 = vmatprep.subr.mxu0 0.0
        %793 = vmatpush1.msra.mxu0 0.0
        %794 = vmatprep.subr.mxu0 0.0
        %795 = vmatpush1.msra.mxu0 0.0
        %796 = vmatprep.subr.mxu0 0.0
        %797 = vmatpush1.msra.mxu0 0.0
        %798 = vmatprep.subr.mxu0 0.0
        %799 = vmatpush1.msra.mxu0 0.0
        %800 = vmatprep.subr.mxu0 0.0
        %801 = vmatpush1.msra.mxu0 0.0
        %802 = vmatprep.subr.mxu0 0.0
        %803 = vmatpush1.msra.mxu0 0.0
        %804 = vmatprep.mubr.f32.mxu0 0.0
        %805 = vmatmul.mubr.f32.gmra.mrb[0].mxu0 %v717
        %v806 = vpop.f32.mrb[0].mxu0
        %v807 = vadd.f32 0.0, %v806
        %v808 = vpop.f32.mrb[0].mxu0
        %809 = vmatprep.mubr.f32.mxu0 0.0
        %810 = vmatmul.mubr.f32.gmra.mrb[0].mxu0 %v718
        %v811 = vpop.f32.mrb[0].mxu0
        %v812 = vadd.f32 0.0, %v811
        %v813 = vpop.f32.mrb[0].mxu0
        %814 = vmatprep.mubr.f32.mxu0 0.0
        %815 = vmatmul.mubr.f32.gmra.mrb[0].mxu0 %v719
        %v816 = vpop.f32.mrb[0].mxu0
        %v817 = vadd.f32 0.0, %v816
        %v818 = vpop.f32.mrb[0].mxu0
        %819 = vmatprep.mubr.f32.mxu0 0.0
        %820 = vmatmul.mubr.f32.gmra.mrb[0].mxu0 %v720
        %v821 = vpop.f32.mrb[0].mxu0
        %v822 = vadd.f32 0.0, %v821
        %v823 = vpop.f32.mrb[0].mxu0
        %824 = vdwg.mxu0
        %v825 = vadd.f32 %v700, %v807
        %v826 = vadd.f32 %v701, %v812
        %v827 = vadd.f32 %v702, %v817
        %v828 = vadd.f32 %v703, %v822
        %v829 = vld [vmem:[%s704 + $0x9] sm:$0xff]
        %v830 = vld [vmem:[%s704 + $0x21] sm:$0xff]
        %v831 = vld [vmem:[%s704 + $0x39] sm:$0xff]
        %v832 = vld [vmem:[%s704 + $0x51] sm:$0xff]
        %v833 = vsub.f32 %v829, %v336
        %v834 = vsub.f32 %v830, %v336
        %v835 = vsub.f32 %v831, %v336
        %v836 = vsub.f32 %v832, %v336
        %v837 = vmul.f32 %v833, %v346
        %v838 = vmul.f32 %v834, %v346
        %v839 = vmul.f32 %v835, %v346
        %v840 = vmul.f32 %v836, %v346
        %v841 = vmax.f32 %v837, 0.0
        %v842 = vmax.f32 %v838, 0.0
        %v843 = vmax.f32 %v839, 0.0
        %v844 = vmax.f32 %v840, 0.0
        %s845 = sadd.s32 %s356, 4
        %s846 = smul.u32 %s845, 128
        %s847 = scalar_lea.vmem %s3, %s846
        %v848 = vld [vmem:[%s847] sm:$0xff]
        %v849 = vld [vmem:[%s847 + $0x8] sm:$0xff]
        %v850 = vld [vmem:[%s847 + $0x10] sm:$0xff]
        %v851 = vld [vmem:[%s847 + $0x18] sm:$0xff]
        %v852 = vld [vmem:[%s847 + $0x20] sm:$0xff]
        %v853 = vld [vmem:[%s847 + $0x28] sm:$0xff]
        %v854 = vld [vmem:[%s847 + $0x30] sm:$0xff]
        %v855 = vld [vmem:[%s847 + $0x38] sm:$0xff]
        %v856 = vld [vmem:[%s847 + $0x40] sm:$0xff]
        %v857 = vld [vmem:[%s847 + $0x48] sm:$0xff]
        %v858 = vld [vmem:[%s847 + $0x50] sm:$0xff]
        %v859 = vld [vmem:[%s847 + $0x58] sm:$0xff]
        %v860 = vld [vmem:[%s847 + $0x60] sm:$0xff]
        %v861 = vld [vmem:[%s847 + $0x68] sm:$0xff]
        %v862 = vld [vmem:[%s847 + $0x70] sm:$0xff]
        %v863 = vld [vmem:[%s847 + $0x78] sm:$0xff]
        %864 = vmatprep.subr.mxu0 0.0
        %865 = vmatpush1.msra.mxu0 %v848
        %866 = vmatprep.subr.mxu0 0.0
        %867 = vmatpush1.msra.mxu0 %v849
        %868 = vmatprep.subr.mxu0 0.0
        %869 = vmatpush1.msra.mxu0 %v850
        %870 = vmatprep.subr.mxu0 0.0
        %871 = vmatpush1.msra.mxu0 %v851
        %872 = vmatprep.subr.mxu0 0.0
        %873 = vmatpush1.msra.mxu0 %v852
        %874 = vmatprep.subr.mxu0 0.0
        %875 = vmatpush1.msra.mxu0 %v853
        %876 = vmatprep.subr.mxu0 0.0
        %877 = vmatpush1.msra.mxu0 %v854
        %878 = vmatprep.subr.mxu0 0.0
        %879 = vmatpush1.msra.mxu0 %v855
        %880 = vmatprep.subr.mxu0 0.0
        %881 = vmatpush1.msra.mxu0 %v856
        %882 = vmatprep.subr.mxu0 0.0
        %883 = vmatpush1.msra.mxu0 %v857
        %884 = vmatprep.subr.mxu0 0.0
        %885 = vmatpush1.msra.mxu0 %v858
        %886 = vmatprep.subr.mxu0 0.0
        %887 = vmatpush1.msra.mxu0 %v859
        %888 = vmatprep.subr.mxu0 0.0
        %889 = vmatpush1.msra.mxu0 %v860
        %890 = vmatprep.subr.mxu0 0.0
        %891 = vmatpush1.msra.mxu0 %v861
        %892 = vmatprep.subr.mxu0 0.0
        %893 = vmatpush1.msra.mxu0 %v862
        %894 = vmatprep.subr.mxu0 0.0
        %895 = vmatpush1.msra.mxu0 %v863
        %896 = vmatprep.subr.mxu0 0.0
        %897 = vmatpush1.msra.mxu0 0.0
        %898 = vmatprep.subr.mxu0 0.0
        %899 = vmatpush1.msra.mxu0 0.0
        %900 = vmatprep.subr.mxu0 0.0
        %901 = vmatpush1.msra.mxu0 0.0
        %902 = vmatprep.subr.mxu0 0.0
        %903 = vmatpush1.msra.mxu0 0.0
        %904 = vmatprep.subr.mxu0 0.0
        %905 = vmatpush1.msra.mxu0 0.0
        %906 = vmatprep.subr.mxu0 0.0
        %907 = vmatpush1.msra.mxu0 0.0
        %908 = vmatprep.subr.mxu0 0.0
        %909 = vmatpush1.msra.mxu0 0.0
        %910 = vmatprep.subr.mxu0 0.0
        %911 = vmatpush1.msra.mxu0 0.0
        %912 = vmatprep.subr.mxu0 0.0
        %913 = vmatpush1.msra.mxu0 0.0
        %914 = vmatprep.subr.mxu0 0.0
        %915 = vmatpush1.msra.mxu0 0.0
        %916 = vmatprep.subr.mxu0 0.0
        %917 = vmatpush1.msra.mxu0 0.0
        %918 = vmatprep.subr.mxu0 0.0
        %919 = vmatpush1.msra.mxu0 0.0
        %920 = vmatprep.subr.mxu0 0.0
        %921 = vmatpush1.msra.mxu0 0.0
        %922 = vmatprep.subr.mxu0 0.0
        %923 = vmatpush1.msra.mxu0 0.0
        %924 = vmatprep.subr.mxu0 0.0
        %925 = vmatpush1.msra.mxu0 0.0
        %926 = vmatprep.subr.mxu0 0.0
        %927 = vmatpush1.msra.mxu0 0.0
        %928 = vmatprep.mubr.f32.mxu0 0.0
        %929 = vmatmul.mubr.f32.gmra.mrb[0].mxu0 %v841
        %v930 = vpop.f32.mrb[0].mxu0
        %v931 = vadd.f32 0.0, %v930
        %v932 = vpop.f32.mrb[0].mxu0
        %933 = vmatprep.mubr.f32.mxu0 0.0
        %934 = vmatmul.mubr.f32.gmra.mrb[0].mxu0 %v842
        %v935 = vpop.f32.mrb[0].mxu0
        %v936 = vadd.f32 0.0, %v935
        %v937 = vpop.f32.mrb[0].mxu0
        %938 = vmatprep.mubr.f32.mxu0 0.0
        %939 = vmatmul.mubr.f32.gmra.mrb[0].mxu0 %v843
        %v940 = vpop.f32.mrb[0].mxu0
        %v941 = vadd.f32 0.0, %v940
        %v942 = vpop.f32.mrb[0].mxu0
        %943 = vmatprep.mubr.f32.mxu0 0.0
        %944 = vmatmul.mubr.f32.gmra.mrb[0].mxu0 %v844
        %v945 = vpop.f32.mrb[0].mxu0
        %v946 = vadd.f32 0.0, %v945
        %v947 = vpop.f32.mrb[0].mxu0
        %948 = vdwg.mxu0
        %v949 = vadd.f32 %v825, %v931
        %v950 = vadd.f32 %v826, %v936
        %v951 = vadd.f32 %v827, %v941
        %v952 = vadd.f32 %v828, %v946
        %v953 = vld [vmem:[%s704 + $0x1] sm:$0xff]
        %v954 = vld [vmem:[%s704 + $0x19] sm:$0xff]
        %v955 = vld [vmem:[%s704 + $0x31] sm:$0xff]
        %v956 = vld [vmem:[%s704 + $0x49] sm:$0xff]
        %v957 = vsub.f32 %v953, %v336
        %v958 = vsub.f32 %v954, %v336
        %v959 = vsub.f32 %v955, %v336
        %v960 = vsub.f32 %v956, %v336
        %v961 = vmul.f32 %v957, %v346
        %v962 = vmul.f32 %v958, %v346
        %v963 = vmul.f32 %v959, %v346
        %v964 = vmul.f32 %v960, %v346
        %v965 = vmax.f32 %v961, 0.0
        %v966 = vmax.f32 %v962, 0.0
        %v967 = vmax.f32 %v963, 0.0
        %v968 = vmax.f32 %v964, 0.0
        %s969 = sadd.s32 %s356, 5
        %s970 = smul.u32 %s969, 128
        %s971 = scalar_lea.vmem %s3, %s970
        %v972 = vld [vmem:[%s971] sm:$0xff]
        %v973 = vld [vmem:[%s971 + $0x8] sm:$0xff]
        %v974 = vld [vmem:[%s971 + $0x10] sm:$0xff]
        %v975 = vld [vmem:[%s971 + $0x18] sm:$0xff]
        %v976 = vld [vmem:[%s971 + $0x20] sm:$0xff]
        %v977 = vld [vmem:[%s971 + $0x28] sm:$0xff]
        %v978 = vld [vmem:[%s971 + $0x30] sm:$0xff]
        %v979 = vld [vmem:[%s971 + $0x38] sm:$0xff]
        %v980 = vld [vmem:[%s971 + $0x40] sm:$0xff]
        %v981 = vld [vmem:[%s971 + $0x48] sm:$0xff]
        %v982 = vld [vmem:[%s971 + $0x50] sm:$0xff]
        %v983 = vld [vmem:[%s971 + $0x58] sm:$0xff]
        %v984 = vld [vmem:[%s971 + $0x60] sm:$0xff]
        %v985 = vld [vmem:[%s971 + $0x68] sm:$0xff]
        %v986 = vld [vmem:[%s971 + $0x70] sm:$0xff]
        %v987 = vld [vmem:[%s971 + $0x78] sm:$0xff]
        %988 = vmatprep.subr.mxu0 0.0
        %989 = vmatpush1.msra.mxu0 %v972
        %990 = vmatprep.subr.mxu0 0.0
        %991 = vmatpush1.msra.mxu0 %v973
        %992 = vmatprep.subr.mxu0 0.0
        %993 = vmatpush1.msra.mxu0 %v974
        %994 = vmatprep.subr.mxu0 0.0
        %995 = vmatpush1.msra.mxu0 %v975
        %996 = vmatprep.subr.mxu0 0.0
        %997 = vmatpush1.msra.mxu0 %v976
        %998 = vmatprep.subr.mxu0 0.0
        %999 = vmatpush1.msra.mxu0 %v977
        %1000 = vmatprep.subr.mxu0 0.0
        %1001 = vmatpush1.msra.mxu0 %v978
        %1002 = vmatprep.subr.mxu0 0.0
        %1003 = vmatpush1.msra.mxu0 %v979
        %1004 = vmatprep.subr.mxu0 0.0
        %1005 = vmatpush1.msra.mxu0 %v980
        %1006 = vmatprep.subr.mxu0 0.0
        %1007 = vmatpush1.msra.mxu0 %v981
        %1008 = vmatprep.subr.mxu0 0.0
        %1009 = vmatpush1.msra.mxu0 %v982
        %1010 = vmatprep.subr.mxu0 0.0
        %1011 = vmatpush1.msra.mxu0 %v983
        %1012 = vmatprep.subr.mxu0 0.0
        %1013 = vmatpush1.msra.mxu0 %v984
        %1014 = vmatprep.subr.mxu0 0.0
        %1015 = vmatpush1.msra.mxu0 %v985
        %1016 = vmatprep.subr.mxu0 0.0
        %1017 = vmatpush1.msra.mxu0 %v986
        %1018 = vmatprep.subr.mxu0 0.0
        %1019 = vmatpush1.msra.mxu0 %v987
        %1020 = vmatprep.subr.mxu0 0.0
        %1021 = vmatpush1.msra.mxu0 0.0
        %1022 = vmatprep.subr.mxu0 0.0
        %1023 = vmatpush1.msra.mxu0 0.0
        %1024 = vmatprep.subr.mxu0 0.0
        %1025 = vmatpush1.msra.mxu0 0.0
        %1026 = vmatprep.subr.mxu0 0.0
        %1027 = vmatpush1.msra.mxu0 0.0
        %1028 = vmatprep.subr.mxu0 0.0
        %1029 = vmatpush1.msra.mxu0 0.0
        %1030 = vmatprep.subr.mxu0 0.0
        %1031 = vmatpush1.msra.mxu0 0.0
        %1032 = vmatprep.subr.mxu0 0.0
        %1033 = vmatpush1.msra.mxu0 0.0
        %1034 = vmatprep.subr.mxu0 0.0
        %1035 = vmatpush1.msra.mxu0 0.0
        %1036 = vmatprep.subr.mxu0 0.0
        %1037 = vmatpush1.msra.mxu0 0.0
        %1038 = vmatprep.subr.mxu0 0.0
        %1039 = vmatpush1.msra.mxu0 0.0
        %1040 = vmatprep.subr.mxu0 0.0
        %1041 = vmatpush1.msra.mxu0 0.0
        %1042 = vmatprep.subr.mxu0 0.0
        %1043 = vmatpush1.msra.mxu0 0.0
        %1044 = vmatprep.subr.mxu0 0.0
        %1045 = vmatpush1.msra.mxu0 0.0
        %1046 = vmatprep.subr.mxu0 0.0
        %1047 = vmatpush1.msra.mxu0 0.0
        %1048 = vmatprep.subr.mxu0 0.0
        %1049 = vmatpush1.msra.mxu0 0.0
        %1050 = vmatprep.subr.mxu0 0.0
        %1051 = vmatpush1.msra.mxu0 0.0
        %1052 = vmatprep.mubr.f32.mxu0 0.0
        %1053 = vmatmul.mubr.f32.gmra.mrb[0].mxu0 %v965
        %v1054 = vpop.f32.mrb[0].mxu0
        %v1055 = vadd.f32 0.0, %v1054
        %v1056 = vpop.f32.mrb[0].mxu0
        %1057 = vmatprep.mubr.f32.mxu0 0.0
        %1058 = vmatmul.mubr.f32.gmra.mrb[0].mxu0 %v966
        %v1059 = vpop.f32.mrb[0].mxu0
        %v1060 = vadd.f32 0.0, %v1059
        %v1061 = vpop.f32.mrb[0].mxu0
        %1062 = vmatprep.mubr.f32.mxu0 0.0
        %1063 = vmatmul.mubr.f32.gmra.mrb[0].mxu0 %v967
        %v1064 = vpop.f32.mrb[0].mxu0
        %v1065 = vadd.f32 0.0, %v1064
        %v1066 = vpop.f32.mrb[0].mxu0
        %1067 = vmatprep.mubr.f32.mxu0 0.0
        %1068 = vmatmul.mubr.f32.gmra.mrb[0].mxu0 %v968
        %v1069 = vpop.f32.mrb[0].mxu0
        %v1070 = vadd.f32 0.0, %v1069
        %v1071 = vpop.f32.mrb[0].mxu0
        %1072 = vdwg.mxu0
        %v1073 = vadd.f32 %v949, %v1055
        %v1074 = vadd.f32 %v950, %v1060
        %v1075 = vadd.f32 %v951, %v1065
        %v1076 = vadd.f32 %v952, %v1070
        %s1077 = scalar_lea.vmem %s296, 24
        %v1078 = vld [vmem:[%s1077] sm:$0xff]
        %v1079 = vld [vmem:[%s1077 + $0x18] sm:$0xff]
        %v1080 = vld [vmem:[%s1077 + $0x30] sm:$0xff]
        %v1081 = vld [vmem:[%s1077 + $0x48] sm:$0xff]
        %v1082 = vsub.f32 %v1078, %v336
        %v1083 = vsub.f32 %v1079, %v336
        %v1084 = vsub.f32 %v1080, %v336
        %v1085 = vsub.f32 %v1081, %v336
        %v1086 = vmul.f32 %v1082, %v346
        %v1087 = vmul.f32 %v1083, %v346
        %v1088 = vmul.f32 %v1084, %v346
        %v1089 = vmul.f32 %v1085, %v346
        %v1090 = vmax.f32 %v1086, 0.0
        %v1091 = vmax.f32 %v1087, 0.0
        %v1092 = vmax.f32 %v1088, 0.0
        %v1093 = vmax.f32 %v1089, 0.0
        %s1094 = sadd.s32 %s356, 6
        %s1095 = smul.u32 %s1094, 128
        %s1096 = scalar_lea.vmem %s3, %s1095
        %v1097 = vld [vmem:[%s1096] sm:$0xff]
        %v1098 = vld [vmem:[%s1096 + $0x8] sm:$0xff]
        %v1099 = vld [vmem:[%s1096 + $0x10] sm:$0xff]
        %v1100 = vld [vmem:[%s1096 + $0x18] sm:$0xff]
        %v1101 = vld [vmem:[%s1096 + $0x20] sm:$0xff]
        %v1102 = vld [vmem:[%s1096 + $0x28] sm:$0xff]
        %v1103 = vld [vmem:[%s1096 + $0x30] sm:$0xff]
        %v1104 = vld [vmem:[%s1096 + $0x38] sm:$0xff]
        %v1105 = vld [vmem:[%s1096 + $0x40] sm:$0xff]
        %v1106 = vld [vmem:[%s1096 + $0x48] sm:$0xff]
        %v1107 = vld [vmem:[%s1096 + $0x50] sm:$0xff]
        %v1108 = vld [vmem:[%s1096 + $0x58] sm:$0xff]
        %v1109 = vld [vmem:[%s1096 + $0x60] sm:$0xff]
        %v1110 = vld [vmem:[%s1096 + $0x68] sm:$0xff]
        %v1111 = vld [vmem:[%s1096 + $0x70] sm:$0xff]
        %v1112 = vld [vmem:[%s1096 + $0x78] sm:$0xff]
        %1113 = vmatprep.subr.mxu0 0.0
        %1114 = vmatpush1.msra.mxu0 %v1097
        %1115 = vmatprep.subr.mxu0 0.0
        %1116 = vmatpush1.msra.mxu0 %v1098
        %1117 = vmatprep.subr.mxu0 0.0
        %1118 = vmatpush1.msra.mxu0 %v1099
        %1119 = vmatprep.subr.mxu0 0.0
        %1120 = vmatpush1.msra.mxu0 %v1100
        %1121 = vmatprep.subr.mxu0 0.0
        %1122 = vmatpush1.msra.mxu0 %v1101
        %1123 = vmatprep.subr.mxu0 0.0
        %1124 = vmatpush1.msra.mxu0 %v1102
        %1125 = vmatprep.subr.mxu0 0.0
        %1126 = vmatpush1.msra.mxu0 %v1103
        %1127 = vmatprep.subr.mxu0 0.0
        %1128 = vmatpush1.msra.mxu0 %v1104
        %1129 = vmatprep.subr.mxu0 0.0
        %1130 = vmatpush1.msra.mxu0 %v1105
        %1131 = vmatprep.subr.mxu0 0.0
        %1132 = vmatpush1.msra.mxu0 %v1106
        %1133 = vmatprep.subr.mxu0 0.0
        %1134 = vmatpush1.msra.mxu0 %v1107
        %1135 = vmatprep.subr.mxu0 0.0
        %1136 = vmatpush1.msra.mxu0 %v1108
        %1137 = vmatprep.subr.mxu0 0.0
        %1138 = vmatpush1.msra.mxu0 %v1109
        %1139 = vmatprep.subr.mxu0 0.0
        %1140 = vmatpush1.msra.mxu0 %v1110
        %1141 = vmatprep.subr.mxu0 0.0
        %1142 = vmatpush1.msra.mxu0 %v1111
        %1143 = vmatprep.subr.mxu0 0.0
        %1144 = vmatpush1.msra.mxu0 %v1112
        %1145 = vmatprep.subr.mxu0 0.0
        %1146 = vmatpush1.msra.mxu0 0.0
        %1147 = vmatprep.subr.mxu0 0.0
        %1148 = vmatpush1.msra.mxu0 0.0
        %1149 = vmatprep.subr.mxu0 0.0
        %1150 = vmatpush1.msra.mxu0 0.0
        %1151 = vmatprep.subr.mxu0 0.0
        %1152 = vmatpush1.msra.mxu0 0.0
        %1153 = vmatprep.subr.mxu0 0.0
        %1154 = vmatpush1.msra.mxu0 0.0
        %1155 = vmatprep.subr.mxu0 0.0
        %1156 = vmatpush1.msra.mxu0 0.0
        %1157 = vmatprep.subr.mxu0 0.0
        %1158 = vmatpush1.msra.mxu0 0.0
        %1159 = vmatprep.subr.mxu0 0.0
        %1160 = vmatpush1.msra.mxu0 0.0
        %1161 = vmatprep.subr.mxu0 0.0
        %1162 = vmatpush1.msra.mxu0 0.0
        %1163 = vmatprep.subr.mxu0 0.0
        %1164 = vmatpush1.msra.mxu0 0.0
        %1165 = vmatprep.subr.mxu0 0.0
        %1166 = vmatpush1.msra.mxu0 0.0
        %1167 = vmatprep.subr.mxu0 0.0
        %1168 = vmatpush1.msra.mxu0 0.0
        %1169 = vmatprep.subr.mxu0 0.0
        %1170 = vmatpush1.msra.mxu0 0.0
        %1171 = vmatprep.subr.mxu0 0.0
        %1172 = vmatpush1.msra.mxu0 0.0
        %1173 = vmatprep.subr.mxu0 0.0
        %1174 = vmatpush1.msra.mxu0 0.0
        %1175 = vmatprep.subr.mxu0 0.0
        %1176 = vmatpush1.msra.mxu0 0.0
        %1177 = vmatprep.mubr.f32.mxu0 0.0
        %1178 = vmatmul.mubr.f32.gmra.mrb[0].mxu0 %v1090
        %v1179 = vpop.f32.mrb[0].mxu0
        %v1180 = vadd.f32 0.0, %v1179
        %v1181 = vpop.f32.mrb[0].mxu0
        %1182 = vmatprep.mubr.f32.mxu0 0.0
        %1183 = vmatmul.mubr.f32.gmra.mrb[0].mxu0 %v1091
        %v1184 = vpop.f32.mrb[0].mxu0
        %v1185 = vadd.f32 0.0, %v1184
        %v1186 = vpop.f32.mrb[0].mxu0
        %1187 = vmatprep.mubr.f32.mxu0 0.0
        %1188 = vmatmul.mubr.f32.gmra.mrb[0].mxu0 %v1092
        %v1189 = vpop.f32.mrb[0].mxu0
        %v1190 = vadd.f32 0.0, %v1189
        %v1191 = vpop.f32.mrb[0].mxu0
        %1192 = vmatprep.mubr.f32.mxu0 0.0
        %1193 = vmatmul.mubr.f32.gmra.mrb[0].mxu0 %v1093
        %v1194 = vpop.f32.mrb[0].mxu0
        %v1195 = vadd.f32 0.0, %v1194
        %v1196 = vpop.f32.mrb[0].mxu0
        %1197 = vdwg.mxu0
        %v1198 = vadd.f32 %v1073, %v1180
        %v1199 = vadd.f32 %v1074, %v1185
        %v1200 = vadd.f32 %v1075, %v1190
        %v1201 = vadd.f32 %v1076, %v1195
        %v1202 = vld [vmem:[%s1077 + $0x9] sm:$0xff]
        %v1203 = vld [vmem:[%s1077 + $0x21] sm:$0xff]
        %v1204 = vld [vmem:[%s1077 + $0x39] sm:$0xff]
        %v1205 = vld [vmem:[%s1077 + $0x51] sm:$0xff]
        %v1206 = vsub.f32 %v1202, %v336
        %v1207 = vsub.f32 %v1203, %v336
        %v1208 = vsub.f32 %v1204, %v336
        %v1209 = vsub.f32 %v1205, %v336
        %v1210 = vmul.f32 %v1206, %v346
        %v1211 = vmul.f32 %v1207, %v346
        %v1212 = vmul.f32 %v1208, %v346
        %v1213 = vmul.f32 %v1209, %v346
        %v1214 = vmax.f32 %v1210, 0.0
        %v1215 = vmax.f32 %v1211, 0.0
        %v1216 = vmax.f32 %v1212, 0.0
        %v1217 = vmax.f32 %v1213, 0.0
        %s1218 = sadd.s32 %s356, 7
        %s1219 = smul.u32 %s1218, 128
        %s1220 = scalar_lea.vmem %s3, %s1219
        %v1221 = vld [vmem:[%s1220] sm:$0xff]
        %v1222 = vld [vmem:[%s1220 + $0x8] sm:$0xff]
        %v1223 = vld [vmem:[%s1220 + $0x10] sm:$0xff]
        %v1224 = vld [vmem:[%s1220 + $0x18] sm:$0xff]
        %v1225 = vld [vmem:[%s1220 + $0x20] sm:$0xff]
        %v1226 = vld [vmem:[%s1220 + $0x28] sm:$0xff]
        %v1227 = vld [vmem:[%s1220 + $0x30] sm:$0xff]
        %v1228 = vld [vmem:[%s1220 + $0x38] sm:$0xff]
        %v1229 = vld [vmem:[%s1220 + $0x40] sm:$0xff]
        %v1230 = vld [vmem:[%s1220 + $0x48] sm:$0xff]
        %v1231 = vld [vmem:[%s1220 + $0x50] sm:$0xff]
        %v1232 = vld [vmem:[%s1220 + $0x58] sm:$0xff]
        %v1233 = vld [vmem:[%s1220 + $0x60] sm:$0xff]
        %v1234 = vld [vmem:[%s1220 + $0x68] sm:$0xff]
        %v1235 = vld [vmem:[%s1220 + $0x70] sm:$0xff]
        %v1236 = vld [vmem:[%s1220 + $0x78] sm:$0xff]
        %1237 = vmatprep.subr.mxu0 0.0
        %1238 = vmatpush1.msra.mxu0 %v1221
        %1239 = vmatprep.subr.mxu0 0.0
        %1240 = vmatpush1.msra.mxu0 %v1222
        %1241 = vmatprep.subr.mxu0 0.0
        %1242 = vmatpush1.msra.mxu0 %v1223
        %1243 = vmatprep.subr.mxu0 0.0
        %1244 = vmatpush1.msra.mxu0 %v1224
        %1245 = vmatprep.subr.mxu0 0.0
        %1246 = vmatpush1.msra.mxu0 %v1225
        %1247 = vmatprep.subr.mxu0 0.0
        %1248 = vmatpush1.msra.mxu0 %v1226
        %1249 = vmatprep.subr.mxu0 0.0
        %1250 = vmatpush1.msra.mxu0 %v1227
        %1251 = vmatprep.subr.mxu0 0.0
        %1252 = vmatpush1.msra.mxu0 %v1228
        %1253 = vmatprep.subr.mxu0 0.0
        %1254 = vmatpush1.msra.mxu0 %v1229
        %1255 = vmatprep.subr.mxu0 0.0
        %1256 = vmatpush1.msra.mxu0 %v1230
        %1257 = vmatprep.subr.mxu0 0.0
        %1258 = vmatpush1.msra.mxu0 %v1231
        %1259 = vmatprep.subr.mxu0 0.0
        %1260 = vmatpush1.msra.mxu0 %v1232
        %1261 = vmatprep.subr.mxu0 0.0
        %1262 = vmatpush1.msra.mxu0 %v1233
        %1263 = vmatprep.subr.mxu0 0.0
        %1264 = vmatpush1.msra.mxu0 %v1234
        %1265 = vmatprep.subr.mxu0 0.0
        %1266 = vmatpush1.msra.mxu0 %v1235
        %1267 = vmatprep.subr.mxu0 0.0
        %1268 = vmatpush1.msra.mxu0 %v1236
        %1269 = vmatprep.subr.mxu0 0.0
        %1270 = vmatpush1.msra.mxu0 0.0
        %1271 = vmatprep.subr.mxu0 0.0
        %1272 = vmatpush1.msra.mxu0 0.0
        %1273 = vmatprep.subr.mxu0 0.0
        %1274 = vmatpush1.msra.mxu0 0.0
        %1275 = vmatprep.subr.mxu0 0.0
        %1276 = vmatpush1.msra.mxu0 0.0
        %1277 = vmatprep.subr.mxu0 0.0
        %1278 = vmatpush1.msra.mxu0 0.0
        %1279 = vmatprep.subr.mxu0 0.0
        %1280 = vmatpush1.msra.mxu0 0.0
        %1281 = vmatprep.subr.mxu0 0.0
        %1282 = vmatpush1.msra.mxu0 0.0
        %1283 = vmatprep.subr.mxu0 0.0
        %1284 = vmatpush1.msra.mxu0 0.0
        %1285 = vmatprep.subr.mxu0 0.0
        %1286 = vmatpush1.msra.mxu0 0.0
        %1287 = vmatprep.subr.mxu0 0.0
        %1288 = vmatpush1.msra.mxu0 0.0
        %1289 = vmatprep.subr.mxu0 0.0
        %1290 = vmatpush1.msra.mxu0 0.0
        %1291 = vmatprep.subr.mxu0 0.0
        %1292 = vmatpush1.msra.mxu0 0.0
        %1293 = vmatprep.subr.mxu0 0.0
        %1294 = vmatpush1.msra.mxu0 0.0
        %1295 = vmatprep.subr.mxu0 0.0
        %1296 = vmatpush1.msra.mxu0 0.0
        %1297 = vmatprep.subr.mxu0 0.0
        %1298 = vmatpush1.msra.mxu0 0.0
        %1299 = vmatprep.subr.mxu0 0.0
        %1300 = vmatpush1.msra.mxu0 0.0
        %1301 = vmatprep.mubr.f32.mxu0 0.0
        %1302 = vmatmul.mubr.f32.gmra.mrb[0].mxu0 %v1214
        %v1303 = vpop.f32.mrb[0].mxu0
        %v1304 = vadd.f32 0.0, %v1303
        %v1305 = vpop.f32.mrb[0].mxu0
        %1306 = vmatprep.mubr.f32.mxu0 0.0
        %1307 = vmatmul.mubr.f32.gmra.mrb[0].mxu0 %v1215
        %v1308 = vpop.f32.mrb[0].mxu0
        %v1309 = vadd.f32 0.0, %v1308
        %v1310 = vpop.f32.mrb[0].mxu0
        %1311 = vmatprep.mubr.f32.mxu0 0.0
        %1312 = vmatmul.mubr.f32.gmra.mrb[0].mxu0 %v1216
        %v1313 = vpop.f32.mrb[0].mxu0
        %v1314 = vadd.f32 0.0, %v1313
        %v1315 = vpop.f32.mrb[0].mxu0
        %1316 = vmatprep.mubr.f32.mxu0 0.0
        %1317 = vmatmul.mubr.f32.gmra.mrb[0].mxu0 %v1217
        %v1318 = vpop.f32.mrb[0].mxu0
        %v1319 = vadd.f32 0.0, %v1318
        %v1320 = vpop.f32.mrb[0].mxu0
        %1321 = vdwg.mxu0
        %v1322 = vadd.f32 %v1198, %v1304
        %v1323 = vadd.f32 %v1199, %v1309
        %v1324 = vadd.f32 %v1200, %v1314
        %v1325 = vadd.f32 %v1201, %v1319
        %v1326 = vld [vmem:[%s1077 + $0x1] sm:$0xff]
        %v1327 = vld [vmem:[%s1077 + $0x19] sm:$0xff]
        %v1328 = vld [vmem:[%s1077 + $0x31] sm:$0xff]
        %v1329 = vld [vmem:[%s1077 + $0x49] sm:$0xff]
        %v1330 = vsub.f32 %v1326, %v336
        %v1331 = vsub.f32 %v1327, %v336
        %v1332 = vsub.f32 %v1328, %v336
        %v1333 = vsub.f32 %v1329, %v336
        %v1334 = vmul.f32 %v1330, %v346
        %v1335 = vmul.f32 %v1331, %v346
        %v1336 = vmul.f32 %v1332, %v346
        %v1337 = vmul.f32 %v1333, %v346
        %v1338 = vmax.f32 %v1334, 0.0
        %v1339 = vmax.f32 %v1335, 0.0
        %v1340 = vmax.f32 %v1336, 0.0
        %v1341 = vmax.f32 %v1337, 0.0
        %s1342 = sadd.s32 %s356, 8
        %s1343 = smul.u32 %s1342, 128
        %s1344 = scalar_lea.vmem %s3, %s1343
        %v1345 = vld [vmem:[%s1344] sm:$0xff]
        %v1346 = vld [vmem:[%s1344 + $0x8] sm:$0xff]
        %v1347 = vld [vmem:[%s1344 + $0x10] sm:$0xff]
        %v1348 = vld [vmem:[%s1344 + $0x18] sm:$0xff]
        %v1349 = vld [vmem:[%s1344 + $0x20] sm:$0xff]
        %v1350 = vld [vmem:[%s1344 + $0x28] sm:$0xff]
        %v1351 = vld [vmem:[%s1344 + $0x30] sm:$0xff]
        %v1352 = vld [vmem:[%s1344 + $0x38] sm:$0xff]
        %v1353 = vld [vmem:[%s1344 + $0x40] sm:$0xff]
        %v1354 = vld [vmem:[%s1344 + $0x48] sm:$0xff]
        %v1355 = vld [vmem:[%s1344 + $0x50] sm:$0xff]
        %v1356 = vld [vmem:[%s1344 + $0x58] sm:$0xff]
        %v1357 = vld [vmem:[%s1344 + $0x60] sm:$0xff]
        %v1358 = vld [vmem:[%s1344 + $0x68] sm:$0xff]
        %v1359 = vld [vmem:[%s1344 + $0x70] sm:$0xff]
        %v1360 = vld [vmem:[%s1344 + $0x78] sm:$0xff]
        %1361 = vmatprep.subr.mxu0 0.0
        %1362 = vmatpush1.msra.mxu0 %v1345
        %1363 = vmatprep.subr.mxu0 0.0
        %1364 = vmatpush1.msra.mxu0 %v1346
        %1365 = vmatprep.subr.mxu0 0.0
        %1366 = vmatpush1.msra.mxu0 %v1347
        %1367 = vmatprep.subr.mxu0 0.0
        %1368 = vmatpush1.msra.mxu0 %v1348
        %1369 = vmatprep.subr.mxu0 0.0
        %1370 = vmatpush1.msra.mxu0 %v1349
        %1371 = vmatprep.subr.mxu0 0.0
        %1372 = vmatpush1.msra.mxu0 %v1350
        %1373 = vmatprep.subr.mxu0 0.0
        %1374 = vmatpush1.msra.mxu0 %v1351
        %1375 = vmatprep.subr.mxu0 0.0
        %1376 = vmatpush1.msra.mxu0 %v1352
        %1377 = vmatprep.subr.mxu0 0.0
        %1378 = vmatpush1.msra.mxu0 %v1353
        %1379 = vmatprep.subr.mxu0 0.0
        %1380 = vmatpush1.msra.mxu0 %v1354
        %1381 = vmatprep.subr.mxu0 0.0
        %1382 = vmatpush1.msra.mxu0 %v1355
        %1383 = vmatprep.subr.mxu0 0.0
        %1384 = vmatpush1.msra.mxu0 %v1356
        %1385 = vmatprep.subr.mxu0 0.0
        %1386 = vmatpush1.msra.mxu0 %v1357
        %1387 = vmatprep.subr.mxu0 0.0
        %1388 = vmatpush1.msra.mxu0 %v1358
        %1389 = vmatprep.subr.mxu0 0.0
        %1390 = vmatpush1.msra.mxu0 %v1359
        %1391 = vmatprep.subr.mxu0 0.0
        %1392 = vmatpush1.msra.mxu0 %v1360
        %1393 = vmatprep.subr.mxu0 0.0
        %1394 = vmatpush1.msra.mxu0 0.0
        %1395 = vmatprep.subr.mxu0 0.0
        %1396 = vmatpush1.msra.mxu0 0.0
        %1397 = vmatprep.subr.mxu0 0.0
        %1398 = vmatpush1.msra.mxu0 0.0
        %1399 = vmatprep.subr.mxu0 0.0
        %1400 = vmatpush1.msra.mxu0 0.0
        %1401 = vmatprep.subr.mxu0 0.0
        %1402 = vmatpush1.msra.mxu0 0.0
        %1403 = vmatprep.subr.mxu0 0.0
        %1404 = vmatpush1.msra.mxu0 0.0
        %1405 = vmatprep.subr.mxu0 0.0
        %1406 = vmatpush1.msra.mxu0 0.0
        %1407 = vmatprep.subr.mxu0 0.0
        %1408 = vmatpush1.msra.mxu0 0.0
        %1409 = vmatprep.subr.mxu0 0.0
        %1410 = vmatpush1.msra.mxu0 0.0
        %1411 = vmatprep.subr.mxu0 0.0
        %1412 = vmatpush1.msra.mxu0 0.0
        %1413 = vmatprep.subr.mxu0 0.0
        %1414 = vmatpush1.msra.mxu0 0.0
        %1415 = vmatprep.subr.mxu0 0.0
        %1416 = vmatpush1.msra.mxu0 0.0
        %1417 = vmatprep.subr.mxu0 0.0
        %1418 = vmatpush1.msra.mxu0 0.0
        %1419 = vmatprep.subr.mxu0 0.0
        %1420 = vmatpush1.msra.mxu0 0.0
        %1421 = vmatprep.subr.mxu0 0.0
        %1422 = vmatpush1.msra.mxu0 0.0
        %1423 = vmatprep.subr.mxu0 0.0
        %1424 = vmatpush1.msra.mxu0 0.0
        %1425 = vmatprep.mubr.f32.mxu0 0.0
        %1426 = vmatmul.mubr.f32.gmra.mrb[0].mxu0 %v1338
        %v1427 = vpop.f32.mrb[0].mxu0
        %v1428 = vadd.f32 0.0, %v1427
        %v1429 = vpop.f32.mrb[0].mxu0
        %1430 = vmatprep.mubr.f32.mxu0 0.0
        %1431 = vmatmul.mubr.f32.gmra.mrb[0].mxu0 %v1339
        %v1432 = vpop.f32.mrb[0].mxu0
        %v1433 = vadd.f32 0.0, %v1432
        %v1434 = vpop.f32.mrb[0].mxu0
        %1435 = vmatprep.mubr.f32.mxu0 0.0
        %1436 = vmatmul.mubr.f32.gmra.mrb[0].mxu0 %v1340
        %v1437 = vpop.f32.mrb[0].mxu0
        %v1438 = vadd.f32 0.0, %v1437
        %v1439 = vpop.f32.mrb[0].mxu0
        %1440 = vmatprep.mubr.f32.mxu0 0.0
        %1441 = vmatmul.mubr.f32.gmra.mrb[0].mxu0 %v1341
        %v1442 = vpop.f32.mrb[0].mxu0
        %v1443 = vadd.f32 0.0, %v1442
        %v1444 = vpop.f32.mrb[0].mxu0
        %1445 = vdwg.mxu0
        %v1446 = vadd.f32 %v1322, %v1428
        %v1447 = vadd.f32 %v1323, %v1433
        %v1448 = vadd.f32 %v1324, %v1438
        %v1449 = vadd.f32 %v1325, %v1443
        %v1450 = vld [vmem:[#allocation2] sm:$0xff]
        %v1451 = vld [vmem:[#allocation2 + $0x8] sm:$0xff]
        %v1452 = vld [vmem:[#allocation2 + $0x10] sm:$0xff]
        %v1453 = vld [vmem:[#allocation2 + $0x18] sm:$0xff]
        %v1454 = vadd.f32 %v1450, %v1446
        %v1455 = vadd.f32 %v1451, %v1447
        %v1456 = vadd.f32 %v1452, %v1448
        %v1457 = vadd.f32 %v1453, %v1449
        %1458 = vst [vmem:[#allocation2] sm:$0xff] %v1454
        %1459 = vst [vmem:[#allocation2 + $0x8] sm:$0xff] %v1455
        %1460 = vst [vmem:[#allocation2 + $0x10] sm:$0xff] %v1456
        %1461 = vst [vmem:[#allocation2 + $0x18] sm:$0xff] %v1457
      $region48: #{down_block_forward.5} parent=39 // pred_fallthru
        _
      %p1462 = scmp.eq.s32.totalorder %s23, 2
      // Predicated region
      $region49: #{down_block_forward.5} parent=39 // pred_check
        %p1463 = pneg %p1462
      $region50: #{down_block_forward.5} parent=39 // pred_check_branch
        %1465 = sbr.rel (%p1463) target = $region52
      $region51: #{down_block_forward.5} parent=39 // pred_region
        %v1466 = vld [vmem:[#allocation2] sm:$0xff]
        %v1467 = vld [vmem:[#allocation2 + $0x8] sm:$0xff]
        %v1468 = vld [vmem:[#allocation2 + $0x10] sm:$0xff]
        %v1469 = vld [vmem:[#allocation2 + $0x18] sm:$0xff]
        %v1470 = vld [vmem:[%s4] sm:$0x1]
        %v1472 = vlaneseq
        %v1473 = vshrl.u32 %v1472, 7
        %v1474 = vsub.s32 0, %v1473
        %v1475 = vrot.slane %v1470, %v1474
        %v1477 = vadd.f32 %v1466, %v1475
        %v1478 = vadd.f32 %v1467, %v1475
        %v1479 = vadd.f32 %v1468, %v1475
        %v1480 = vadd.f32 %v1469, %v1475
        %1481 = vst [vmem:[%s307] sm:$0xff] %v1477
        %1482 = vst [vmem:[%s307 + $0x8] sm:$0xff] %v1478
        %1483 = vst [vmem:[%s307 + $0x10] sm:$0xff] %v1479
        %1484 = vst [vmem:[%s307 + $0x18] sm:$0xff] %v1480
      $region52: #{down_block_forward.5} parent=39 // pred_fallthru
        _
      %s1485 = smul.u32 %s21, 4
      %s1486 = sadd.s32 %s1485, %s22
      %p1487 = scmp.lt.s32.totalorder %s1486, 7
      %s1488 = scalar_select %p1487, %s1486, 7
      %s1489 = smul.addr %s1488, 4
      %s1490 = smul.addr %s1489, 8
      %s1491 = scalar_lea.vmem %s5, %s1490
      // Predicated region
      $region53: #{down_block_forward.5} parent=39 // pred_check
        %p1492 = pneg %p185
      $region54: #{down_block_forward.5} parent=39 // pred_check_branch
        %1494 = sbr.rel (%p1492) target = $region56
      $region55: #{down_block_forward.5} parent=39 // pred_region
        %s1495 = smul.u32 %s21, 4
        %s1496 = sadd.s32 %s1495, %s22
      $region56: #{down_block_forward.5} parent=39 // pred_fallthru
        _
    $region40: #{down_block_forward.5} parent=5 // pred_fallthru
      _
    %p1497 = scmp.le.s32.totalorder 2, %s11
    // Predicated region
    $region57: #{down_block_forward.5} parent=5 // pred_check
      %p1498 = pneg %p1497
    $region58: #{down_block_forward.5} parent=5 // pred_check_branch
      %1500 = sbr.rel (%p1498) target = $region60
    $region59: #{down_block_forward.5} parent=5 // pred_region
      %s1501 = ssub.s32 %s11, 2
      // Predicated region
      $region61: #{down_block_forward.5} parent=59 // pred_check
        %p1502 = pneg %p191
      $region62: #{down_block_forward.5} parent=59 // pred_check_branch
        %1504 = sbr.rel (%p1502) target = $region64
      $region63: #{down_block_forward.5} parent=59 // pred_region
        %s1505 = smul.u32 %s24, 4
        %s1506 = sadd.s32 %s1505, %s25
        %p1507 = scmp.lt.s32.totalorder %s1506, 7
        %s1508 = scalar_select %p1507, %s1506, 7
        %s1509 = smul.addr %s1508, 4
        %s1510 = smul.addr %s1509, 8
        %s1511 = scalar_lea.vmem %s5, %s1510
      $region64: #{down_block_forward.5} parent=59 // pred_fallthru
        _
    $region60: #{down_block_forward.5} parent=5 // pred_fallthru
      _
  $region6: #{down_block_forward.5} parent=0 // loop_footer
    %s15 = sadd.s32 1, %s11
  $region7: #{down_block_forward.5} parent=0 // loop_footer_branch
    %10 = sbr.rel target = $region3
  $region8: #{down_block_forward.5} parent=0 // loop_exit
    _

// kernel: down_block_forward.7
$region0: #{down_block_forward.7}
  #allocation0 [shape = 'u32[]', space=smem, size = 0x4, offset = 0x4, fixed_abs, tag = 'smem constant byte address 0x4 - core index']
  #allocation1 [shape = 'u32[144,128]{1,0:T(1,128)}', space=vmem, size = 0x12000, scoped, tag = 'internal scratch']
  #allocation2 [shape = 'f32[32,128]{1,0:T(8,128)}', space=vmem, size = 0x4000, scoped, tag = 'scratch operand']
  %s0 = inlined_call_operand.vmem [shape: f32[2,1,128], index: 0, kind: input, shape index: {}]
  %s1 = inlined_call_operand.vmem [shape: f32[2,1,128], index: 1, kind: input, shape index: {}]
  %s2 = inlined_call_operand.vmem [shape: f32[12,6,10,128], index: 2, kind: input, shape index: {}]
  %s3 = inlined_call_operand.vmem [shape: f32[27,128,128], index: 3, kind: input, shape index: {}]
  %s4 = inlined_call_operand.vmem [shape: f32[1,128], index: 4, kind: input, shape index: {}]
  %s5 = inlined_call_operand.vmem [shape: f32[8,4,8,128], index: 5, kind: input, shape index: {}]
  %s6 = inlined_call_operand.vmem [shape: f32[128,128], index: 6, kind: input, shape index: {}]
  %s7 = inlined_call_operand.vmem [shape: f32[8,32,128], index: 7, kind: output, shape index: {}]
  %s8 = sld [smem:[#allocation0]]
  $region73: #{down_block_forward.7} parent=0
    _
  %s10 = ssub.s32 1, %s8
  %s11 = scalar_select 0, %s10, %s8
  loop: start=0, step=1, limit=26
  $region2: #{down_block_forward.7} parent=0 // loop_pre_header
    _
  $region3: #{down_block_forward.7} parent=0 // loop_header
    %s13 = sphi 0, %s17
    %p14 = scmp.ge.s32.totalorder %s13, 26
    %s20 = sphi 0, %s39
    %s21 = sphi 0, %s35
    %s22 = sphi 0, %s31
    %s23 = sphi 0, %s20
    %s24 = sphi 0, %s21
    %s25 = sphi 0, %s22
    %s26 = sphi 0, %s23
    %s27 = sphi 0, %s24
    %s28 = sphi 0, %s25
    %s42 = sphi 0, %s44
    %s45 = sphi 0, %s42
    %s46 = sphi 0, %s45
    %s62 = sphi 0, %s46
    %s68 = sphi 0, %s70
    %s71 = sphi 0, %s68
    %s72 = sphi 0, %s71
    %s88 = sphi 0, %s72
    %s100 = sphi 0, %s102
    %s103 = sphi 0, %s100
    %s104 = sphi 0, %s103
    %s120 = sphi 0, %s104
    %s124 = sphi 0, %s124
    %s126 = sphi 0, %s124
    %s127 = sphi 0, %s126
    %s141 = sphi 0, %s127
    %s145 = sphi 0, %s145
    %s147 = sphi 0, %s145
    %s148 = sphi 0, %s147
    %s162 = sphi 0, %s148
    %s172 = sphi 0, %s174
    %s175 = sphi 0, %s172
    %s176 = sphi 0, %s175
    %s192 = sphi 0, %s176
    %s196 = sphi 0, %s196
    %s198 = sphi 0, %s196
    %s199 = sphi 0, %s198
    %s213 = sphi 0, %s199
    %s223 = sphi 0, %s225
    %s226 = sphi 0, %s223
    %s227 = sphi 0, %s226
    %s243 = sphi 0, %s227
  $region4: #{down_block_forward.7} parent=0 // loop_header_branch
    %16 = sbr.rel (%p14) target = $region8
  $region5: #{down_block_forward.7} parent=0 // loop_body
    %s18 = ssub.s32 %s13, 1
    %s19 = ssub.s32 %s13, 2
    %s29 = sadd.s32 1, %s22
    %p30 = scmp.ge.s32.totalorder %s29, 3
    %s31 = scalar_select %p30, 0, %s29
    %s32 = sadd.s32 1, %s21
    %s33 = scalar_select %p30, %s32, %s21
    %p34 = scmp.ge.s32.totalorder %s33, 4
    %s35 = scalar_select %p34, 0, %s33
    %s36 = sadd.s32 1, %s20
    %s37 = scalar_select %p34, %s36, %s20
    %p38 = scmp.ge.s32.totalorder %s37, 2
    %s39 = scalar_select %p38, 0, %s37
    %s40 = ssub.s32 %s20, %s39
    %p41 = scmp.eq.s32.totalorder %s40, 0
    %s43 = sadd.s32 %s42, 1
    %s44 = scalar_select %p41, %s42, %s43
    %p47 = pneg %p41
    %p48 = scmp.eq.s32.totalorder %s13, 23
    %p49 = por %p47, %p48
    %p50 = scmp.ne.s32.totalorder %s42, %s45
    %p51 = scmp.eq.s32.totalorder %s13, 0
    %p52 = por %p50, %p51
    %p53 = scmp.ne.s32.totalorder %s42, %s45
    %p54 = scmp.eq.s32.totalorder %s18, 23
    %p55 = por %p53, %p54
    %p56 = scmp.ne.s32.totalorder %s45, %s46
    %p57 = scmp.eq.s32.totalorder %s18, 0
    %p58 = por %p56, %p57
    %p59 = scmp.ne.s32.totalorder %s45, %s46
    %p60 = scmp.eq.s32.totalorder %s19, 23
    %p61 = por %p59, %p60
    %p63 = scmp.ne.s32.totalorder %s46, %s62
    %p64 = scmp.eq.s32.totalorder %s19, 0
    %p65 = por %p63, %p64
    %s66 = ssub.s32 %s20, %s39
    %p67 = scmp.eq.s32.totalorder %s66, 0
    %s69 = sadd.s32 %s68, 1
    %s70 = scalar_select %p67, %s68, %s69
    %p73 = pneg %p67
    %p74 = scmp.eq.s32.totalorder %s13, 23
    %p75 = por %p73, %p74
    %p76 = scmp.ne.s32.totalorder %s68, %s71
    %p77 = scmp.eq.s32.totalorder %s13, 0
    %p78 = por %p76, %p77
    %p79 = scmp.ne.s32.totalorder %s68, %s71
    %p80 = scmp.eq.s32.totalorder %s18, 23
    %p81 = por %p79, %p80
    %p82 = scmp.ne.s32.totalorder %s71, %s72
    %p83 = scmp.eq.s32.totalorder %s18, 0
    %p84 = por %p82, %p83
    %p85 = scmp.ne.s32.totalorder %s71, %s72
    %p86 = scmp.eq.s32.totalorder %s19, 23
    %p87 = por %p85, %p86
    %p89 = scmp.ne.s32.totalorder %s72, %s88
    %p90 = scmp.eq.s32.totalorder %s19, 0
    %p91 = por %p89, %p90
    %s92 = smul.u32 %s20, 6
    %s93 = sadd.s32 %s92, %s21
    %s94 = sadd.s32 %s93, %s22
    %s95 = smul.u32 %s39, 6
    %s96 = sadd.s32 %s95, %s35
    %s97 = sadd.s32 %s96, %s31
    %s98 = ssub.s32 %s94, %s97
    %p99 = scmp.eq.s32.totalorder %s98, 0
    %s101 = sadd.s32 %s100, 1
    %s102 = scalar_select %p99, %s100, %s101
    %p105 = pneg %p99
    %p106 = scmp.eq.s32.totalorder %s13, 23
    %p107 = por %p105, %p106
    %p108 = scmp.ne.s32.totalorder %s100, %s103
    %p109 = scmp.eq.s32.totalorder %s13, 0
    %p110 = por %p108, %p109
    %p111 = scmp.ne.s32.totalorder %s100, %s103
    %p112 = scmp.eq.s32.totalorder %s18, 23
    %p113 = por %p111, %p112
    %p114 = scmp.ne.s32.totalorder %s103, %s104
    %p115 = scmp.eq.s32.totalorder %s18, 0
    %p116 = por %p114, %p115
    %p117 = scmp.ne.s32.totalorder %s103, %s104
    %p118 = scmp.eq.s32.totalorder %s19, 23
    %p119 = por %p117, %p118
    %p121 = scmp.ne.s32.totalorder %s104, %s120
    %p122 = scmp.eq.s32.totalorder %s19, 0
    %p123 = por %p121, %p122
    %s125 = sadd.s32 %s124, 1
    %p128 = scmp.eq.s32.totalorder %s13, 23
    %p129 = scmp.ne.s32.totalorder %s124, %s126
    %p130 = scmp.eq.s32.totalorder %s13, 0
    %p131 = por %p129, %p130
    %p132 = scmp.ne.s32.totalorder %s124, %s126
    %p133 = scmp.eq.s32.totalorder %s18, 23
    %p134 = por %p132, %p133
    %p135 = scmp.ne.s32.totalorder %s126, %s127
    %p136 = scmp.eq.s32.totalorder %s18, 0
    %p137 = por %p135, %p136
    %p138 = scmp.ne.s32.totalorder %s126, %s127
    %p139 = scmp.eq.s32.totalorder %s19, 23
    %p140 = por %p138, %p139
    %p142 = scmp.ne.s32.totalorder %s127, %s141
    %p143 = scmp.eq.s32.totalorder %s19, 0
    %p144 = por %p142, %p143
    %s146 = sadd.s32 %s145, 1
    %p149 = scmp.eq.s32.totalorder %s13, 23
    %p150 = scmp.ne.s32.totalorder %s145, %s147
    %p151 = scmp.eq.s32.totalorder %s13, 0
    %p152 = por %p150, %p151
    %p153 = scmp.ne.s32.totalorder %s145, %s147
    %p154 = scmp.eq.s32.totalorder %s18, 23
    %p155 = por %p153, %p154
    %p156 = scmp.ne.s32.totalorder %s147, %s148
    %p157 = scmp.eq.s32.totalorder %s18, 0
    %p158 = por %p156, %p157
    %p159 = scmp.ne.s32.totalorder %s147, %s148
    %p160 = scmp.eq.s32.totalorder %s19, 23
    %p161 = por %p159, %p160
    %p163 = scmp.ne.s32.totalorder %s148, %s162
    %p164 = scmp.eq.s32.totalorder %s19, 0
    %p165 = por %p163, %p164
    %s166 = smul.u32 %s20, 4
    %s167 = sadd.s32 %s166, %s21
    %s168 = smul.u32 %s39, 4
    %s169 = sadd.s32 %s168, %s35
    %s170 = ssub.s32 %s167, %s169
    %p171 = scmp.eq.s32.totalorder %s170, 0
    %s173 = sadd.s32 %s172, 1
    %s174 = scalar_select %p171, %s172, %s173
    %p177 = pneg %p171
    %p178 = scmp.eq.s32.totalorder %s13, 23
    %p179 = por %p177, %p178
    %p180 = scmp.ne.s32.totalorder %s172, %s175
    %p181 = scmp.eq.s32.totalorder %s13, 0
    %p182 = por %p180, %p181
    %p183 = scmp.ne.s32.totalorder %s172, %s175
    %p184 = scmp.eq.s32.totalorder %s18, 23
    %p185 = por %p183, %p184
    %p186 = scmp.ne.s32.totalorder %s175, %s176
    %p187 = scmp.eq.s32.totalorder %s18, 0
    %p188 = por %p186, %p187
    %p189 = scmp.ne.s32.totalorder %s175, %s176
    %p190 = scmp.eq.s32.totalorder %s19, 23
    %p191 = por %p189, %p190
    %p193 = scmp.ne.s32.totalorder %s176, %s192
    %p194 = scmp.eq.s32.totalorder %s19, 0
    %p195 = por %p193, %p194
    %s197 = sadd.s32 %s196, 1
    %p200 = scmp.eq.s32.totalorder %s13, 23
    %p201 = scmp.ne.s32.totalorder %s196, %s198
    %p202 = scmp.eq.s32.totalorder %s13, 0
    %p203 = por %p201, %p202
    %p204 = scmp.ne.s32.totalorder %s196, %s198
    %p205 = scmp.eq.s32.totalorder %s18, 23
    %p206 = por %p204, %p205
    %p207 = scmp.ne.s32.totalorder %s198, %s199
    %p208 = scmp.eq.s32.totalorder %s18, 0
    %p209 = por %p207, %p208
    %p210 = scmp.ne.s32.totalorder %s198, %s199
    %p211 = scmp.eq.s32.totalorder %s19, 23
    %p212 = por %p210, %p211
    %p214 = scmp.ne.s32.totalorder %s199, %s213
    %p215 = scmp.eq.s32.totalorder %s19, 0
    %p216 = por %p214, %p215
    %s217 = smul.u32 %s20, 4
    %s218 = sadd.s32 %s217, %s21
    %s219 = smul.u32 %s39, 4
    %s220 = sadd.s32 %s219, %s35
    %s221 = ssub.s32 %s218, %s220
    %p222 = scmp.eq.s32.totalorder %s221, 0
    %s224 = sadd.s32 %s223, 1
    %s225 = scalar_select %p222, %s223, %s224
    %p228 = pneg %p222
    %p229 = scmp.eq.s32.totalorder %s13, 23
    %p230 = por %p228, %p229
    %p231 = scmp.ne.s32.totalorder %s223, %s226
    %p232 = scmp.eq.s32.totalorder %s13, 0
    %p233 = por %p231, %p232
    %p234 = scmp.ne.s32.totalorder %s223, %s226
    %p235 = scmp.eq.s32.totalorder %s18, 23
    %p236 = por %p234, %p235
    %p237 = scmp.ne.s32.totalorder %s226, %s227
    %p238 = scmp.eq.s32.totalorder %s18, 0
    %p239 = por %p237, %p238
    %p240 = scmp.ne.s32.totalorder %s226, %s227
    %p241 = scmp.eq.s32.totalorder %s19, 23
    %p242 = por %p240, %p241
    %p244 = scmp.ne.s32.totalorder %s227, %s243
    %p245 = scmp.eq.s32.totalorder %s19, 0
    %p246 = por %p244, %p245
    %p247 = scmp.le.s32.totalorder 1, %s13
    %p248 = scmp.lt.s32.totalorder %s13, 25
    %p249 = pnand %p247, %p248
    %p250 = pneg %p249
    // Predicated region
    $region9: #{down_block_forward.7} parent=5 // pred_check
      _
    $region10: #{down_block_forward.7} parent=5 // pred_check_branch
      %252 = sbr.rel (%p249) target = $region12
    $region11: #{down_block_forward.7} parent=5 // pred_region
      %s253 = ssub.s32 %s13, 1
      // Predicated region
      $region13: #{down_block_forward.7} parent=11 // pred_check
        %p254 = pneg %p137
      $region14: #{down_block_forward.7} parent=11 // pred_check_branch
        %256 = sbr.rel (%p254) target = $region16
      $region15: #{down_block_forward.7} parent=11 // pred_region
        _
      $region16: #{down_block_forward.7} parent=11 // pred_fallthru
        _
      // Predicated region
      $region17: #{down_block_forward.7} parent=11 // pred_check
        %p257 = pneg %p158
      $region18: #{down_block_forward.7} parent=11 // pred_check_branch
        %259 = sbr.rel (%p257) target = $region20
      $region19: #{down_block_forward.7} parent=11 // pred_region
        _
      $region20: #{down_block_forward.7} parent=11 // pred_fallthru
        _
      // Predicated region
      $region21: #{down_block_forward.7} parent=11 // pred_check
        %p260 = pneg %p209
      $region22: #{down_block_forward.7} parent=11 // pred_check_branch
        %262 = sbr.rel (%p260) target = $region24
      $region23: #{down_block_forward.7} parent=11 // pred_region
        _
      $region24: #{down_block_forward.7} parent=11 // pred_fallthru
        _
    $region12: #{down_block_forward.7} parent=5 // pred_fallthru
      _
    %p263 = scmp.lt.s32.totalorder %s13, 24
    // Predicated region
    $region25: #{down_block_forward.7} parent=5 // pred_check
      %p264 = pneg %p263
    $region26: #{down_block_forward.7} parent=5 // pred_check_branch
      %266 = sbr.rel (%p264) target = $region28
    $region27: #{down_block_forward.7} parent=5 // pred_region
      // Predicated region
      $region29: #{down_block_forward.7} parent=27 // pred_check
        %p267 = pneg %p52
      $region30: #{down_block_forward.7} parent=27 // pred_check_branch
        %269 = sbr.rel (%p267) target = $region32
      $region31: #{down_block_forward.7} parent=27 // pred_region
        %p270 = scmp.lt.s32.totalorder %s20, 1
        %s271 = scalar_select %p270, %s20, 1
        %s272 = scalar_lea.vmem %s0, %s271
      $region32: #{down_block_forward.7} parent=27 // pred_fallthru
        _
      // Predicated region
      $region33: #{down_block_forward.7} parent=27 // pred_check
        %p273 = pneg %p78
      $region34: #{down_block_forward.7} parent=27 // pred_check_branch
        %275 = sbr.rel (%p273) target = $region36
      $region35: #{down_block_forward.7} parent=27 // pred_region
        %p276 = scmp.lt.s32.totalorder %s20, 1
        %s277 = scalar_select %p276, %s20, 1
        %s278 = scalar_lea.vmem %s1, %s277
      $region36: #{down_block_forward.7} parent=27 // pred_fallthru
        _
      // Predicated region
      $region37: #{down_block_forward.7} parent=27 // pred_check
        %p279 = pneg %p110
      $region38: #{down_block_forward.7} parent=27 // pred_check_branch
        %281 = sbr.rel (%p279) target = $region40
      $region39: #{down_block_forward.7} parent=27 // pred_region
        %s282 = smul.u32 %s20, 6
        %s283 = sadd.s32 %s282, %s21
        %s284 = sadd.s32 %s283, %s22
        %p285 = scmp.lt.s32.totalorder %s284, 11
        %s286 = scalar_select %p285, %s284, 11
        %s287 = smul.addr %s286, 12
        %s288 = smul.addr %s287, 8
        %s289 = scalar_lea.vmem %s2, %s288
        %s290 = smul.u32 %s20, 6
        %s291 = sadd.s32 %s290, %s21
        %s292 = sadd.s32 %s291, %s22
      $region40: #{down_block_forward.7} parent=27 // pred_fallthru
        _
      // Predicated region
      $region41: #{down_block_forward.7} parent=27 // pred_check
        %p293 = pneg %p182
      $region42: #{down_block_forward.7} parent=27 // pred_check_branch
        %295 = sbr.rel (%p293) target = $region44
      $region43: #{down_block_forward.7} parent=27 // pred_region
        %s296 = smul.u32 %s20, 4
        %s297 = sadd.s32 %s296, %s21
        %p298 = scmp.lt.s32.totalorder %s297, 7
        %s299 = scalar_select %p298, %s297, 7
        %s300 = smul.addr %s299, 4
        %s301 = smul.addr %s300, 8
        %s302 = scalar_lea.vmem %s5, %s301
        %s303 = smul.u32 %s20, 4
        %s304 = sadd.s32 %s303, %s21
      $region44: #{down_block_forward.7} parent=27 // pred_fallthru
        _
    $region28: #{down_block_forward.7} parent=5 // pred_fallthru
      _
    %p305 = scmp.le.s32.totalorder 1, %s13
    %p306 = scmp.lt.s32.totalorder %s13, 25
    %p307 = pnand %p305, %p306
    %p308 = pneg %p307
    // Predicated region
    $region45: #{down_block_forward.7} parent=5 // pred_check
      _
    $region46: #{down_block_forward.7} parent=5 // pred_check_branch
      %310 = sbr.rel (%p307) target = $region48
    $region47: #{down_block_forward.7} parent=5 // pred_region
      %s311 = ssub.s32 %s13, 1
      %p312 = scmp.lt.s32.totalorder %s23, 1
      %s313 = scalar_select %p312, %s23, 1
      %s314 = scalar_lea.vmem %s0, %s313
      %p315 = pneg %p58
      %p316 = pneg %p55
      %p317 = scmp.lt.s32.totalorder %s23, 1
      %s318 = scalar_select %p317, %s23, 1
      %s319 = scalar_lea.vmem %s1, %s318
      %p320 = pneg %p84
      %p321 = pneg %p81
      %s322 = smul.u32 %s23, 6
      %s323 = sadd.s32 %s322, %s24
      %s324 = sadd.s32 %s323, %s25
      %p325 = scmp.lt.s32.totalorder %s324, 11
      %s326 = scalar_select %p325, %s324, 11
      %s327 = smul.addr %s326, 12
      %s328 = smul.addr %s327, 8
      %s329 = scalar_lea.vmem %s2, %s328
      %p330 = pneg %p116
      %p331 = pneg %p113
      %p332 = pneg %p137
      %p333 = pneg %p134
      %p334 = pneg %p158
      %p335 = pneg %p155
      %s336 = smul.u32 %s23, 4
      %s337 = sadd.s32 %s336, %s24
      %p338 = scmp.lt.s32.totalorder %s337, 7
      %s339 = scalar_select %p338, %s337, 7
      %s340 = smul.addr %s339, 4
      %s341 = smul.addr %s340, 8
      %s342 = scalar_lea.vmem %s5, %s341
      %p343 = pneg %p188
      %p344 = pneg %p185
      %p345 = pneg %p209
      %p346 = pneg %p206
      %p347 = pneg %p239
      %p348 = pneg %p236
      %s349 = smul.u32 %s23, 4
      %s350 = sadd.s32 %s349, %s24
      %p351 = scmp.lt.s32.totalorder %s350, 7
      %s352 = scalar_select %p351, %s350, 7
      %s353 = smul.addr %s352, 4
      %s354 = smul.addr %s353, 8
      %s355 = scalar_lea.vmem %s7, %s354
      %p356 = scmp.lt.s32.totalorder %s23, 1
      %s357 = scalar_select %p356, %s23, 1
      %s358 = scalar_lea.vmem %s0, %s357
      %p359 = scmp.lt.s32.totalorder %s23, 1
      %s360 = scalar_select %p359, %s23, 1
      %s361 = scalar_lea.vmem %s1, %s360
      %s362 = smul.u32 %s23, 6
      %s363 = sadd.s32 %s362, %s24
      %s364 = sadd.s32 %s363, %s25
      %p365 = scmp.lt.s32.totalorder %s364, 11
      %s366 = scalar_select %p365, %s364, 11
      %s367 = smul.addr %s366, 12
      %s368 = smul.addr %s367, 8
      %s369 = scalar_lea.vmem %s2, %s368
      %s370 = smul.u32 %s23, 6
      %s371 = sadd.s32 %s370, %s24
      %s372 = sadd.s32 %s371, %s25
      %s373 = smul.u32 %s23, 4
      %s374 = sadd.s32 %s373, %s24
      %p375 = scmp.lt.s32.totalorder %s374, 7
      %s376 = scalar_select %p375, %s374, 7
      %s377 = smul.addr %s376, 4
      %s378 = smul.addr %s377, 8
      %s379 = scalar_lea.vmem %s5, %s378
      %s380 = smul.u32 %s23, 4
      %s381 = sadd.s32 %s380, %s24
      %s382 = smul.u32 %s23, 4
      %s383 = sadd.s32 %s382, %s24
      %p384 = scmp.lt.s32.totalorder %s383, 7
      %s385 = scalar_select %p384, %s383, 7
      %s386 = smul.addr %s385, 4
      %s387 = smul.addr %s386, 8
      %s388 = scalar_lea.vmem %s7, %s387
      %s389 = smul.u32 %s23, 4
      %s390 = sadd.s32 %s389, %s24
      %p391 = scmp.eq.s32.totalorder %s25, 0
      // Predicated region
      $region49: #{down_block_forward.7} parent=47 // pred_check
        %p392 = pneg %p391
      $region50: #{down_block_forward.7} parent=47 // pred_check_branch
        %394 = sbr.rel (%p392) target = $region52
      $region51: #{down_block_forward.7} parent=47 // pred_region
        %395 = vst [vmem:[#allocation2] sm:$0xff] 0.0
        %396 = vst [vmem:[#allocation2 + $0x8] sm:$0xff] 0.0
        %397 = vst [vmem:[#allocation2 + $0x10] sm:$0xff] 0.0
        %398 = vst [vmem:[#allocation2 + $0x18] sm:$0xff] 0.0
      $region52: #{down_block_forward.7} parent=47 // pred_fallthru
        _
      %s399 = sadd.s32 %s24, %s25
      %p400 = scmp.gt.s32.totalorder %s399, 0
      %p401 = scmp.lt.s32.totalorder %s399, 5
      %p402 = pnand %p400, %p401
      %p403 = pneg %p402
      // Predicated region
      $region53: #{down_block_forward.7} parent=47 // pred_check
        _
      $region54: #{down_block_forward.7} parent=47 // pred_check_branch
        %405 = sbr.rel (%p402) target = $region56
      $region55: #{down_block_forward.7} parent=47 // pred_region
        %v406 = vld [vmem:[%s358] sm:$0x1]
        %v407 = vld [vmem:[%s361] sm:$0x1]
        %v408 = vld [vmem:[%s369] sm:$0xff]
        %v409 = vld [vmem:[%s369 + $0x10] sm:$0xff]
        %v410 = vld [vmem:[%s369 + $0x20] sm:$0xff]
        %v411 = vld [vmem:[%s369 + $0x30] sm:$0xff]
        %v413 = vlaneseq
        %v414 = vshrl.u32 %v413, 7
        %v415 = vsub.s32 0, %v414
        %v416 = vrot.slane %v406, %v415
        %v418 = vsub.f32 %v408, %v416
        %v419 = vsub.f32 %v409, %v416
        %v420 = vsub.f32 %v410, %v416
        %v421 = vsub.f32 %v411, %v416
        %v423 = vlaneseq
        %v424 = vshrl.u32 %v423, 7
        %v425 = vsub.s32 0, %v424
        %v426 = vrot.slane %v407, %v425
        %v428 = vmul.f32 %v418, %v426
        %v429 = vmul.f32 %v419, %v426
        %v430 = vmul.f32 %v420, %v426
        %v431 = vmul.f32 %v421, %v426
        %v432 = vmax.f32 %v428, 0.0
        %v433 = vmax.f32 %v429, 0.0
        %v434 = vmax.f32 %v430, 0.0
        %v435 = vmax.f32 %v431, 0.0
        %s436 = smul.u32 %s25, 9
        %s437 = smul.u32 %s436, 128
        %s438 = scalar_lea.vmem %s3, %s437
        %v439 = vld [vmem:[%s438] sm:$0xff]
        %v440 = vld [vmem:[%s438 + $0x8] sm:$0xff]
        %v441 = vld [vmem:[%s438 + $0x10] sm:$0xff]
        %v442 = vld [vmem:[%s438 + $0x18] sm:$0xff]
        %v443 = vld [vmem:[%s438 + $0x20] sm:$0xff]
        %v444 = vld [vmem:[%s438 + $0x28] sm:$0xff]
        %v445 = vld [vmem:[%s438 + $0x30] sm:$0xff]
        %v446 = vld [vmem:[%s438 + $0x38] sm:$0xff]
        %v447 = vld [vmem:[%s438 + $0x40] sm:$0xff]
        %v448 = vld [vmem:[%s438 + $0x48] sm:$0xff]
        %v449 = vld [vmem:[%s438 + $0x50] sm:$0xff]
        %v450 = vld [vmem:[%s438 + $0x58] sm:$0xff]
        %v451 = vld [vmem:[%s438 + $0x60] sm:$0xff]
        %v452 = vld [vmem:[%s438 + $0x68] sm:$0xff]
        %v453 = vld [vmem:[%s438 + $0x70] sm:$0xff]
        %v454 = vld [vmem:[%s438 + $0x78] sm:$0xff]
        %v455 = vld [vmem:[%s369 + $0x1] sm:$0xff]
        %v456 = vld [vmem:[%s369 + $0x11] sm:$0xff]
        %v457 = vld [vmem:[%s369 + $0x21] sm:$0xff]
        %v458 = vld [vmem:[%s369 + $0x31] sm:$0xff]
        %v459 = vsub.f32 %v455, %v416
        %v460 = vsub.f32 %v456, %v416
        %v461 = vsub.f32 %v457, %v416
        %v462 = vsub.f32 %v458, %v416
        %v463 = vmul.f32 %v459, %v426
        %v464 = vmul.f32 %v460, %v426
        %v465 = vmul.f32 %v461, %v426
        %v466 = vmul.f32 %v462, %v426
        %v467 = vmax.f32 %v463, 0.0
        %v468 = vmax.f32 %v464, 0.0
        %v469 = vmax.f32 %v465, 0.0
        %v470 = vmax.f32 %v466, 0.0
        %s471 = sadd.s32 %s436, 1
        %s472 = smul.u32 %s471, 128
        %s473 = scalar_lea.vmem %s3, %s472
        %v474 = vld [vmem:[%s473] sm:$0xff]
        %v475 = vld [vmem:[%s473 + $0x8] sm:$0xff]
        %v476 = vld [vmem:[%s473 + $0x10] sm:$0xff]
        %v477 = vld [vmem:[%s473 + $0x18] sm:$0xff]
        %v478 = vld [vmem:[%s473 + $0x20] sm:$0xff]
        %v479 = vld [vmem:[%s473 + $0x28] sm:$0xff]
        %v480 = vld [vmem:[%s473 + $0x30] sm:$0xff]
        %v481 = vld [vmem:[%s473 + $0x38] sm:$0xff]
        %v482 = vld [vmem:[%s473 + $0x40] sm:$0xff]
        %v483 = vld [vmem:[%s473 + $0x48] sm:$0xff]
        %v484 = vld [vmem:[%s473 + $0x50] sm:$0xff]
        %v485 = vld [vmem:[%s473 + $0x58] sm:$0xff]
        %v486 = vld [vmem:[%s473 + $0x60] sm:$0xff]
        %v487 = vld [vmem:[%s473 + $0x68] sm:$0xff]
        %v488 = vld [vmem:[%s473 + $0x70] sm:$0xff]
        %v489 = vld [vmem:[%s473 + $0x78] sm:$0xff]
        %490 = vmatprep.subr.mxu0 0.0
        %491 = vmatpush1.msra.mxu0 %v474
        %492 = vmatprep.subr.mxu0 0.0
        %493 = vmatpush1.msra.mxu0 %v475
        %494 = vmatprep.subr.mxu0 0.0
        %495 = vmatpush1.msra.mxu0 %v476
        %496 = vmatprep.subr.mxu0 0.0
        %497 = vmatpush1.msra.mxu0 %v477
        %498 = vmatprep.subr.mxu0 0.0
        %499 = vmatpush1.msra.mxu0 %v478
        %500 = vmatprep.subr.mxu0 0.0
        %501 = vmatpush1.msra.mxu0 %v479
        %502 = vmatprep.subr.mxu0 0.0
        %503 = vmatpush1.msra.mxu0 %v480
        %504 = vmatprep.subr.mxu0 0.0
        %505 = vmatpush1.msra.mxu0 %v481
        %506 = vmatprep.subr.mxu0 0.0
        %507 = vmatpush1.msra.mxu0 %v482
        %508 = vmatprep.subr.mxu0 0.0
        %509 = vmatpush1.msra.mxu0 %v483
        %510 = vmatprep.subr.mxu0 0.0
        %511 = vmatpush1.msra.mxu0 %v484
        %512 = vmatprep.subr.mxu0 0.0
        %513 = vmatpush1.msra.mxu0 %v485
        %514 = vmatprep.subr.mxu0 0.0
        %515 = vmatpush1.msra.mxu0 %v486
        %516 = vmatprep.subr.mxu0 0.0
        %517 = vmatpush1.msra.mxu0 %v487
        %518 = vmatprep.subr.mxu0 0.0
        %519 = vmatpush1.msra.mxu0 %v488
        %520 = vmatprep.subr.mxu0 0.0
        %521 = vmatpush1.msra.mxu0 %v489
        %522 = vmatprep.subr.mxu0 0.0
        %523 = vmatpush1.msra.mxu0 0.0
        %524 = vmatprep.subr.mxu0 0.0
        %525 = vmatpush1.msra.mxu0 0.0
        %526 = vmatprep.subr.mxu0 0.0
        %527 = vmatpush1.msra.mxu0 0.0
        %528 = vmatprep.subr.mxu0 0.0
        %529 = vmatpush1.msra.mxu0 0.0
        %530 = vmatprep.subr.mxu0 0.0
        %531 = vmatpush1.msra.mxu0 0.0
        %532 = vmatprep.subr.mxu0 0.0
        %533 = vmatpush1.msra.mxu0 0.0
        %534 = vmatprep.subr.mxu0 0.0
        %535 = vmatpush1.msra.mxu0 0.0
        %536 = vmatprep.subr.mxu0 0.0
        %537 = vmatpush1.msra.mxu0 0.0
        %538 = vmatprep.subr.mxu0 0.0
        %539 = vmatpush1.msra.mxu0 0.0
        %540 = vmatprep.subr.mxu0 0.0
        %541 = vmatpush1.msra.mxu0 0.0
        %542 = vmatprep.subr.mxu0 0.0
        %543 = vmatpush1.msra.mxu0 0.0
        %544 = vmatprep.subr.mxu0 0.0
        %545 = vmatpush1.msra.mxu0 0.0
        %546 = vmatprep.subr.mxu0 0.0
        %547 = vmatpush1.msra.mxu0 0.0
        %548 = vmatprep.subr.mxu0 0.0
        %549 = vmatpush1.msra.mxu0 0.0
        %550 = vmatprep.subr.mxu0 0.0
        %551 = vmatpush1.msra.mxu0 0.0
        %552 = vmatprep.subr.mxu0 0.0
        %553 = vmatpush1.msra.mxu0 0.0
        %554 = vmatprep.mubr.f32.mxu0 0.0
        %555 = vmatmul.mubr.f32.gmra.mrb[0].mxu0 %v467
        %v556 = vpop.f32.mrb[0].mxu0
        %v557 = vadd.f32 0.0, %v556
        %v558 = vpop.f32.mrb[0].mxu0
        %559 = vmatprep.mubr.f32.mxu0 0.0
        %560 = vmatmul.mubr.f32.gmra.mrb[0].mxu0 %v468
        %v561 = vpop.f32.mrb[0].mxu0
        %v562 = vadd.f32 0.0, %v561
        %v563 = vpop.f32.mrb[0].mxu0
        %564 = vmatprep.mubr.f32.mxu0 0.0
        %565 = vmatmul.mubr.f32.gmra.mrb[0].mxu0 %v469
        %v566 = vpop.f32.mrb[0].mxu0
        %v567 = vadd.f32 0.0, %v566
        %v568 = vpop.f32.mrb[0].mxu0
        %569 = vmatprep.mubr.f32.mxu0 0.0
        %570 = vmatmul.mubr.f32.gmra.mrb[0].mxu0 %v470
        %v571 = vpop.f32.mrb[0].mxu0
        %v572 = vadd.f32 0.0, %v571
        %v573 = vpop.f32.mrb[0].mxu0
        %574 = vdwg.mxu0
        %575 = vmatprep.subr.mxu0 0.0
        %576 = vmatpush1.msra.mxu0 %v439
        %577 = vmatprep.subr.mxu0 0.0
        %578 = vmatpush1.msra.mxu0 %v440
        %579 = vmatprep.subr.mxu0 0.0
        %580 = vmatpush1.msra.mxu0 %v441
        %581 = vmatprep.subr.mxu0 0.0
        %582 = vmatpush1.msra.mxu0 %v442
        %583 = vmatprep.subr.mxu0 0.0
        %584 = vmatpush1.msra.mxu0 %v443
        %585 = vmatprep.subr.mxu0 0.0
        %586 = vmatpush1.msra.mxu0 %v444
        %587 = vmatprep.subr.mxu0 0.0
        %588 = vmatpush1.msra.mxu0 %v445
        %589 = vmatprep.subr.mxu0 0.0
        %590 = vmatpush1.msra.mxu0 %v446
        %591 = vmatprep.subr.mxu0 0.0
        %592 = vmatpush1.msra.mxu0 %v447
        %593 = vmatprep.subr.mxu0 0.0
        %594 = vmatpush1.msra.mxu0 %v448
        %595 = vmatprep.subr.mxu0 0.0
        %596 = vmatpush1.msra.mxu0 %v449
        %597 = vmatprep.subr.mxu0 0.0
        %598 = vmatpush1.msra.mxu0 %v450
        %599 = vmatprep.subr.mxu0 0.0
        %600 = vmatpush1.msra.mxu0 %v451
        %601 = vmatprep.subr.mxu0 0.0
        %602 = vmatpush1.msra.mxu0 %v452
        %603 = vmatprep.subr.mxu0 0.0
        %604 = vmatpush1.msra.mxu0 %v453
        %605 = vmatprep.subr.mxu0 0.0
        %606 = vmatpush1.msra.mxu0 %v454
        %607 = vmatprep.subr.mxu0 0.0
        %608 = vmatpush1.msra.mxu0 0.0
        %609 = vmatprep.subr.mxu0 0.0
        %610 = vmatpush1.msra.mxu0 0.0
        %611 = vmatprep.subr.mxu0 0.0
        %612 = vmatpush1.msra.mxu0 0.0
        %613 = vmatprep.subr.mxu0 0.0
        %614 = vmatpush1.msra.mxu0 0.0
        %615 = vmatprep.subr.mxu0 0.0
        %616 = vmatpush1.msra.mxu0 0.0
        %617 = vmatprep.subr.mxu0 0.0
        %618 = vmatpush1.msra.mxu0 0.0
        %619 = vmatprep.subr.mxu0 0.0
        %620 = vmatpush1.msra.mxu0 0.0
        %621 = vmatprep.subr.mxu0 0.0
        %622 = vmatpush1.msra.mxu0 0.0
        %623 = vmatprep.subr.mxu0 0.0
        %624 = vmatpush1.msra.mxu0 0.0
        %625 = vmatprep.subr.mxu0 0.0
        %626 = vmatpush1.msra.mxu0 0.0
        %627 = vmatprep.subr.mxu0 0.0
        %628 = vmatpush1.msra.mxu0 0.0
        %629 = vmatprep.subr.mxu0 0.0
        %630 = vmatpush1.msra.mxu0 0.0
        %631 = vmatprep.subr.mxu0 0.0
        %632 = vmatpush1.msra.mxu0 0.0
        %633 = vmatprep.subr.mxu0 0.0
        %634 = vmatpush1.msra.mxu0 0.0
        %635 = vmatprep.subr.mxu0 0.0
        %636 = vmatpush1.msra.mxu0 0.0
        %637 = vmatprep.subr.mxu0 0.0
        %638 = vmatpush1.msra.mxu0 0.0
        %639 = vmatprep.mubr.f32.mxu0 0.0
        %640 = vmatmul.mubr.f32.gmra.mrb[0].mxu0 %v432
        %v641 = vpop.f32.mrb[0].mxu0
        %v642 = vadd.f32 %v557, %v641
        %v643 = vpop.f32.mrb[0].mxu0
        %644 = vmatprep.mubr.f32.mxu0 0.0
        %645 = vmatmul.mubr.f32.gmra.mrb[0].mxu0 %v433
        %v646 = vpop.f32.mrb[0].mxu0
        %v647 = vadd.f32 %v562, %v646
        %v648 = vpop.f32.mrb[0].mxu0
        %649 = vmatprep.mubr.f32.mxu0 0.0
        %650 = vmatmul.mubr.f32.gmra.mrb[0].mxu0 %v434
        %v651 = vpop.f32.mrb[0].mxu0
        %v652 = vadd.f32 %v567, %v651
        %v653 = vpop.f32.mrb[0].mxu0
        %654 = vmatprep.mubr.f32.mxu0 0.0
        %655 = vmatmul.mubr.f32.gmra.mrb[0].mxu0 %v435
        %v656 = vpop.f32.mrb[0].mxu0
        %v657 = vadd.f32 %v572, %v656
        %v658 = vpop.f32.mrb[0].mxu0
        %659 = vdwg.mxu0
        %v660 = vld [vmem:[%s369 + $0x2] sm:$0xff]
        %v661 = vld [vmem:[%s369 + $0x12] sm:$0xff]
        %v662 = vld [vmem:[%s369 + $0x22] sm:$0xff]
        %v663 = vld [vmem:[%s369 + $0x32] sm:$0xff]
        %v664 = vsub.f32 %v660, %v416
        %v665 = vsub.f32 %v661, %v416
        %v666 = vsub.f32 %v662, %v416
        %v667 = vsub.f32 %v663, %v416
        %v668 = vmul.f32 %v664, %v426
        %v669 = vmul.f32 %v665, %v426
        %v670 = vmul.f32 %v666, %v426
        %v671 = vmul.f32 %v667, %v426
        %v672 = vmax.f32 %v668, 0.0
        %v673 = vmax.f32 %v669, 0.0
        %v674 = vmax.f32 %v670, 0.0
        %v675 = vmax.f32 %v671, 0.0
        %s676 = sadd.s32 %s436, 2
        %s677 = smul.u32 %s676, 128
        %s678 = scalar_lea.vmem %s3, %s677
        %v679 = vld [vmem:[%s678] sm:$0xff]
        %v680 = vld [vmem:[%s678 + $0x8] sm:$0xff]
        %v681 = vld [vmem:[%s678 + $0x10] sm:$0xff]
        %v682 = vld [vmem:[%s678 + $0x18] sm:$0xff]
        %v683 = vld [vmem:[%s678 + $0x20] sm:$0xff]
        %v684 = vld [vmem:[%s678 + $0x28] sm:$0xff]
        %v685 = vld [vmem:[%s678 + $0x30] sm:$0xff]
        %v686 = vld [vmem:[%s678 + $0x38] sm:$0xff]
        %v687 = vld [vmem:[%s678 + $0x40] sm:$0xff]
        %v688 = vld [vmem:[%s678 + $0x48] sm:$0xff]
        %v689 = vld [vmem:[%s678 + $0x50] sm:$0xff]
        %v690 = vld [vmem:[%s678 + $0x58] sm:$0xff]
        %v691 = vld [vmem:[%s678 + $0x60] sm:$0xff]
        %v692 = vld [vmem:[%s678 + $0x68] sm:$0xff]
        %v693 = vld [vmem:[%s678 + $0x70] sm:$0xff]
        %v694 = vld [vmem:[%s678 + $0x78] sm:$0xff]
        %695 = vmatprep.subr.mxu0 0.0
        %696 = vmatpush1.msra.mxu0 %v679
        %697 = vmatprep.subr.mxu0 0.0
        %698 = vmatpush1.msra.mxu0 %v680
        %699 = vmatprep.subr.mxu0 0.0
        %700 = vmatpush1.msra.mxu0 %v681
        %701 = vmatprep.subr.mxu0 0.0
        %702 = vmatpush1.msra.mxu0 %v682
        %703 = vmatprep.subr.mxu0 0.0
        %704 = vmatpush1.msra.mxu0 %v683
        %705 = vmatprep.subr.mxu0 0.0
        %706 = vmatpush1.msra.mxu0 %v684
        %707 = vmatprep.subr.mxu0 0.0
        %708 = vmatpush1.msra.mxu0 %v685
        %709 = vmatprep.subr.mxu0 0.0
        %710 = vmatpush1.msra.mxu0 %v686
        %711 = vmatprep.subr.mxu0 0.0
        %712 = vmatpush1.msra.mxu0 %v687
        %713 = vmatprep.subr.mxu0 0.0
        %714 = vmatpush1.msra.mxu0 %v688
        %715 = vmatprep.subr.mxu0 0.0
        %716 = vmatpush1.msra.mxu0 %v689
        %717 = vmatprep.subr.mxu0 0.0
        %718 = vmatpush1.msra.mxu0 %v690
        %719 = vmatprep.subr.mxu0 0.0
        %720 = vmatpush1.msra.mxu0 %v691
        %721 = vmatprep.subr.mxu0 0.0
        %722 = vmatpush1.msra.mxu0 %v692
        %723 = vmatprep.subr.mxu0 0.0
        %724 = vmatpush1.msra.mxu0 %v693
        %725 = vmatprep.subr.mxu0 0.0
        %726 = vmatpush1.msra.mxu0 %v694
        %727 = vmatprep.subr.mxu0 0.0
        %728 = vmatpush1.msra.mxu0 0.0
        %729 = vmatprep.subr.mxu0 0.0
        %730 = vmatpush1.msra.mxu0 0.0
        %731 = vmatprep.subr.mxu0 0.0
        %732 = vmatpush1.msra.mxu0 0.0
        %733 = vmatprep.subr.mxu0 0.0
        %734 = vmatpush1.msra.mxu0 0.0
        %735 = vmatprep.subr.mxu0 0.0
        %736 = vmatpush1.msra.mxu0 0.0
        %737 = vmatprep.subr.mxu0 0.0
        %738 = vmatpush1.msra.mxu0 0.0
        %739 = vmatprep.subr.mxu0 0.0
        %740 = vmatpush1.msra.mxu0 0.0
        %741 = vmatprep.subr.mxu0 0.0
        %742 = vmatpush1.msra.mxu0 0.0
        %743 = vmatprep.subr.mxu0 0.0
        %744 = vmatpush1.msra.mxu0 0.0
        %745 = vmatprep.subr.mxu0 0.0
        %746 = vmatpush1.msra.mxu0 0.0
        %747 = vmatprep.subr.mxu0 0.0
        %748 = vmatpush1.msra.mxu0 0.0
        %749 = vmatprep.subr.mxu0 0.0
        %750 = vmatpush1.msra.mxu0 0.0
        %751 = vmatprep.subr.mxu0 0.0
        %752 = vmatpush1.msra.mxu0 0.0
        %753 = vmatprep.subr.mxu0 0.0
        %754 = vmatpush1.msra.mxu0 0.0
        %755 = vmatprep.subr.mxu0 0.0
        %756 = vmatpush1.msra.mxu0 0.0
        %757 = vmatprep.subr.mxu0 0.0
        %758 = vmatpush1.msra.mxu0 0.0
        %759 = vmatprep.mubr.f32.mxu0 0.0
        %760 = vmatmul.mubr.f32.gmra.mrb[0].mxu0 %v672
        %v761 = vpop.f32.mrb[0].mxu0
        %v762 = vadd.f32 0.0, %v761
        %v763 = vpop.f32.mrb[0].mxu0
        %764 = vmatprep.mubr.f32.mxu0 0.0
        %765 = vmatmul.mubr.f32.gmra.mrb[0].mxu0 %v673
        %v766 = vpop.f32.mrb[0].mxu0
        %v767 = vadd.f32 0.0, %v766
        %v768 = vpop.f32.mrb[0].mxu0
        %769 = vmatprep.mubr.f32.mxu0 0.0
        %770 = vmatmul.mubr.f32.gmra.mrb[0].mxu0 %v674
        %v771 = vpop.f32.mrb[0].mxu0
        %v772 = vadd.f32 0.0, %v771
        %v773 = vpop.f32.mrb[0].mxu0
        %774 = vmatprep.mubr.f32.mxu0 0.0
        %775 = vmatmul.mubr.f32.gmra.mrb[0].mxu0 %v675
        %v776 = vpop.f32.mrb[0].mxu0
        %v777 = vadd.f32 0.0, %v776
        %v778 = vpop.f32.mrb[0].mxu0
        %779 = vdwg.mxu0
        %v780 = vadd.f32 %v642, %v762
        %v781 = vadd.f32 %v647, %v767
        %v782 = vadd.f32 %v652, %v772
        %v783 = vadd.f32 %v657, %v777
        %s784 = scalar_lea.vmem %s369, 16
        %v785 = vld [vmem:[%s784] sm:$0xff]
        %v786 = vld [vmem:[%s784 + $0x10] sm:$0xff]
        %v787 = vld [vmem:[%s784 + $0x20] sm:$0xff]
        %v788 = vld [vmem:[%s784 + $0x30] sm:$0xff]
        %v789 = vsub.f32 %v785, %v416
        %v790 = vsub.f32 %v786, %v416
        %v791 = vsub.f32 %v787, %v416
        %v792 = vsub.f32 %v788, %v416
        %v793 = vmul.f32 %v789, %v426
        %v794 = vmul.f32 %v790, %v426
        %v795 = vmul.f32 %v791, %v426
        %v796 = vmul.f32 %v792, %v426
        %v797 = vmax.f32 %v793, 0.0
        %v798 = vmax.f32 %v794, 0.0
        %v799 = vmax.f32 %v795, 0.0
        %v800 = vmax.f32 %v796, 0.0
        %s801 = sadd.s32 %s436, 3
        %s802 = smul.u32 %s801, 128
        %s803 = scalar_lea.vmem %s3, %s802
        %v804 = vld [vmem:[%s803] sm:$0xff]
        %v805 = vld [vmem:[%s803 + $0x8] sm:$0xff]
        %v806 = vld [vmem:[%s803 + $0x10] sm:$0xff]
        %v807 = vld [vmem:[%s803 + $0x18] sm:$0xff]
        %v808 = vld [vmem:[%s803 + $0x20] sm:$0xff]
        %v809 = vld [vmem:[%s803 + $0x28] sm:$0xff]
        %v810 = vld [vmem:[%s803 + $0x30] sm:$0xff]
        %v811 = vld [vmem:[%s803 + $0x38] sm:$0xff]
        %v812 = vld [vmem:[%s803 + $0x40] sm:$0xff]
        %v813 = vld [vmem:[%s803 + $0x48] sm:$0xff]
        %v814 = vld [vmem:[%s803 + $0x50] sm:$0xff]
        %v815 = vld [vmem:[%s803 + $0x58] sm:$0xff]
        %v816 = vld [vmem:[%s803 + $0x60] sm:$0xff]
        %v817 = vld [vmem:[%s803 + $0x68] sm:$0xff]
        %v818 = vld [vmem:[%s803 + $0x70] sm:$0xff]
        %v819 = vld [vmem:[%s803 + $0x78] sm:$0xff]
        %820 = vmatprep.subr.mxu0 0.0
        %821 = vmatpush1.msra.mxu0 %v804
        %822 = vmatprep.subr.mxu0 0.0
        %823 = vmatpush1.msra.mxu0 %v805
        %824 = vmatprep.subr.mxu0 0.0
        %825 = vmatpush1.msra.mxu0 %v806
        %826 = vmatprep.subr.mxu0 0.0
        %827 = vmatpush1.msra.mxu0 %v807
        %828 = vmatprep.subr.mxu0 0.0
        %829 = vmatpush1.msra.mxu0 %v808
        %830 = vmatprep.subr.mxu0 0.0
        %831 = vmatpush1.msra.mxu0 %v809
        %832 = vmatprep.subr.mxu0 0.0
        %833 = vmatpush1.msra.mxu0 %v810
        %834 = vmatprep.subr.mxu0 0.0
        %835 = vmatpush1.msra.mxu0 %v811
        %836 = vmatprep.subr.mxu0 0.0
        %837 = vmatpush1.msra.mxu0 %v812
        %838 = vmatprep.subr.mxu0 0.0
        %839 = vmatpush1.msra.mxu0 %v813
        %840 = vmatprep.subr.mxu0 0.0
        %841 = vmatpush1.msra.mxu0 %v814
        %842 = vmatprep.subr.mxu0 0.0
        %843 = vmatpush1.msra.mxu0 %v815
        %844 = vmatprep.subr.mxu0 0.0
        %845 = vmatpush1.msra.mxu0 %v816
        %846 = vmatprep.subr.mxu0 0.0
        %847 = vmatpush1.msra.mxu0 %v817
        %848 = vmatprep.subr.mxu0 0.0
        %849 = vmatpush1.msra.mxu0 %v818
        %850 = vmatprep.subr.mxu0 0.0
        %851 = vmatpush1.msra.mxu0 %v819
        %852 = vmatprep.subr.mxu0 0.0
        %853 = vmatpush1.msra.mxu0 0.0
        %854 = vmatprep.subr.mxu0 0.0
        %855 = vmatpush1.msra.mxu0 0.0
        %856 = vmatprep.subr.mxu0 0.0
        %857 = vmatpush1.msra.mxu0 0.0
        %858 = vmatprep.subr.mxu0 0.0
        %859 = vmatpush1.msra.mxu0 0.0
        %860 = vmatprep.subr.mxu0 0.0
        %861 = vmatpush1.msra.mxu0 0.0
        %862 = vmatprep.subr.mxu0 0.0
        %863 = vmatpush1.msra.mxu0 0.0
        %864 = vmatprep.subr.mxu0 0.0
        %865 = vmatpush1.msra.mxu0 0.0
        %866 = vmatprep.subr.mxu0 0.0
        %867 = vmatpush1.msra.mxu0 0.0
        %868 = vmatprep.subr.mxu0 0.0
        %869 = vmatpush1.msra.mxu0 0.0
        %870 = vmatprep.subr.mxu0 0.0
        %871 = vmatpush1.msra.mxu0 0.0
        %872 = vmatprep.subr.mxu0 0.0
        %873 = vmatpush1.msra.mxu0 0.0
        %874 = vmatprep.subr.mxu0 0.0
        %875 = vmatpush1.msra.mxu0 0.0
        %876 = vmatprep.subr.mxu0 0.0
        %877 = vmatpush1.msra.mxu0 0.0
        %878 = vmatprep.subr.mxu0 0.0
        %879 = vmatpush1.msra.mxu0 0.0
        %880 = vmatprep.subr.mxu0 0.0
        %881 = vmatpush1.msra.mxu0 0.0
        %882 = vmatprep.subr.mxu0 0.0
        %883 = vmatpush1.msra.mxu0 0.0
        %884 = vmatprep.mubr.f32.mxu0 0.0
        %885 = vmatmul.mubr.f32.gmra.mrb[0].mxu0 %v797
        %v886 = vpop.f32.mrb[0].mxu0
        %v887 = vadd.f32 0.0, %v886
        %v888 = vpop.f32.mrb[0].mxu0
        %889 = vmatprep.mubr.f32.mxu0 0.0
        %890 = vmatmul.mubr.f32.gmra.mrb[0].mxu0 %v798
        %v891 = vpop.f32.mrb[0].mxu0
        %v892 = vadd.f32 0.0, %v891
        %v893 = vpop.f32.mrb[0].mxu0
        %894 = vmatprep.mubr.f32.mxu0 0.0
        %895 = vmatmul.mubr.f32.gmra.mrb[0].mxu0 %v799
        %v896 = vpop.f32.mrb[0].mxu0
        %v897 = vadd.f32 0.0, %v896
        %v898 = vpop.f32.mrb[0].mxu0
        %899 = vmatprep.mubr.f32.mxu0 0.0
        %900 = vmatmul.mubr.f32.gmra.mrb[0].mxu0 %v800
        %v901 = vpop.f32.mrb[0].mxu0
        %v902 = vadd.f32 0.0, %v901
        %v903 = vpop.f32.mrb[0].mxu0
        %904 = vdwg.mxu0
        %v905 = vadd.f32 %v780, %v887
        %v906 = vadd.f32 %v781, %v892
        %v907 = vadd.f32 %v782, %v897
        %v908 = vadd.f32 %v783, %v902
        %v909 = vld [vmem:[%s784 + $0x1] sm:$0xff]
        %v910 = vld [vmem:[%s784 + $0x11] sm:$0xff]
        %v911 = vld [vmem:[%s784 + $0x21] sm:$0xff]
        %v912 = vld [vmem:[%s784 + $0x31] sm:$0xff]
        %v913 = vsub.f32 %v909, %v416
        %v914 = vsub.f32 %v910, %v416
        %v915 = vsub.f32 %v911, %v416
        %v916 = vsub.f32 %v912, %v416
        %v917 = vmul.f32 %v913, %v426
        %v918 = vmul.f32 %v914, %v426
        %v919 = vmul.f32 %v915, %v426
        %v920 = vmul.f32 %v916, %v426
        %v921 = vmax.f32 %v917, 0.0
        %v922 = vmax.f32 %v918, 0.0
        %v923 = vmax.f32 %v919, 0.0
        %v924 = vmax.f32 %v920, 0.0
        %s925 = sadd.s32 %s436, 4
        %s926 = smul.u32 %s925, 128
        %s927 = scalar_lea.vmem %s3, %s926
        %v928 = vld [vmem:[%s927] sm:$0xff]
        %v929 = vld [vmem:[%s927 + $0x8] sm:$0xff]
        %v930 = vld [vmem:[%s927 + $0x10] sm:$0xff]
        %v931 = vld [vmem:[%s927 + $0x18] sm:$0xff]
        %v932 = vld [vmem:[%s927 + $0x20] sm:$0xff]
        %v933 = vld [vmem:[%s927 + $0x28] sm:$0xff]
        %v934 = vld [vmem:[%s927 + $0x30] sm:$0xff]
        %v935 = vld [vmem:[%s927 + $0x38] sm:$0xff]
        %v936 = vld [vmem:[%s927 + $0x40] sm:$0xff]
        %v937 = vld [vmem:[%s927 + $0x48] sm:$0xff]
        %v938 = vld [vmem:[%s927 + $0x50] sm:$0xff]
        %v939 = vld [vmem:[%s927 + $0x58] sm:$0xff]
        %v940 = vld [vmem:[%s927 + $0x60] sm:$0xff]
        %v941 = vld [vmem:[%s927 + $0x68] sm:$0xff]
        %v942 = vld [vmem:[%s927 + $0x70] sm:$0xff]
        %v943 = vld [vmem:[%s927 + $0x78] sm:$0xff]
        %944 = vmatprep.subr.mxu0 0.0
        %945 = vmatpush1.msra.mxu0 %v928
        %946 = vmatprep.subr.mxu0 0.0
        %947 = vmatpush1.msra.mxu0 %v929
        %948 = vmatprep.subr.mxu0 0.0
        %949 = vmatpush1.msra.mxu0 %v930
        %950 = vmatprep.subr.mxu0 0.0
        %951 = vmatpush1.msra.mxu0 %v931
        %952 = vmatprep.subr.mxu0 0.0
        %953 = vmatpush1.msra.mxu0 %v932
        %954 = vmatprep.subr.mxu0 0.0
        %955 = vmatpush1.msra.mxu0 %v933
        %956 = vmatprep.subr.mxu0 0.0
        %957 = vmatpush1.msra.mxu0 %v934
        %958 = vmatprep.subr.mxu0 0.0
        %959 = vmatpush1.msra.mxu0 %v935
        %960 = vmatprep.subr.mxu0 0.0
        %961 = vmatpush1.msra.mxu0 %v936
        %962 = vmatprep.subr.mxu0 0.0
        %963 = vmatpush1.msra.mxu0 %v937
        %964 = vmatprep.subr.mxu0 0.0
        %965 = vmatpush1.msra.mxu0 %v938
        %966 = vmatprep.subr.mxu0 0.0
        %967 = vmatpush1.msra.mxu0 %v939
        %968 = vmatprep.subr.mxu0 0.0
        %969 = vmatpush1.msra.mxu0 %v940
        %970 = vmatprep.subr.mxu0 0.0
        %971 = vmatpush1.msra.mxu0 %v941
        %972 = vmatprep.subr.mxu0 0.0
        %973 = vmatpush1.msra.mxu0 %v942
        %974 = vmatprep.subr.mxu0 0.0
        %975 = vmatpush1.msra.mxu0 %v943
        %976 = vmatprep.subr.mxu0 0.0
        %977 = vmatpush1.msra.mxu0 0.0
        %978 = vmatprep.subr.mxu0 0.0
        %979 = vmatpush1.msra.mxu0 0.0
        %980 = vmatprep.subr.mxu0 0.0
        %981 = vmatpush1.msra.mxu0 0.0
        %982 = vmatprep.subr.mxu0 0.0
        %983 = vmatpush1.msra.mxu0 0.0
        %984 = vmatprep.subr.mxu0 0.0
        %985 = vmatpush1.msra.mxu0 0.0
        %986 = vmatprep.subr.mxu0 0.0
        %987 = vmatpush1.msra.mxu0 0.0
        %988 = vmatprep.subr.mxu0 0.0
        %989 = vmatpush1.msra.mxu0 0.0
        %990 = vmatprep.subr.mxu0 0.0
        %991 = vmatpush1.msra.mxu0 0.0
        %992 = vmatprep.subr.mxu0 0.0
        %993 = vmatpush1.msra.mxu0 0.0
        %994 = vmatprep.subr.mxu0 0.0
        %995 = vmatpush1.msra.mxu0 0.0
        %996 = vmatprep.subr.mxu0 0.0
        %997 = vmatpush1.msra.mxu0 0.0
        %998 = vmatprep.subr.mxu0 0.0
        %999 = vmatpush1.msra.mxu0 0.0
        %1000 = vmatprep.subr.mxu0 0.0
        %1001 = vmatpush1.msra.mxu0 0.0
        %1002 = vmatprep.subr.mxu0 0.0
        %1003 = vmatpush1.msra.mxu0 0.0
        %1004 = vmatprep.subr.mxu0 0.0
        %1005 = vmatpush1.msra.mxu0 0.0
        %1006 = vmatprep.subr.mxu0 0.0
        %1007 = vmatpush1.msra.mxu0 0.0
        %1008 = vmatprep.mubr.f32.mxu0 0.0
        %1009 = vmatmul.mubr.f32.gmra.mrb[0].mxu0 %v921
        %v1010 = vpop.f32.mrb[0].mxu0
        %v1011 = vadd.f32 0.0, %v1010
        %v1012 = vpop.f32.mrb[0].mxu0
        %1013 = vmatprep.mubr.f32.mxu0 0.0
        %1014 = vmatmul.mubr.f32.gmra.mrb[0].mxu0 %v922
        %v1015 = vpop.f32.mrb[0].mxu0
        %v1016 = vadd.f32 0.0, %v1015
        %v1017 = vpop.f32.mrb[0].mxu0
        %1018 = vmatprep.mubr.f32.mxu0 0.0
        %1019 = vmatmul.mubr.f32.gmra.mrb[0].mxu0 %v923
        %v1020 = vpop.f32.mrb[0].mxu0
        %v1021 = vadd.f32 0.0, %v1020
        %v1022 = vpop.f32.mrb[0].mxu0
        %1023 = vmatprep.mubr.f32.mxu0 0.0
        %1024 = vmatmul.mubr.f32.gmra.mrb[0].mxu0 %v924
        %v1025 = vpop.f32.mrb[0].mxu0
        %v1026 = vadd.f32 0.0, %v1025
        %v1027 = vpop.f32.mrb[0].mxu0
        %1028 = vdwg.mxu0
        %v1029 = vadd.f32 %v905, %v1011
        %v1030 = vadd.f32 %v906, %v1016
        %v1031 = vadd.f32 %v907, %v1021
        %v1032 = vadd.f32 %v908, %v1026
        %v1033 = vld [vmem:[%s784 + $0x2] sm:$0xff]
        %v1034 = vld [vmem:[%s784 + $0x12] sm:$0xff]
        %v1035 = vld [vmem:[%s784 + $0x22] sm:$0xff]
        %v1036 = vld [vmem:[%s784 + $0x32] sm:$0xff]
        %v1037 = vsub.f32 %v1033, %v416
        %v1038 = vsub.f32 %v1034, %v416
        %v1039 = vsub.f32 %v1035, %v416
        %v1040 = vsub.f32 %v1036, %v416
        %v1041 = vmul.f32 %v1037, %v426
        %v1042 = vmul.f32 %v1038, %v426
        %v1043 = vmul.f32 %v1039, %v426
        %v1044 = vmul.f32 %v1040, %v426
        %v1045 = vmax.f32 %v1041, 0.0
        %v1046 = vmax.f32 %v1042, 0.0
        %v1047 = vmax.f32 %v1043, 0.0
        %v1048 = vmax.f32 %v1044, 0.0
        %s1049 = sadd.s32 %s436, 5
        %s1050 = smul.u32 %s1049, 128
        %s1051 = scalar_lea.vmem %s3, %s1050
        %v1052 = vld [vmem:[%s1051] sm:$0xff]
        %v1053 = vld [vmem:[%s1051 + $0x8] sm:$0xff]
        %v1054 = vld [vmem:[%s1051 + $0x10] sm:$0xff]
        %v1055 = vld [vmem:[%s1051 + $0x18] sm:$0xff]
        %v1056 = vld [vmem:[%s1051 + $0x20] sm:$0xff]
        %v1057 = vld [vmem:[%s1051 + $0x28] sm:$0xff]
        %v1058 = vld [vmem:[%s1051 + $0x30] sm:$0xff]
        %v1059 = vld [vmem:[%s1051 + $0x38] sm:$0xff]
        %v1060 = vld [vmem:[%s1051 + $0x40] sm:$0xff]
        %v1061 = vld [vmem:[%s1051 + $0x48] sm:$0xff]
        %v1062 = vld [vmem:[%s1051 + $0x50] sm:$0xff]
        %v1063 = vld [vmem:[%s1051 + $0x58] sm:$0xff]
        %v1064 = vld [vmem:[%s1051 + $0x60] sm:$0xff]
        %v1065 = vld [vmem:[%s1051 + $0x68] sm:$0xff]
        %v1066 = vld [vmem:[%s1051 + $0x70] sm:$0xff]
        %v1067 = vld [vmem:[%s1051 + $0x78] sm:$0xff]
        %1068 = vmatprep.subr.mxu0 0.0
        %1069 = vmatpush1.msra.mxu0 %v1052
        %1070 = vmatprep.subr.mxu0 0.0
        %1071 = vmatpush1.msra.mxu0 %v1053
        %1072 = vmatprep.subr.mxu0 0.0
        %1073 = vmatpush1.msra.mxu0 %v1054
        %1074 = vmatprep.subr.mxu0 0.0
        %1075 = vmatpush1.msra.mxu0 %v1055
        %1076 = vmatprep.subr.mxu0 0.0
        %1077 = vmatpush1.msra.mxu0 %v1056
        %1078 = vmatprep.subr.mxu0 0.0
        %1079 = vmatpush1.msra.mxu0 %v1057
        %1080 = vmatprep.subr.mxu0 0.0
        %1081 = vmatpush1.msra.mxu0 %v1058
        %1082 = vmatprep.subr.mxu0 0.0
        %1083 = vmatpush1.msra.mxu0 %v1059
        %1084 = vmatprep.subr.mxu0 0.0
        %1085 = vmatpush1.msra.mxu0 %v1060
        %1086 = vmatprep.subr.mxu0 0.0
        %1087 = vmatpush1.msra.mxu0 %v1061
        %1088 = vmatprep.subr.mxu0 0.0
        %1089 = vmatpush1.msra.mxu0 %v1062
        %1090 = vmatprep.subr.mxu0 0.0
        %1091 = vmatpush1.msra.mxu0 %v1063
        %1092 = vmatprep.subr.mxu0 0.0
        %1093 = vmatpush1.msra.mxu0 %v1064
        %1094 = vmatprep.subr.mxu0 0.0
        %1095 = vmatpush1.msra.mxu0 %v1065
        %1096 = vmatprep.subr.mxu0 0.0
        %1097 = vmatpush1.msra.mxu0 %v1066
        %1098 = vmatprep.subr.mxu0 0.0
        %1099 = vmatpush1.msra.mxu0 %v1067
        %1100 = vmatprep.subr.mxu0 0.0
        %1101 = vmatpush1.msra.mxu0 0.0
        %1102 = vmatprep.subr.mxu0 0.0
        %1103 = vmatpush1.msra.mxu0 0.0
        %1104 = vmatprep.subr.mxu0 0.0
        %1105 = vmatpush1.msra.mxu0 0.0
        %1106 = vmatprep.subr.mxu0 0.0
        %1107 = vmatpush1.msra.mxu0 0.0
        %1108 = vmatprep.subr.mxu0 0.0
        %1109 = vmatpush1.msra.mxu0 0.0
        %1110 = vmatprep.subr.mxu0 0.0
        %1111 = vmatpush1.msra.mxu0 0.0
        %1112 = vmatprep.subr.mxu0 0.0
        %1113 = vmatpush1.msra.mxu0 0.0
        %1114 = vmatprep.subr.mxu0 0.0
        %1115 = vmatpush1.msra.mxu0 0.0
        %1116 = vmatprep.subr.mxu0 0.0
        %1117 = vmatpush1.msra.mxu0 0.0
        %1118 = vmatprep.subr.mxu0 0.0
        %1119 = vmatpush1.msra.mxu0 0.0
        %1120 = vmatprep.subr.mxu0 0.0
        %1121 = vmatpush1.msra.mxu0 0.0
        %1122 = vmatprep.subr.mxu0 0.0
        %1123 = vmatpush1.msra.mxu0 0.0
        %1124 = vmatprep.subr.mxu0 0.0
        %1125 = vmatpush1.msra.mxu0 0.0
        %1126 = vmatprep.subr.mxu0 0.0
        %1127 = vmatpush1.msra.mxu0 0.0
        %1128 = vmatprep.subr.mxu0 0.0
        %1129 = vmatpush1.msra.mxu0 0.0
        %1130 = vmatprep.subr.mxu0 0.0
        %1131 = vmatpush1.msra.mxu0 0.0
        %1132 = vmatprep.mubr.f32.mxu0 0.0
        %1133 = vmatmul.mubr.f32.gmra.mrb[0].mxu0 %v1045
        %v1134 = vpop.f32.mrb[0].mxu0
        %v1135 = vadd.f32 0.0, %v1134
        %v1136 = vpop.f32.mrb[0].mxu0
        %1137 = vmatprep.mubr.f32.mxu0 0.0
        %1138 = vmatmul.mubr.f32.gmra.mrb[0].mxu0 %v1046
        %v1139 = vpop.f32.mrb[0].mxu0
        %v1140 = vadd.f32 0.0, %v1139
        %v1141 = vpop.f32.mrb[0].mxu0
        %1142 = vmatprep.mubr.f32.mxu0 0.0
        %1143 = vmatmul.mubr.f32.gmra.mrb[0].mxu0 %v1047
        %v1144 = vpop.f32.mrb[0].mxu0
        %v1145 = vadd.f32 0.0, %v1144
        %v1146 = vpop.f32.mrb[0].mxu0
        %1147 = vmatprep.mubr.f32.mxu0 0.0
        %1148 = vmatmul.mubr.f32.gmra.mrb[0].mxu0 %v1048
        %v1149 = vpop.f32.mrb[0].mxu0
        %v1150 = vadd.f32 0.0, %v1149
        %v1151 = vpop.f32.mrb[0].mxu0
        %1152 = vdwg.mxu0
        %v1153 = vadd.f32 %v1029, %v1135
        %v1154 = vadd.f32 %v1030, %v1140
        %v1155 = vadd.f32 %v1031, %v1145
        %v1156 = vadd.f32 %v1032, %v1150
        %s1157 = scalar_lea.vmem %s369, 32
        %v1158 = vld [vmem:[%s1157] sm:$0xff]
        %v1159 = vld [vmem:[%s1157 + $0x10] sm:$0xff]
        %v1160 = vld [vmem:[%s1157 + $0x20] sm:$0xff]
        %v1161 = vld [vmem:[%s1157 + $0x30] sm:$0xff]
        %v1162 = vsub.f32 %v1158, %v416
        %v1163 = vsub.f32 %v1159, %v416
        %v1164 = vsub.f32 %v1160, %v416
        %v1165 = vsub.f32 %v1161, %v416
        %v1166 = vmul.f32 %v1162, %v426
        %v1167 = vmul.f32 %v1163, %v426
        %v1168 = vmul.f32 %v1164, %v426
        %v1169 = vmul.f32 %v1165, %v426
        %v1170 = vmax.f32 %v1166, 0.0
        %v1171 = vmax.f32 %v1167, 0.0
        %v1172 = vmax.f32 %v1168, 0.0
        %v1173 = vmax.f32 %v1169, 0.0
        %s1174 = sadd.s32 %s436, 6
        %s1175 = smul.u32 %s1174, 128
        %s1176 = scalar_lea.vmem %s3, %s1175
        %v1177 = vld [vmem:[%s1176] sm:$0xff]
        %v1178 = vld [vmem:[%s1176 + $0x8] sm:$0xff]
        %v1179 = vld [vmem:[%s1176 + $0x10] sm:$0xff]
        %v1180 = vld [vmem:[%s1176 + $0x18] sm:$0xff]
        %v1181 = vld [vmem:[%s1176 + $0x20] sm:$0xff]
        %v1182 = vld [vmem:[%s1176 + $0x28] sm:$0xff]
        %v1183 = vld [vmem:[%s1176 + $0x30] sm:$0xff]
        %v1184 = vld [vmem:[%s1176 + $0x38] sm:$0xff]
        %v1185 = vld [vmem:[%s1176 + $0x40] sm:$0xff]
        %v1186 = vld [vmem:[%s1176 + $0x48] sm:$0xff]
        %v1187 = vld [vmem:[%s1176 + $0x50] sm:$0xff]
        %v1188 = vld [vmem:[%s1176 + $0x58] sm:$0xff]
        %v1189 = vld [vmem:[%s1176 + $0x60] sm:$0xff]
        %v1190 = vld [vmem:[%s1176 + $0x68] sm:$0xff]
        %v1191 = vld [vmem:[%s1176 + $0x70] sm:$0xff]
        %v1192 = vld [vmem:[%s1176 + $0x78] sm:$0xff]
        %1193 = vmatprep.subr.mxu0 0.0
        %1194 = vmatpush1.msra.mxu0 %v1177
        %1195 = vmatprep.subr.mxu0 0.0
        %1196 = vmatpush1.msra.mxu0 %v1178
        %1197 = vmatprep.subr.mxu0 0.0
        %1198 = vmatpush1.msra.mxu0 %v1179
        %1199 = vmatprep.subr.mxu0 0.0
        %1200 = vmatpush1.msra.mxu0 %v1180
        %1201 = vmatprep.subr.mxu0 0.0
        %1202 = vmatpush1.msra.mxu0 %v1181
        %1203 = vmatprep.subr.mxu0 0.0
        %1204 = vmatpush1.msra.mxu0 %v1182
        %1205 = vmatprep.subr.mxu0 0.0
        %1206 = vmatpush1.msra.mxu0 %v1183
        %1207 = vmatprep.subr.mxu0 0.0
        %1208 = vmatpush1.msra.mxu0 %v1184
        %1209 = vmatprep.subr.mxu0 0.0
        %1210 = vmatpush1.msra.mxu0 %v1185
        %1211 = vmatprep.subr.mxu0 0.0
        %1212 = vmatpush1.msra.mxu0 %v1186
        %1213 = vmatprep.subr.mxu0 0.0
        %1214 = vmatpush1.msra.mxu0 %v1187
        %1215 = vmatprep.subr.mxu0 0.0
        %1216 = vmatpush1.msra.mxu0 %v1188
        %1217 = vmatprep.subr.mxu0 0.0
        %1218 = vmatpush1.msra.mxu0 %v1189
        %1219 = vmatprep.subr.mxu0 0.0
        %1220 = vmatpush1.msra.mxu0 %v1190
        %1221 = vmatprep.subr.mxu0 0.0
        %1222 = vmatpush1.msra.mxu0 %v1191
        %1223 = vmatprep.subr.mxu0 0.0
        %1224 = vmatpush1.msra.mxu0 %v1192
        %1225 = vmatprep.subr.mxu0 0.0
        %1226 = vmatpush1.msra.mxu0 0.0
        %1227 = vmatprep.subr.mxu0 0.0
        %1228 = vmatpush1.msra.mxu0 0.0
        %1229 = vmatprep.subr.mxu0 0.0
        %1230 = vmatpush1.msra.mxu0 0.0
        %1231 = vmatprep.subr.mxu0 0.0
        %1232 = vmatpush1.msra.mxu0 0.0
        %1233 = vmatprep.subr.mxu0 0.0
        %1234 = vmatpush1.msra.mxu0 0.0
        %1235 = vmatprep.subr.mxu0 0.0
        %1236 = vmatpush1.msra.mxu0 0.0
        %1237 = vmatprep.subr.mxu0 0.0
        %1238 = vmatpush1.msra.mxu0 0.0
        %1239 = vmatprep.subr.mxu0 0.0
        %1240 = vmatpush1.msra.mxu0 0.0
        %1241 = vmatprep.subr.mxu0 0.0
        %1242 = vmatpush1.msra.mxu0 0.0
        %1243 = vmatprep.subr.mxu0 0.0
        %1244 = vmatpush1.msra.mxu0 0.0
        %1245 = vmatprep.subr.mxu0 0.0
        %1246 = vmatpush1.msra.mxu0 0.0
        %1247 = vmatprep.subr.mxu0 0.0
        %1248 = vmatpush1.msra.mxu0 0.0
        %1249 = vmatprep.subr.mxu0 0.0
        %1250 = vmatpush1.msra.mxu0 0.0
        %1251 = vmatprep.subr.mxu0 0.0
        %1252 = vmatpush1.msra.mxu0 0.0
        %1253 = vmatprep.subr.mxu0 0.0
        %1254 = vmatpush1.msra.mxu0 0.0
        %1255 = vmatprep.subr.mxu0 0.0
        %1256 = vmatpush1.msra.mxu0 0.0
        %1257 = vmatprep.mubr.f32.mxu0 0.0
        %1258 = vmatmul.mubr.f32.gmra.mrb[0].mxu0 %v1170
        %v1259 = vpop.f32.mrb[0].mxu0
        %v1260 = vadd.f32 0.0, %v1259
        %v1261 = vpop.f32.mrb[0].mxu0
        %1262 = vmatprep.mubr.f32.mxu0 0.0
        %1263 = vmatmul.mubr.f32.gmra.mrb[0].mxu0 %v1171
        %v1264 = vpop.f32.mrb[0].mxu0
        %v1265 = vadd.f32 0.0, %v1264
        %v1266 = vpop.f32.mrb[0].mxu0
        %1267 = vmatprep.mubr.f32.mxu0 0.0
        %1268 = vmatmul.mubr.f32.gmra.mrb[0].mxu0 %v1172
        %v1269 = vpop.f32.mrb[0].mxu0
        %v1270 = vadd.f32 0.0, %v1269
        %v1271 = vpop.f32.mrb[0].mxu0
        %1272 = vmatprep.mubr.f32.mxu0 0.0
        %1273 = vmatmul.mubr.f32.gmra.mrb[0].mxu0 %v1173
        %v1274 = vpop.f32.mrb[0].mxu0
        %v1275 = vadd.f32 0.0, %v1274
        %v1276 = vpop.f32.mrb[0].mxu0
        %1277 = vdwg.mxu0
        %v1278 = vadd.f32 %v1153, %v1260
        %v1279 = vadd.f32 %v1154, %v1265
        %v1280 = vadd.f32 %v1155, %v1270
        %v1281 = vadd.f32 %v1156, %v1275
        %v1282 = vld [vmem:[%s1157 + $0x1] sm:$0xff]
        %v1283 = vld [vmem:[%s1157 + $0x11] sm:$0xff]
        %v1284 = vld [vmem:[%s1157 + $0x21] sm:$0xff]
        %v1285 = vld [vmem:[%s1157 + $0x31] sm:$0xff]
        %v1286 = vsub.f32 %v1282, %v416
        %v1287 = vsub.f32 %v1283, %v416
        %v1288 = vsub.f32 %v1284, %v416
        %v1289 = vsub.f32 %v1285, %v416
        %v1290 = vmul.f32 %v1286, %v426
        %v1291 = vmul.f32 %v1287, %v426
        %v1292 = vmul.f32 %v1288, %v426
        %v1293 = vmul.f32 %v1289, %v426
        %v1294 = vmax.f32 %v1290, 0.0
        %v1295 = vmax.f32 %v1291, 0.0
        %v1296 = vmax.f32 %v1292, 0.0
        %v1297 = vmax.f32 %v1293, 0.0
        %s1298 = sadd.s32 %s436, 7
        %s1299 = smul.u32 %s1298, 128
        %s1300 = scalar_lea.vmem %s3, %s1299
        %v1301 = vld [vmem:[%s1300] sm:$0xff]
        %v1302 = vld [vmem:[%s1300 + $0x8] sm:$0xff]
        %v1303 = vld [vmem:[%s1300 + $0x10] sm:$0xff]
        %v1304 = vld [vmem:[%s1300 + $0x18] sm:$0xff]
        %v1305 = vld [vmem:[%s1300 + $0x20] sm:$0xff]
        %v1306 = vld [vmem:[%s1300 + $0x28] sm:$0xff]
        %v1307 = vld [vmem:[%s1300 + $0x30] sm:$0xff]
        %v1308 = vld [vmem:[%s1300 + $0x38] sm:$0xff]
        %v1309 = vld [vmem:[%s1300 + $0x40] sm:$0xff]
        %v1310 = vld [vmem:[%s1300 + $0x48] sm:$0xff]
        %v1311 = vld [vmem:[%s1300 + $0x50] sm:$0xff]
        %v1312 = vld [vmem:[%s1300 + $0x58] sm:$0xff]
        %v1313 = vld [vmem:[%s1300 + $0x60] sm:$0xff]
        %v1314 = vld [vmem:[%s1300 + $0x68] sm:$0xff]
        %v1315 = vld [vmem:[%s1300 + $0x70] sm:$0xff]
        %v1316 = vld [vmem:[%s1300 + $0x78] sm:$0xff]
        %1317 = vmatprep.subr.mxu0 0.0
        %1318 = vmatpush1.msra.mxu0 %v1301
        %1319 = vmatprep.subr.mxu0 0.0
        %1320 = vmatpush1.msra.mxu0 %v1302
        %1321 = vmatprep.subr.mxu0 0.0
        %1322 = vmatpush1.msra.mxu0 %v1303
        %1323 = vmatprep.subr.mxu0 0.0
        %1324 = vmatpush1.msra.mxu0 %v1304
        %1325 = vmatprep.subr.mxu0 0.0
        %1326 = vmatpush1.msra.mxu0 %v1305
        %1327 = vmatprep.subr.mxu0 0.0
        %1328 = vmatpush1.msra.mxu0 %v1306
        %1329 = vmatprep.subr.mxu0 0.0
        %1330 = vmatpush1.msra.mxu0 %v1307
        %1331 = vmatprep.subr.mxu0 0.0
        %1332 = vmatpush1.msra.mxu0 %v1308
        %1333 = vmatprep.subr.mxu0 0.0
        %1334 = vmatpush1.msra.mxu0 %v1309
        %1335 = vmatprep.subr.mxu0 0.0
        %1336 = vmatpush1.msra.mxu0 %v1310
        %1337 = vmatprep.subr.mxu0 0.0
        %1338 = vmatpush1.msra.mxu0 %v1311
        %1339 = vmatprep.subr.mxu0 0.0
        %1340 = vmatpush1.msra.mxu0 %v1312
        %1341 = vmatprep.subr.mxu0 0.0
        %1342 = vmatpush1.msra.mxu0 %v1313
        %1343 = vmatprep.subr.mxu0 0.0
        %1344 = vmatpush1.msra.mxu0 %v1314
        %1345 = vmatprep.subr.mxu0 0.0
        %1346 = vmatpush1.msra.mxu0 %v1315
        %1347 = vmatprep.subr.mxu0 0.0
        %1348 = vmatpush1.msra.mxu0 %v1316
        %1349 = vmatprep.subr.mxu0 0.0
        %1350 = vmatpush1.msra.mxu0 0.0
        %1351 = vmatprep.subr.mxu0 0.0
        %1352 = vmatpush1.msra.mxu0 0.0
        %1353 = vmatprep.subr.mxu0 0.0
        %1354 = vmatpush1.msra.mxu0 0.0
        %1355 = vmatprep.subr.mxu0 0.0
        %1356 = vmatpush1.msra.mxu0 0.0
        %1357 = vmatprep.subr.mxu0 0.0
        %1358 = vmatpush1.msra.mxu0 0.0
        %1359 = vmatprep.subr.mxu0 0.0
        %1360 = vmatpush1.msra.mxu0 0.0
        %1361 = vmatprep.subr.mxu0 0.0
        %1362 = vmatpush1.msra.mxu0 0.0
        %1363 = vmatprep.subr.mxu0 0.0
        %1364 = vmatpush1.msra.mxu0 0.0
        %1365 = vmatprep.subr.mxu0 0.0
        %1366 = vmatpush1.msra.mxu0 0.0
        %1367 = vmatprep.subr.mxu0 0.0
        %1368 = vmatpush1.msra.mxu0 0.0
        %1369 = vmatprep.subr.mxu0 0.0
        %1370 = vmatpush1.msra.mxu0 0.0
        %1371 = vmatprep.subr.mxu0 0.0
        %1372 = vmatpush1.msra.mxu0 0.0
        %1373 = vmatprep.subr.mxu0 0.0
        %1374 = vmatpush1.msra.mxu0 0.0
        %1375 = vmatprep.subr.mxu0 0.0
        %1376 = vmatpush1.msra.mxu0 0.0
        %1377 = vmatprep.subr.mxu0 0.0
        %1378 = vmatpush1.msra.mxu0 0.0
        %1379 = vmatprep.subr.mxu0 0.0
        %1380 = vmatpush1.msra.mxu0 0.0
        %1381 = vmatprep.mubr.f32.mxu0 0.0
        %1382 = vmatmul.mubr.f32.gmra.mrb[0].mxu0 %v1294
        %v1383 = vpop.f32.mrb[0].mxu0
        %v1384 = vadd.f32 0.0, %v1383
        %v1385 = vpop.f32.mrb[0].mxu0
        %1386 = vmatprep.mubr.f32.mxu0 0.0
        %1387 = vmatmul.mubr.f32.gmra.mrb[0].mxu0 %v1295
        %v1388 = vpop.f32.mrb[0].mxu0
        %v1389 = vadd.f32 0.0, %v1388
        %v1390 = vpop.f32.mrb[0].mxu0
        %1391 = vmatprep.mubr.f32.mxu0 0.0
        %1392 = vmatmul.mubr.f32.gmra.mrb[0].mxu0 %v1296
        %v1393 = vpop.f32.mrb[0].mxu0
        %v1394 = vadd.f32 0.0, %v1393
        %v1395 = vpop.f32.mrb[0].mxu0
        %1396 = vmatprep.mubr.f32.mxu0 0.0
        %1397 = vmatmul.mubr.f32.gmra.mrb[0].mxu0 %v1297
        %v1398 = vpop.f32.mrb[0].mxu0
        %v1399 = vadd.f32 0.0, %v1398
        %v1400 = vpop.f32.mrb[0].mxu0
        %1401 = vdwg.mxu0
        %v1402 = vadd.f32 %v1278, %v1384
        %v1403 = vadd.f32 %v1279, %v1389
        %v1404 = vadd.f32 %v1280, %v1394
        %v1405 = vadd.f32 %v1281, %v1399
        %v1406 = vld [vmem:[%s1157 + $0x2] sm:$0xff]
        %v1407 = vld [vmem:[%s1157 + $0x12] sm:$0xff]
        %v1408 = vld [vmem:[%s1157 + $0x22] sm:$0xff]
        %v1409 = vld [vmem:[%s1157 + $0x32] sm:$0xff]
        %v1410 = vsub.f32 %v1406, %v416
        %v1411 = vsub.f32 %v1407, %v416
        %v1412 = vsub.f32 %v1408, %v416
        %v1413 = vsub.f32 %v1409, %v416
        %v1414 = vmul.f32 %v1410, %v426
        %v1415 = vmul.f32 %v1411, %v426
        %v1416 = vmul.f32 %v1412, %v426
        %v1417 = vmul.f32 %v1413, %v426
        %v1418 = vmax.f32 %v1414, 0.0
        %v1419 = vmax.f32 %v1415, 0.0
        %v1420 = vmax.f32 %v1416, 0.0
        %v1421 = vmax.f32 %v1417, 0.0
        %s1422 = sadd.s32 %s436, 8
        %s1423 = smul.u32 %s1422, 128
        %s1424 = scalar_lea.vmem %s3, %s1423
        %v1425 = vld [vmem:[%s1424] sm:$0xff]
        %v1426 = vld [vmem:[%s1424 + $0x8] sm:$0xff]
        %v1427 = vld [vmem:[%s1424 + $0x10] sm:$0xff]
        %v1428 = vld [vmem:[%s1424 + $0x18] sm:$0xff]
        %v1429 = vld [vmem:[%s1424 + $0x20] sm:$0xff]
        %v1430 = vld [vmem:[%s1424 + $0x28] sm:$0xff]
        %v1431 = vld [vmem:[%s1424 + $0x30] sm:$0xff]
        %v1432 = vld [vmem:[%s1424 + $0x38] sm:$0xff]
        %v1433 = vld [vmem:[%s1424 + $0x40] sm:$0xff]
        %v1434 = vld [vmem:[%s1424 + $0x48] sm:$0xff]
        %v1435 = vld [vmem:[%s1424 + $0x50] sm:$0xff]
        %v1436 = vld [vmem:[%s1424 + $0x58] sm:$0xff]
        %v1437 = vld [vmem:[%s1424 + $0x60] sm:$0xff]
        %v1438 = vld [vmem:[%s1424 + $0x68] sm:$0xff]
        %v1439 = vld [vmem:[%s1424 + $0x70] sm:$0xff]
        %v1440 = vld [vmem:[%s1424 + $0x78] sm:$0xff]
        %1441 = vmatprep.subr.mxu0 0.0
        %1442 = vmatpush1.msra.mxu0 %v1425
        %1443 = vmatprep.subr.mxu0 0.0
        %1444 = vmatpush1.msra.mxu0 %v1426
        %1445 = vmatprep.subr.mxu0 0.0
        %1446 = vmatpush1.msra.mxu0 %v1427
        %1447 = vmatprep.subr.mxu0 0.0
        %1448 = vmatpush1.msra.mxu0 %v1428
        %1449 = vmatprep.subr.mxu0 0.0
        %1450 = vmatpush1.msra.mxu0 %v1429
        %1451 = vmatprep.subr.mxu0 0.0
        %1452 = vmatpush1.msra.mxu0 %v1430
        %1453 = vmatprep.subr.mxu0 0.0
        %1454 = vmatpush1.msra.mxu0 %v1431
        %1455 = vmatprep.subr.mxu0 0.0
        %1456 = vmatpush1.msra.mxu0 %v1432
        %1457 = vmatprep.subr.mxu0 0.0
        %1458 = vmatpush1.msra.mxu0 %v1433
        %1459 = vmatprep.subr.mxu0 0.0
        %1460 = vmatpush1.msra.mxu0 %v1434
        %1461 = vmatprep.subr.mxu0 0.0
        %1462 = vmatpush1.msra.mxu0 %v1435
        %1463 = vmatprep.subr.mxu0 0.0
        %1464 = vmatpush1.msra.mxu0 %v1436
        %1465 = vmatprep.subr.mxu0 0.0
        %1466 = vmatpush1.msra.mxu0 %v1437
        %1467 = vmatprep.subr.mxu0 0.0
        %1468 = vmatpush1.msra.mxu0 %v1438
        %1469 = vmatprep.subr.mxu0 0.0
        %1470 = vmatpush1.msra.mxu0 %v1439
        %1471 = vmatprep.subr.mxu0 0.0
        %1472 = vmatpush1.msra.mxu0 %v1440
        %1473 = vmatprep.subr.mxu0 0.0
        %1474 = vmatpush1.msra.mxu0 0.0
        %1475 = vmatprep.subr.mxu0 0.0
        %1476 = vmatpush1.msra.mxu0 0.0
        %1477 = vmatprep.subr.mxu0 0.0
        %1478 = vmatpush1.msra.mxu0 0.0
        %1479 = vmatprep.subr.mxu0 0.0
        %1480 = vmatpush1.msra.mxu0 0.0
        %1481 = vmatprep.subr.mxu0 0.0
        %1482 = vmatpush1.msra.mxu0 0.0
        %1483 = vmatprep.subr.mxu0 0.0
        %1484 = vmatpush1.msra.mxu0 0.0
        %1485 = vmatprep.subr.mxu0 0.0
        %1486 = vmatpush1.msra.mxu0 0.0
        %1487 = vmatprep.subr.mxu0 0.0
        %1488 = vmatpush1.msra.mxu0 0.0
        %1489 = vmatprep.subr.mxu0 0.0
        %1490 = vmatpush1.msra.mxu0 0.0
        %1491 = vmatprep.subr.mxu0 0.0
        %1492 = vmatpush1.msra.mxu0 0.0
        %1493 = vmatprep.subr.mxu0 0.0
        %1494 = vmatpush1.msra.mxu0 0.0
        %1495 = vmatprep.subr.mxu0 0.0
        %1496 = vmatpush1.msra.mxu0 0.0
        %1497 = vmatprep.subr.mxu0 0.0
        %1498 = vmatpush1.msra.mxu0 0.0
        %1499 = vmatprep.subr.mxu0 0.0
        %1500 = vmatpush1.msra.mxu0 0.0
        %1501 = vmatprep.subr.mxu0 0.0
        %1502 = vmatpush1.msra.mxu0 0.0
        %1503 = vmatprep.subr.mxu0 0.0
        %1504 = vmatpush1.msra.mxu0 0.0
        %1505 = vmatprep.mubr.f32.mxu0 0.0
        %1506 = vmatmul.mubr.f32.gmra.mrb[0].mxu0 %v1418
        %v1507 = vpop.f32.mrb[0].mxu0
        %v1508 = vadd.f32 0.0, %v1507
        %v1509 = vpop.f32.mrb[0].mxu0
        %1510 = vmatprep.mubr.f32.mxu0 0.0
        %1511 = vmatmul.mubr.f32.gmra.mrb[0].mxu0 %v1419
        %v1512 = vpop.f32.mrb[0].mxu0
        %v1513 = vadd.f32 0.0, %v1512
        %v1514 = vpop.f32.mrb[0].mxu0
        %1515 = vmatprep.mubr.f32.mxu0 0.0
        %1516 = vmatmul.mubr.f32.gmra.mrb[0].mxu0 %v1420
        %v1517 = vpop.f32.mrb[0].mxu0
        %v1518 = vadd.f32 0.0, %v1517
        %v1519 = vpop.f32.mrb[0].mxu0
        %1520 = vmatprep.mubr.f32.mxu0 0.0
        %1521 = vmatmul.mubr.f32.gmra.mrb[0].mxu0 %v1421
        %v1522 = vpop.f32.mrb[0].mxu0
        %v1523 = vadd.f32 0.0, %v1522
        %v1524 = vpop.f32.mrb[0].mxu0
        %1525 = vdwg.mxu0
        %v1526 = vadd.f32 %v1402, %v1508
        %v1527 = vadd.f32 %v1403, %v1513
        %v1528 = vadd.f32 %v1404, %v1518
        %v1529 = vadd.f32 %v1405, %v1523
        %v1530 = vld [vmem:[#allocation2] sm:$0xff]
        %v1531 = vld [vmem:[#allocation2 + $0x8] sm:$0xff]
        %v1532 = vld [vmem:[#allocation2 + $0x10] sm:$0xff]
        %v1533 = vld [vmem:[#allocation2 + $0x18] sm:$0xff]
        %v1534 = vadd.f32 %v1530, %v1526
        %v1535 = vadd.f32 %v1531, %v1527
        %v1536 = vadd.f32 %v1532, %v1528
        %v1537 = vadd.f32 %v1533, %v1529
        %1538 = vst [vmem:[#allocation2] sm:$0xff] %v1534
        %1539 = vst [vmem:[#allocation2 + $0x8] sm:$0xff] %v1535
        %1540 = vst [vmem:[#allocation2 + $0x10] sm:$0xff] %v1536
        %1541 = vst [vmem:[#allocation2 + $0x18] sm:$0xff] %v1537
      $region56: #{down_block_forward.7} parent=47 // pred_fallthru
        _
      %p1542 = scmp.eq.s32.totalorder %s25, 2
      // Predicated region
      $region57: #{down_block_forward.7} parent=47 // pred_check
        %p1543 = pneg %p1542
      $region58: #{down_block_forward.7} parent=47 // pred_check_branch
        %1545 = sbr.rel (%p1543) target = $region60
      $region59: #{down_block_forward.7} parent=47 // pred_region
        %v1546 = vld [vmem:[#allocation2] sm:$0xff]
        %v1547 = vld [vmem:[#allocation2 + $0x8] sm:$0xff]
        %v1548 = vld [vmem:[#allocation2 + $0x10] sm:$0xff]
        %v1549 = vld [vmem:[#allocation2 + $0x18] sm:$0xff]
        %v1550 = vld [vmem:[%s4] sm:$0x1]
        %v1552 = vlaneseq
        %v1553 = vshrl.u32 %v1552, 7
        %v1554 = vsub.s32 0, %v1553
        %v1555 = vrot.slane %v1550, %v1554
        %v1557 = vadd.f32 %v1546, %v1555
        %v1558 = vadd.f32 %v1547, %v1555
        %v1559 = vadd.f32 %v1548, %v1555
        %v1560 = vadd.f32 %v1549, %v1555
        %v1561 = vld [vmem:[%s379] sm:$0xff]
        %v1562 = vld [vmem:[%s379 + $0x8] sm:$0xff]
        %v1563 = vld [vmem:[%s379 + $0x10] sm:$0xff]
        %v1564 = vld [vmem:[%s379 + $0x18] sm:$0xff]
        %v1565 = vld [vmem:[%s6] sm:$0xff]
        %v1566 = vld [vmem:[%s6 + $0x8] sm:$0xff]
        %v1567 = vld [vmem:[%s6 + $0x10] sm:$0xff]
        %v1568 = vld [vmem:[%s6 + $0x18] sm:$0xff]
        %v1569 = vld [vmem:[%s6 + $0x20] sm:$0xff]
        %v1570 = vld [vmem:[%s6 + $0x28] sm:$0xff]
        %v1571 = vld [vmem:[%s6 + $0x30] sm:$0xff]
        %v1572 = vld [vmem:[%s6 + $0x38] sm:$0xff]
        %v1573 = vld [vmem:[%s6 + $0x40] sm:$0xff]
        %v1574 = vld [vmem:[%s6 + $0x48] sm:$0xff]
        %v1575 = vld [vmem:[%s6 + $0x50] sm:$0xff]
        %v1576 = vld [vmem:[%s6 + $0x58] sm:$0xff]
        %v1577 = vld [vmem:[%s6 + $0x60] sm:$0xff]
        %v1578 = vld [vmem:[%s6 + $0x68] sm:$0xff]
        %v1579 = vld [vmem:[%s6 + $0x70] sm:$0xff]
        %v1580 = vld [vmem:[%s6 + $0x78] sm:$0xff]
        %1581 = vmatprep.subr.mxu0 0.0
        %1582 = vmatpush1.msra.mxu0 %v1565
        %1583 = vmatprep.subr.mxu0 0.0
        %1584 = vmatpush1.msra.mxu0 %v1566
        %1585 = vmatprep.subr.mxu0 0.0
        %1586 = vmatpush1.msra.mxu0 %v1567
        %1587 = vmatprep.subr.mxu0 0.0
        %1588 = vmatpush1.msra.mxu0 %v1568
        %1589 = vmatprep.subr.mxu0 0.0
        %1590 = vmatpush1.msra.mxu0 %v1569
        %1591 = vmatprep.subr.mxu0 0.0
        %1592 = vmatpush1.msra.mxu0 %v1570
        %1593 = vmatprep.subr.mxu0 0.0
        %1594 = vmatpush1.msra.mxu0 %v1571
        %1595 = vmatprep.subr.mxu0 0.0
        %1596 = vmatpush1.msra.mxu0 %v1572
        %1597 = vmatprep.subr.mxu0 0.0
        %1598 = vmatpush1.msra.mxu0 %v1573
        %1599 = vmatprep.subr.mxu0 0.0
        %1600 = vmatpush1.msra.mxu0 %v1574
        %1601 = vmatprep.subr.mxu0 0.0
        %1602 = vmatpush1.msra.mxu0 %v1575
        %1603 = vmatprep.subr.mxu0 0.0
        %1604 = vmatpush1.msra.mxu0 %v1576
        %1605 = vmatprep.subr.mxu0 0.0
        %1606 = vmatpush1.msra.mxu0 %v1577
        %1607 = vmatprep.subr.mxu0 0.0
        %1608 = vmatpush1.msra.mxu0 %v1578
        %1609 = vmatprep.subr.mxu0 0.0
        %1610 = vmatpush1.msra.mxu0 %v1579
        %1611 = vmatprep.subr.mxu0 0.0
        %1612 = vmatpush1.msra.mxu0 %v1580
        %1613 = vmatprep.subr.mxu0 0.0
        %1614 = vmatpush1.msra.mxu0 0.0
        %1615 = vmatprep.subr.mxu0 0.0
        %1616 = vmatpush1.msra.mxu0 0.0
        %1617 = vmatprep.subr.mxu0 0.0
        %1618 = vmatpush1.msra.mxu0 0.0
        %1619 = vmatprep.subr.mxu0 0.0
        %1620 = vmatpush1.msra.mxu0 0.0
        %1621 = vmatprep.subr.mxu0 0.0
        %1622 = vmatpush1.msra.mxu0 0.0
        %1623 = vmatprep.subr.mxu0 0.0
        %1624 = vmatpush1.msra.mxu0 0.0
        %1625 = vmatprep.subr.mxu0 0.0
        %1626 = vmatpush1.msra.mxu0 0.0
        %1627 = vmatprep.subr.mxu0 0.0
        %1628 = vmatpush1.msra.mxu0 0.0
        %1629 = vmatprep.subr.mxu0 0.0
        %1630 = vmatpush1.msra.mxu0 0.0
        %1631 = vmatprep.subr.mxu0 0.0
        %1632 = vmatpush1.msra.mxu0 0.0
        %1633 = vmatprep.subr.mxu0 0.0
        %1634 = vmatpush1.msra.mxu0 0.0
        %1635 = vmatprep.subr.mxu0 0.0
        %1636 = vmatpush1.msra.mxu0 0.0
        %1637 = vmatprep.subr.mxu0 0.0
        %1638 = vmatpush1.msra.mxu0 0.0
        %1639 = vmatprep.subr.mxu0 0.0
        %1640 = vmatpush1.msra.mxu0 0.0
        %1641 = vmatprep.subr.mxu0 0.0
        %1642 = vmatpush1.msra.mxu0 0.0
        %1643 = vmatprep.subr.mxu0 0.0
        %1644 = vmatpush1.msra.mxu0 0.0
        %1645 = vmatprep.mubr.f32.mxu0 0.0
        %1646 = vmatmul.mubr.f32.gmra.mrb[0].mxu0 %v1561
        %v1647 = vpop.f32.mrb[0].mxu0
        %v1648 = vadd.f32 0.0, %v1647
        %v1649 = vpop.f32.mrb[0].mxu0
        %1650 = vmatprep.mubr.f32.mxu0 0.0
        %1651 = vmatmul.mubr.f32.gmra.mrb[0].mxu0 %v1562
        %v1652 = vpop.f32.mrb[0].mxu0
        %v1653 = vadd.f32 0.0, %v1652
        %v1654 = vpop.f32.mrb[0].mxu0
        %1655 = vmatprep.mubr.f32.mxu0 0.0
        %1656 = vmatmul.mubr.f32.gmra.mrb[0].mxu0 %v1563
        %v1657 = vpop.f32.mrb[0].mxu0
        %v1658 = vadd.f32 0.0, %v1657
        %v1659 = vpop.f32.mrb[0].mxu0
        %1660 = vmatprep.mubr.f32.mxu0 0.0
        %1661 = vmatmul.mubr.f32.gmra.mrb[0].mxu0 %v1564
        %v1662 = vpop.f32.mrb[0].mxu0
        %v1663 = vadd.f32 0.0, %v1662
        %v1664 = vpop.f32.mrb[0].mxu0
        %1665 = vdwg.mxu0
        %v1666 = vadd.f32 %v1557, %v1648
        %v1667 = vadd.f32 %v1558, %v1653
        %v1668 = vadd.f32 %v1559, %v1658
        %v1669 = vadd.f32 %v1560, %v1663
        %1670 = vst [vmem:[%s388] sm:$0xff] %v1666
        %1671 = vst [vmem:[%s388 + $0x8] sm:$0xff] %v1667
        %1672 = vst [vmem:[%s388 + $0x10] sm:$0xff] %v1668
        %1673 = vst [vmem:[%s388 + $0x18] sm:$0xff] %v1669
      $region60: #{down_block_forward.7} parent=47 // pred_fallthru
        _
      %s1674 = smul.u32 %s23, 4
      %s1675 = sadd.s32 %s1674, %s24
      %p1676 = scmp.lt.s32.totalorder %s1675, 7
      %s1677 = scalar_select %p1676, %s1675, 7
      %s1678 = smul.addr %s1677, 4
      %s1679 = smul.addr %s1678, 8
      %s1680 = scalar_lea.vmem %s7, %s1679
      // Predicated region
      $region61: #{down_block_forward.7} parent=47 // pred_check
        %p1681 = pneg %p236
      $region62: #{down_block_forward.7} parent=47 // pred_check_branch
        %1683 = sbr.rel (%p1681) target = $region64
      $region63: #{down_block_forward.7} parent=47 // pred_region
        %s1684 = smul.u32 %s23, 4
        %s1685 = sadd.s32 %s1684, %s24
      $region64: #{down_block_forward.7} parent=47 // pred_fallthru
        _
    $region48: #{down_block_forward.7} parent=5 // pred_fallthru
      _
    %p1686 = scmp.le.s32.totalorder 2, %s13
    // Predicated region
    $region65: #{down_block_forward.7} parent=5 // pred_check
      %p1687 = pneg %p1686
    $region66: #{down_block_forward.7} parent=5 // pred_check_branch
      %1689 = sbr.rel (%p1687) target = $region68
    $region67: #{down_block_forward.7} parent=5 // pred_region
      %s1690 = ssub.s32 %s13, 2
      // Predicated region
      $region69: #{down_block_forward.7} parent=67 // pred_check
        %p1691 = pneg %p242
      $region70: #{down_block_forward.7} parent=67 // pred_check_branch
        %1693 = sbr.rel (%p1691) target = $region72
      $region71: #{down_block_forward.7} parent=67 // pred_region
        %s1694 = smul.u32 %s26, 4
        %s1695 = sadd.s32 %s1694, %s27
        %p1696 = scmp.lt.s32.totalorder %s1695, 7
        %s1697 = scalar_select %p1696, %s1695, 7
        %s1698 = smul.addr %s1697, 4
        %s1699 = smul.addr %s1698, 8
        %s1700 = scalar_lea.vmem %s7, %s1699
      $region72: #{down_block_forward.7} parent=67 // pred_fallthru
        _
    $region68: #{down_block_forward.7} parent=5 // pred_fallthru
      _
  $region6: #{down_block_forward.7} parent=0 // loop_footer
    %s17 = sadd.s32 1, %s13
  $region7: #{down_block_forward.7} parent=0 // loop_footer_branch
    %12 = sbr.rel target = $region3
  $region8: #{down_block_forward.7} parent=0 // loop_exit
    _

</llo_original>
